<compile_context>
chip_gen: v5e
topology: v5e:2x2
jax: 0.10.0
libtpu: 0.0.40
codegen_flags: <defaults>
</compile_context>

<pallas_src>
import functools

import jax
import jax.numpy as jnp
from jax import lax
from jax.experimental import pallas as pl
from jax.experimental.pallas import tpu as pltpu


def _dagnn_kernel(adj_ref, x_ref, s_ref, out_ref, h0_ref, h1_ref, norm_ref, *,
                  graph_norm, block_rows):
    k = pl.program_id(0)                      # phase: 0 = init, 1..K = layer k
    i = pl.program_id(1)                      # node row block
    row0 = pl.multiple_of(i * block_rows, block_rows)
    rows = pl.ds(row0, block_rows)

    s_row = s_ref[...]                        # (1, C), resident

    def gated(h):
        # sigmoid(h @ s) * h — the C-length contraction runs on the VPU/XLU
        # (mul + lane reduce) instead of a badly shaped MXU dot; exp hits the
        # EUP.  Explicit 1/(1+exp(-x)) keeps f32-exact results (inf exp for
        # very negative logits still rounds to the correct 0 gate).
        logits = jnp.sum(h * s_row, axis=-1, keepdims=True)
        gate = 1.0 / (1.0 + jnp.exp(-logits))
        return gate * h

    # ---------------- phase 0: degrees/norm, h_0 = x, init accumulator -------
    @pl.when(k == 0)
    def _init_phase():
        if graph_norm:
            # in_degrees().clamp(min=1) ** -0.5 ; accumulate the streamed 0/1
            # bf16 row block in f32 so large degrees stay exact.
            degs = jnp.sum(adj_ref[...].astype(jnp.float32), axis=1, keepdims=True)
            norm_ref[rows, :] = lax.rsqrt(jnp.maximum(degs, 1.0))

        @pl.when(i == 0)
        def _():
            x = x_ref[...].astype(jnp.float32)               # (N, C) tiny, resident
            h0_ref[...] = x                                  # h_0 = features
            out_ref[...] = gated(x).astype(out_ref.dtype)    # results[0] term

    # ---------------- phases 1..K: one propagation layer ---------------------
    def _prop_step(src_ref, dst_ref):
        if graph_norm:
            # Hoisted pre-scale: h <- norm * h, emitted once per layer (at the
            # first row block), not re-broadcast per block.
            @pl.when(i == 0)
            def _():
                src_ref[...] = src_ref[...] * norm_ref[...]

        # adj lives in HBM as bf16 (halved DMA traffic); upcast in-register so
        # the matmul accumulates the exact 0/1 values in f32.
        a_blk = adj_ref[...].astype(jnp.float32)                       # (TM, N)
        h_new = jnp.dot(a_blk, src_ref[...],
                        preferred_element_type=jnp.float32)            # (TM, C)
        if graph_norm:
            h_new = h_new * norm_ref[rows, :]
        dst_ref[rows, :] = h_new
        out_ref[rows, :] = out_ref[rows, :] + gated(h_new).astype(out_ref.dtype)

    # Static ping-pong between the two resident h buffers, selected by the
    # parity of the layer index (keeps all Ref indexing static).
    @pl.when(jnp.logical_and(k > 0, (k % 2) == 1))
    def _odd():
        _prop_step(h0_ref, h1_ref)            # odd layers : h0 -> h1

    @pl.when(jnp.logical_and(k > 0, (k % 2) == 0))
    def _even():
        _prop_step(h1_ref, h0_ref)            # even layers: h1 -> h0


def _choose_block_rows(n):
    """Largest MXU-aligned row tile whose double-buffered bf16 adj stream fits a
    conservative VMEM budget (leaves room for the tiny resident (N, C) state)."""
    if n <= 128:
        return n
    budget = 32 * 1024 * 1024                 # bytes for the streamed adj blocks
    for tm in (512, 256, 128, 64, 32, 16, 8):
        if tm > n:
            continue
        n_pad = -(-n // tm) * tm
        if 2 * tm * n_pad * 2 <= budget:      # 2 buffers * TM * N * bf16
            return tm
    # TODO(synk): for very large graphs also tile the contraction dim
    # (pltpu.emit_pipeline over (TM, TK) adj tiles) instead of full-width rows.
    return 8


def dagnn_forward(adj, features, s, *, num_layers, graph_norm=True, block_rows=None):
    n, c = features.shape
    assert adj.shape == (n, n)
    assert s.shape == (c, 1)
    out_dtype = features.dtype

    if block_rows is None:
        block_rows = _choose_block_rows(n)
    n_pad = -(-n // block_rows) * block_rows

    # Pad the node dimension so it tiles evenly.  Padded nodes have no edges and
    # zero features, so they contribute nothing; their rows are sliced off.
    if n_pad != n:
        adj = jnp.pad(adj, ((0, n_pad - n), (0, n_pad - n)))
        features = jnp.pad(features, ((0, n_pad - n), (0, 0)))

    adj_bf16 = adj.astype(jnp.bfloat16)       # 0/1 exact in bf16
    x_f32 = features.astype(jnp.float32)
    s_row = s.astype(jnp.float32).reshape(1, c)

    n_blocks = n_pad // block_rows
    grid = (num_layers + 1, n_blocks)

    # VMEM budget: double-buffered adj row blocks + the small resident state.
    adj_stream = 2 * block_rows * n_pad * 2
    resident = 4 * n_pad * c * 4 + n_pad * 4 + c * 4   # x, out, 2*h, norm, s
    vmem_limit = int(min(max(adj_stream + resident + (4 << 20), 32 << 20), 64 << 20))

    kernel = functools.partial(_dagnn_kernel, graph_norm=graph_norm,
                               block_rows=block_rows)

    out = pl.pallas_call(
        kernel,
        out_shape=jax.ShapeDtypeStruct((n_pad, c), jnp.float32),
        grid_spec=pltpu.PrefetchScalarGridSpec(
            num_scalar_prefetch=0,
            grid=grid,
            in_specs=[
                # streamed adjacency row blocks (re-read once per phase)
                pl.BlockSpec((block_rows, n_pad), lambda k, i: (i, 0)),
                # features: resident for the whole grid
                pl.BlockSpec((n_pad, c), lambda k, i: (0, 0)),
                # gating row vector: resident
                pl.BlockSpec((1, c), lambda k, i: (0, 0)),
            ],
            # constant block index -> output stays resident and is written once
            out_specs=pl.BlockSpec((n_pad, c), lambda k, i: (0, 0)),
            scratch_shapes=[
                pltpu.VMEM((n_pad, c), jnp.float32),   # h ping buffer
                pltpu.VMEM((n_pad, c), jnp.float32),   # h pong buffer
                pltpu.VMEM((n_pad, 1), jnp.float32),   # norm = deg^-1/2
            ],
        ),
        compiler_params=pltpu.CompilerParams(
            # Both axes carry state through the resident scratch (layer k needs
            # all row blocks of layer k-1, and the per-layer pre-scale at i == 0
            # is read by every later block), so both stay sequential.
            dimension_semantics=("arbitrary", "arbitrary"),
            vmem_limit_bytes=vmem_limit,
        ),
    )(adj_bf16, x_f32, s_row)

    return out[:n].astype(out_dtype)


def _reference(adj, features, s, *, num_layers, graph_norm=True):
    # plain-JAX mirror of the PyTorch forward (correctness check)
    h = features
    results = [h]
    if graph_norm:
        degs = jnp.maximum(adj.sum(axis=1), 1.0)
        norm = (degs ** -0.5)[:, None]
    for _ in range(num_layers):
        if graph_norm:
            h = h * norm
        h = adj @ h
        if graph_norm:
            h = h * norm
        results.append(h)
    H = jnp.stack(results, axis=1)                 # (N, K+1, C)
    S = jax.nn.sigmoid(H @ s)                      # (N, K+1, 1)
    S = jnp.transpose(S, (0, 2, 1))                # (N, 1, K+1)
    return jnp.squeeze(S @ H)                      # (N, C)


def _assert_close(out, ref, tag, tol=1e-3):
    # scale-relative check (loose enough for MXU accumulation-order differences,
    # tight enough to catch any real bug, which would be O(0.1-1) x scale)
    err = float(jnp.max(jnp.abs(out - ref)))
    scale = float(jnp.maximum(jnp.max(jnp.abs(ref)), 1.0))
    assert err <= tol * scale, f"{tag}: max abs err {err} vs scale {scale}"


if __name__ == "__main__":
    num_classes = 8      # feature dim == num_classes (required by H @ s)
    num_layers = 4
    n_nodes = 256

    key = jax.random.PRNGKey(0)
    k_adj, k_feat, k_s = jax.random.split(key, 3)

    # deterministic synthetic graph: symmetric 0/1 adjacency, no self loops
    a = (jax.random.uniform(k_adj, (n_nodes, n_nodes)) < 0.05).astype(jnp.float32)
    adj = jnp.maximum(a, a.T) * (1.0 - jnp.eye(n_nodes, dtype=jnp.float32))

    features = jax.random.normal(k_feat, (n_nodes, num_classes), dtype=jnp.float32)

    # xavier_uniform_ on s of shape (num_classes, 1) with gain = cal_gain(sigmoid) = 1
    fan_in, fan_out = 1, num_classes
    bound = (6.0 / (fan_in + fan_out)) ** 0.5
    s = jax.random.uniform(k_s, (num_classes, 1), minval=-bound, maxval=bound,
                           dtype=jnp.float32)

    # main config: graph-normalised, explicit 128-row blocks -> exercises the
    # multi-block streaming + ping-pong path (grid = (num_layers+1, 2))
    out = dagnn_forward(adj, features, s, num_layers=num_layers,
                        graph_norm=True, block_rows=128)
    out = jax.block_until_ready(out)
    ref = _reference(adj, features, s, num_layers=num_layers, graph_norm=True)
    assert out.shape == (n_nodes, num_classes)
    _assert_close(out, ref, "graph_norm=True")

    # no-norm config with auto-chosen (single) row block
    out2 = dagnn_forward(adj, features, s, num_layers=2, graph_norm=False)
    out2 = jax.block_until_ready(out2)
    ref2 = _reference(adj, features, s, num_layers=2, graph_norm=False)
    _assert_close(out2, ref2, "graph_norm=False")

    print("KERNEL_OK")
</pallas_src>

<mosaic_0001>
module attributes {stable_mosaic.version = 11 : i64} {
  func.func @_dagnn_kernel(%arg0: i32, %arg1: i32, %arg2: memref<128x256xbf16, #tpu.memory_space<vmem>>, %arg3: memref<256x8xf32, #tpu.memory_space<vmem>>, %arg4: memref<1x8xf32, #tpu.memory_space<vmem>>, %arg5: memref<256x8xf32, #tpu.memory_space<vmem>>, %arg6: memref<256x8xf32, #tpu.memory_space<vmem>>, %arg7: memref<256x8xf32, #tpu.memory_space<vmem>>, %arg8: memref<256x1xf32, #tpu.memory_space<vmem>>) attributes {dimension_semantics = [#tpu.dimension_semantics<arbitrary>, #tpu.dimension_semantics<arbitrary>], iteration_bounds = array<i64: 5, 2>, scalar_prefetch = 0 : i64, scratch_operands = 3 : i64, tpu.core_type = #tpu.core_type<tc>, window_params = [{transform_indices = @transform_0, window_bounds = array<i64: 128, 256>}, {pipeline_mode = #tpu.pipeline_mode<synchronous>, transform_indices = @transform_1, window_bounds = array<i64: 256, 8>}, {pipeline_mode = #tpu.pipeline_mode<synchronous>, transform_indices = @transform_2, window_bounds = array<i64: 1, 8>}, {pipeline_mode = #tpu.pipeline_mode<synchronous>, transform_indices = @transform_3, window_bounds = array<i64: 256, 8>}]} {
    %c128_i32 = arith.constant 128 : i32
    %0 = arith.muli %arg1, %c128_i32 : i32
    %1 = tpu.assume_multiple %0, 128 : i32
    %c0 = arith.constant 0 : index
    %c0_0 = arith.constant 0 : index
    %2 = vector.load %arg4[%c0, %c0_0] : memref<1x8xf32, #tpu.memory_space<vmem>>, vector<1x8xf32>
    %c0_i32 = arith.constant 0 : i32
    %3 = arith.cmpi eq, %arg0, %c0_i32 : i32
    %4 = arith.extui %3 : i1 to i32
    %c0_i32_1 = arith.constant 0 : i32
    %5 = arith.cmpi ne, %4, %c0_i32_1 : i32
    scf.if %5 {
      %c0_18 = arith.constant 0 : index
      %c0_19 = arith.constant 0 : index
      %36 = vector.load %arg2[%c0_18, %c0_19] : memref<128x256xbf16, #tpu.memory_space<vmem>>, vector<128x256xbf16>
      %37 = arith.extf %36 : vector<128x256xbf16> to vector<128x256xf32>
      %cst = arith.constant dense<0.000000e+00> : vector<128xf32>
      %38 = vector.multi_reduction <add>, %37, %cst [1] : vector<128x256xf32> to vector<128xf32>
      %39 = vector.shape_cast %38 : vector<128xf32> to vector<128x1xf32>
      %cst_20 = arith.constant 1.000000e+00 : f32
      %40 = vector.broadcast %cst_20 : f32 to vector<128x1xf32>
      %41 = arith.maximumf %39, %40 : vector<128x1xf32>
      %42 = math.rsqrt %41 : vector<128x1xf32>
      %43 = arith.index_cast %1 : i32 to index
      %c0_21 = arith.constant 0 : index
      %44 = vector.load %arg8[%43, %c0_21] : memref<256x1xf32, #tpu.memory_space<vmem>>, vector<128x1xf32>
      tpu.vector_store %arg8[%43, %c0_21], %42 {strides = array<i32>} : memref<256x1xf32, #tpu.memory_space<vmem>>, vector<128x1xf32>,
      %c0_i32_22 = arith.constant 0 : i32
      %45 = arith.cmpi eq, %arg1, %c0_i32_22 : i32
      %46 = arith.extui %45 : i1 to i32
      %c0_i32_23 = arith.constant 0 : i32
      %47 = arith.cmpi ne, %46, %c0_i32_23 : i32
      scf.if %47 {
        %c0_24 = arith.constant 0 : index
        %c0_25 = arith.constant 0 : index
        %48 = vector.load %arg3[%c0_24, %c0_25] : memref<256x8xf32, #tpu.memory_space<vmem>>, vector<256x8xf32>
        %c0_26 = arith.constant 0 : index
        %c0_27 = arith.constant 0 : index
        %49 = vector.load %arg6[%c0_26, %c0_27] : memref<256x8xf32, #tpu.memory_space<vmem>>, vector<256x8xf32>
        tpu.vector_store %arg6[%c0_26, %c0_27], %48 {strides = array<i32>} : memref<256x8xf32, #tpu.memory_space<vmem>>, vector<256x8xf32>,
        %50 = vector.broadcast %2 : vector<1x8xf32> to vector<256x8xf32>
        %51 = arith.mulf %48, %50 : vector<256x8xf32>
        %cst_28 = arith.constant dense<0.000000e+00> : vector<256xf32>
        %52 = vector.multi_reduction <add>, %51, %cst_28 [1] : vector<256x8xf32> to vector<256xf32>
        %53 = vector.shape_cast %52 : vector<256xf32> to vector<256x1xf32>
        %cst_29 = arith.constant 0.000000e+00 : f32
        %54 = vector.broadcast %cst_29 : f32 to vector<256x1xf32>
        %55 = arith.subf %54, %53 : vector<256x1xf32>
        %56 = math.exp %55 : vector<256x1xf32>
        %cst_30 = arith.constant 1.000000e+00 : f32
        %57 = vector.broadcast %cst_30 : f32 to vector<256x1xf32>
        %58 = arith.addf %57, %56 : vector<256x1xf32>
        %cst_31 = arith.constant 1.000000e+00 : f32
        %59 = vector.broadcast %cst_31 : f32 to vector<256x1xf32>
        %60 = arith.divf %59, %58 : vector<256x1xf32>
        %61 = vector.broadcast %60 : vector<256x1xf32> to vector<256x8xf32>
        %62 = arith.mulf %61, %48 : vector<256x8xf32>
        %c0_32 = arith.constant 0 : index
        %c0_33 = arith.constant 0 : index
        %63 = vector.load %arg5[%c0_32, %c0_33] : memref<256x8xf32, #tpu.memory_space<vmem>>, vector<256x8xf32>
        tpu.vector_store %arg5[%c0_32, %c0_33], %62 {strides = array<i32>} : memref<256x8xf32, #tpu.memory_space<vmem>>, vector<256x8xf32>,
      } else {
      }
    } else {
    }
    %c0_i32_2 = arith.constant 0 : i32
    %6 = arith.cmpi sgt, %arg0, %c0_i32_2 : i32
    %c2_i32 = arith.constant 2 : i32
    %c0_i32_3 = arith.constant 0 : i32
    %7 = arith.cmpi eq, %c2_i32, %c0_i32_3 : i32
    %c1_i32 = arith.constant 1 : i32
    %8 = arith.select %7, %c1_i32, %c2_i32 : i32
    %9 = arith.remsi %arg0, %8 : i32
    %c0_i32_4 = arith.constant 0 : i32
    %10 = arith.cmpi ne, %9, %c0_i32_4 : i32
    %c0_i32_5 = arith.constant 0 : i32
    %11 = arith.cmpi slt, %9, %c0_i32_5 : i32
    %c0_i32_6 = arith.constant 0 : i32
    %12 = arith.cmpi slt, %8, %c0_i32_6 : i32
    %13 = arith.xori %11, %12 : i1
    %14 = arith.andi %13, %10 : i1
    %15 = arith.addi %9, %8 : i32
    %16 = arith.select %14, %15, %9 : i32
    %c1_i32_7 = arith.constant 1 : i32
    %17 = arith.cmpi eq, %16, %c1_i32_7 : i32
    %18 = arith.andi %6, %17 : i1
    %19 = arith.extui %18 : i1 to i32
    %c0_i32_8 = arith.constant 0 : i32
    %20 = arith.cmpi ne, %19, %c0_i32_8 : i32
    scf.if %20 {
      %c0_i32_18 = arith.constant 0 : i32
      %36 = arith.cmpi eq, %arg1, %c0_i32_18 : i32
      %37 = arith.extui %36 : i1 to i32
      %c0_i32_19 = arith.constant 0 : i32
      %38 = arith.cmpi ne, %37, %c0_i32_19 : i32
      scf.if %38 {
        %c0_32 = arith.constant 0 : index
        %c0_33 = arith.constant 0 : index
        %67 = vector.load %arg6[%c0_32, %c0_33] : memref<256x8xf32, #tpu.memory_space<vmem>>, vector<256x8xf32>
        %c0_34 = arith.constant 0 : index
        %c0_35 = arith.constant 0 : index
        %68 = vector.load %arg8[%c0_34, %c0_35] : memref<256x1xf32, #tpu.memory_space<vmem>>, vector<256x1xf32>
        %69 = vector.broadcast %68 : vector<256x1xf32> to vector<256x8xf32>
        %70 = arith.mulf %67, %69 : vector<256x8xf32>
        %c0_36 = arith.constant 0 : index
        %c0_37 = arith.constant 0 : index
        %71 = vector.load %arg6[%c0_36, %c0_37] : memref<256x8xf32, #tpu.memory_space<vmem>>, vector<256x8xf32>
        tpu.vector_store %arg6[%c0_36, %c0_37], %70 {strides = array<i32>} : memref<256x8xf32, #tpu.memory_space<vmem>>, vector<256x8xf32>,
      } else {
      }
      %c0_20 = arith.constant 0 : index
      %c0_21 = arith.constant 0 : index
      %39 = vector.load %arg2[%c0_20, %c0_21] : memref<128x256xbf16, #tpu.memory_space<vmem>>, vector<128x256xbf16>
      %40 = arith.extf %39 : vector<128x256xbf16> to vector<128x256xf32>
      %c0_22 = arith.constant 0 : index
      %c0_23 = arith.constant 0 : index
      %41 = vector.load %arg6[%c0_22, %c0_23] : memref<256x8xf32, #tpu.memory_space<vmem>>, vector<256x8xf32>
      %cst = arith.constant dense<0.000000e+00> : vector<128x8xf32>
      %42 = tpu.matmul %40, %41, %cst {dimension_numbers = #tpu.dot_dimension_numbers<[1], [0], [0], [1], [0, 0, 1, 1], [], []>} : vector<128x256xf32>, vector<256x8xf32>, vector<128x8xf32> -> vector<128x8xf32>
      %43 = arith.index_cast %1 : i32 to index
      %c0_24 = arith.constant 0 : index
      %44 = vector.load %arg8[%43, %c0_24] : memref<256x1xf32, #tpu.memory_space<vmem>>, vector<128x1xf32>
      %45 = vector.broadcast %44 : vector<128x1xf32> to vector<128x8xf32>
      %46 = arith.mulf %42, %45 : vector<128x8xf32>
      %47 = arith.index_cast %1 : i32 to index
      %c0_25 = arith.constant 0 : index
      %48 = vector.load %arg7[%47, %c0_25] : memref<256x8xf32, #tpu.memory_space<vmem>>, vector<128x8xf32>
      tpu.vector_store %arg7[%47, %c0_25], %46 {strides = array<i32>} : memref<256x8xf32, #tpu.memory_space<vmem>>, vector<128x8xf32>,
      %49 = arith.index_cast %1 : i32 to index
      %c0_26 = arith.constant 0 : index
      %50 = vector.load %arg5[%49, %c0_26] : memref<256x8xf32, #tpu.memory_space<vmem>>, vector<128x8xf32>
      %51 = vector.broadcast %2 : vector<1x8xf32> to vector<128x8xf32>
      %52 = arith.mulf %46, %51 : vector<128x8xf32>
      %cst_27 = arith.constant dense<0.000000e+00> : vector<128xf32>
      %53 = vector.multi_reduction <add>, %52, %cst_27 [1] : vector<128x8xf32> to vector<128xf32>
      %54 = vector.shape_cast %53 : vector<128xf32> to vector<128x1xf32>
      %cst_28 = arith.constant 0.000000e+00 : f32
      %55 = vector.broadcast %cst_28 : f32 to vector<128x1xf32>
      %56 = arith.subf %55, %54 : vector<128x1xf32>
      %57 = math.exp %56 : vector<128x1xf32>
      %cst_29 = arith.constant 1.000000e+00 : f32
      %58 = vector.broadcast %cst_29 : f32 to vector<128x1xf32>
      %59 = arith.addf %58, %57 : vector<128x1xf32>
      %cst_30 = arith.constant 1.000000e+00 : f32
      %60 = vector.broadcast %cst_30 : f32 to vector<128x1xf32>
      %61 = arith.divf %60, %59 : vector<128x1xf32>
      %62 = vector.broadcast %61 : vector<128x1xf32> to vector<128x8xf32>
      %63 = arith.mulf %62, %46 : vector<128x8xf32>
      %64 = arith.addf %50, %63 : vector<128x8xf32>
      %65 = arith.index_cast %1 : i32 to index
      %c0_31 = arith.constant 0 : index
      %66 = vector.load %arg5[%65, %c0_31] : memref<256x8xf32, #tpu.memory_space<vmem>>, vector<128x8xf32>
      tpu.vector_store %arg5[%65, %c0_31], %64 {strides = array<i32>} : memref<256x8xf32, #tpu.memory_space<vmem>>, vector<128x8xf32>,
    } else {
    }
    %c0_i32_9 = arith.constant 0 : i32
    %21 = arith.cmpi sgt, %arg0, %c0_i32_9 : i32
    %c2_i32_10 = arith.constant 2 : i32
    %c0_i32_11 = arith.constant 0 : i32
    %22 = arith.cmpi eq, %c2_i32_10, %c0_i32_11 : i32
    %c1_i32_12 = arith.constant 1 : i32
    %23 = arith.select %22, %c1_i32_12, %c2_i32_10 : i32
    %24 = arith.remsi %arg0, %23 : i32
    %c0_i32_13 = arith.constant 0 : i32
    %25 = arith.cmpi ne, %24, %c0_i32_13 : i32
    %c0_i32_14 = arith.constant 0 : i32
    %26 = arith.cmpi slt, %24, %c0_i32_14 : i32
    %c0_i32_15 = arith.constant 0 : i32
    %27 = arith.cmpi slt, %23, %c0_i32_15 : i32
    %28 = arith.xori %26, %27 : i1
    %29 = arith.andi %28, %25 : i1
    %30 = arith.addi %24, %23 : i32
    %31 = arith.select %29, %30, %24 : i32
    %c0_i32_16 = arith.constant 0 : i32
    %32 = arith.cmpi eq, %31, %c0_i32_16 : i32
    %33 = arith.andi %21, %32 : i1
    %34 = arith.extui %33 : i1 to i32
    %c0_i32_17 = arith.constant 0 : i32
    %35 = arith.cmpi ne, %34, %c0_i32_17 : i32
    scf.if %35 {
      %c0_i32_18 = arith.constant 0 : i32
      %36 = arith.cmpi eq, %arg1, %c0_i32_18 : i32
      %37 = arith.extui %36 : i1 to i32
      %c0_i32_19 = arith.constant 0 : i32
      %38 = arith.cmpi ne, %37, %c0_i32_19 : i32
      scf.if %38 {
        %c0_32 = arith.constant 0 : index
        %c0_33 = arith.constant 0 : index
        %67 = vector.load %arg7[%c0_32, %c0_33] : memref<256x8xf32, #tpu.memory_space<vmem>>, vector<256x8xf32>
        %c0_34 = arith.constant 0 : index
        %c0_35 = arith.constant 0 : index
        %68 = vector.load %arg8[%c0_34, %c0_35] : memref<256x1xf32, #tpu.memory_space<vmem>>, vector<256x1xf32>
        %69 = vector.broadcast %68 : vector<256x1xf32> to vector<256x8xf32>
        %70 = arith.mulf %67, %69 : vector<256x8xf32>
        %c0_36 = arith.constant 0 : index
        %c0_37 = arith.constant 0 : index
        %71 = vector.load %arg7[%c0_36, %c0_37] : memref<256x8xf32, #tpu.memory_space<vmem>>, vector<256x8xf32>
        tpu.vector_store %arg7[%c0_36, %c0_37], %70 {strides = array<i32>} : memref<256x8xf32, #tpu.memory_space<vmem>>, vector<256x8xf32>,
      } else {
      }
      %c0_20 = arith.constant 0 : index
      %c0_21 = arith.constant 0 : index
      %39 = vector.load %arg2[%c0_20, %c0_21] : memref<128x256xbf16, #tpu.memory_space<vmem>>, vector<128x256xbf16>
      %40 = arith.extf %39 : vector<128x256xbf16> to vector<128x256xf32>
      %c0_22 = arith.constant 0 : index
      %c0_23 = arith.constant 0 : index
      %41 = vector.load %arg7[%c0_22, %c0_23] : memref<256x8xf32, #tpu.memory_space<vmem>>, vector<256x8xf32>
      %cst = arith.constant dense<0.000000e+00> : vector<128x8xf32>
      %42 = tpu.matmul %40, %41, %cst {dimension_numbers = #tpu.dot_dimension_numbers<[1], [0], [0], [1], [0, 0, 1, 1], [], []>} : vector<128x256xf32>, vector<256x8xf32>, vector<128x8xf32> -> vector<128x8xf32>
      %43 = arith.index_cast %1 : i32 to index
      %c0_24 = arith.constant 0 : index
      %44 = vector.load %arg8[%43, %c0_24] : memref<256x1xf32, #tpu.memory_space<vmem>>, vector<128x1xf32>
      %45 = vector.broadcast %44 : vector<128x1xf32> to vector<128x8xf32>
      %46 = arith.mulf %42, %45 : vector<128x8xf32>
      %47 = arith.index_cast %1 : i32 to index
      %c0_25 = arith.constant 0 : index
      %48 = vector.load %arg6[%47, %c0_25] : memref<256x8xf32, #tpu.memory_space<vmem>>, vector<128x8xf32>
      tpu.vector_store %arg6[%47, %c0_25], %46 {strides = array<i32>} : memref<256x8xf32, #tpu.memory_space<vmem>>, vector<128x8xf32>,
      %49 = arith.index_cast %1 : i32 to index
      %c0_26 = arith.constant 0 : index
      %50 = vector.load %arg5[%49, %c0_26] : memref<256x8xf32, #tpu.memory_space<vmem>>, vector<128x8xf32>
      %51 = vector.broadcast %2 : vector<1x8xf32> to vector<128x8xf32>
      %52 = arith.mulf %46, %51 : vector<128x8xf32>
      %cst_27 = arith.constant dense<0.000000e+00> : vector<128xf32>
      %53 = vector.multi_reduction <add>, %52, %cst_27 [1] : vector<128x8xf32> to vector<128xf32>
      %54 = vector.shape_cast %53 : vector<128xf32> to vector<128x1xf32>
      %cst_28 = arith.constant 0.000000e+00 : f32
      %55 = vector.broadcast %cst_28 : f32 to vector<128x1xf32>
      %56 = arith.subf %55, %54 : vector<128x1xf32>
      %57 = math.exp %56 : vector<128x1xf32>
      %cst_29 = arith.constant 1.000000e+00 : f32
      %58 = vector.broadcast %cst_29 : f32 to vector<128x1xf32>
      %59 = arith.addf %58, %57 : vector<128x1xf32>
      %cst_30 = arith.constant 1.000000e+00 : f32
      %60 = vector.broadcast %cst_30 : f32 to vector<128x1xf32>
      %61 = arith.divf %60, %59 : vector<128x1xf32>
      %62 = vector.broadcast %61 : vector<128x1xf32> to vector<128x8xf32>
      %63 = arith.mulf %62, %46 : vector<128x8xf32>
      %64 = arith.addf %50, %63 : vector<128x8xf32>
      %65 = arith.index_cast %1 : i32 to index
      %c0_31 = arith.constant 0 : index
      %66 = vector.load %arg5[%65, %c0_31] : memref<256x8xf32, #tpu.memory_space<vmem>>, vector<128x8xf32>
      tpu.vector_store %arg5[%65, %c0_31], %64 {strides = array<i32>} : memref<256x8xf32, #tpu.memory_space<vmem>>, vector<128x8xf32>,
    } else {
    }
    return
  }
  func.func @transform_0(%arg0: i32, %arg1: i32) -> (i32, i32) {
    %c0_i32 = arith.constant 0 : i32
    %c0_i32_0 = arith.constant 0 : i32
    return %arg1, %c0_i32 : i32, i32
  }
  func.func @transform_1(%arg0: i32, %arg1: i32) -> (i32, i32) {
    %c0_i32 = arith.constant 0 : i32
    %c0_i32_0 = arith.constant 0 : i32
    %c0_i32_1 = arith.constant 0 : i32
    return %c0_i32, %c0_i32_0 : i32, i32
  }
  func.func @transform_2(%arg0: i32, %arg1: i32) -> (i32, i32) {
    %c0_i32 = arith.constant 0 : i32
    %c0_i32_0 = arith.constant 0 : i32
    %c0_i32_1 = arith.constant 0 : i32
    return %c0_i32, %c0_i32_0 : i32, i32
  }
  func.func @transform_3(%arg0: i32, %arg1: i32) -> (i32, i32) {
    %c0_i32 = arith.constant 0 : i32
    %c0_i32_0 = arith.constant 0 : i32
    %c0_i32_1 = arith.constant 0 : i32
    return %c0_i32, %c0_i32_0 : i32, i32
  }
}

</mosaic_0001>

<llo_original>
// kernel: tpu_custom_call.1
$region0: #{tpu_custom_call.1}
  #allocation0 [shape = 'u32[]', space=smem, size = 0x4, offset = 0x4, fixed_abs, tag = 'smem constant byte address 0x4 - core index']
  #allocation1 [shape = 'u32[72,128]{1,0:T(1,128)}', space=vmem, size = 0x9000, scoped, tag = 'internal scratch']
  #allocation2 [shape = 'f32[256,8]{1,0:T(8,128)}', space=vmem, size = 0x20000, scoped, tag = 'scratch operand']
  #allocation3 [shape = 'f32[256,8]{1,0:T(8,128)}', space=vmem, size = 0x20000, scoped, tag = 'scratch operand']
  #allocation4 [shape = 'f32[256,1]{1,0:T(8,128)}', space=vmem, size = 0x20000, scoped, tag = 'scratch operand']
  %s0 = inlined_call_operand.vmem [shape: bf16[256,256], index: 0, kind: input, shape index: {}]
  %s1 = inlined_call_operand.vmem [shape: f32[256,8], index: 1, kind: input, shape index: {}]
  %s2 = inlined_call_operand.vmem [shape: f32[1,8], index: 2, kind: input, shape index: {}]
  %s3 = inlined_call_operand.vmem [shape: f32[256,8], index: 3, kind: output, shape index: {}]
  %s4 = sld [smem:[#allocation0]]
  $region69: #{tpu_custom_call.1} parent=0
    _
  %s6 = ssub.s32 1, %s4
  %s7 = scalar_select 0, %s6, %s4
  loop: start=0, step=1, limit=12
  $region2: #{tpu_custom_call.1} parent=0 // loop_pre_header
    _
  $region3: #{tpu_custom_call.1} parent=0 // loop_header
    %s9 = sphi 0, %s13
    %p10 = scmp.ge.s32.totalorder %s9, 12
    %s16 = sphi 0, %s28
    %s17 = sphi 0, %s24
    %s18 = sphi 0, %s16
    %s19 = sphi 0, %s17
    %s20 = sphi 0, %s18
    %s21 = sphi 0, %s19
    %s31 = sphi 0, %s33
    %s34 = sphi 0, %s31
    %s35 = sphi 0, %s34
    %s51 = sphi 0, %s35
    %s55 = sphi 0, %s55
    %s57 = sphi 0, %s55
    %s58 = sphi 0, %s57
    %s72 = sphi 0, %s58
    %s76 = sphi 0, %s76
    %s78 = sphi 0, %s76
    %s79 = sphi 0, %s78
    %s93 = sphi 0, %s79
    %s97 = sphi 0, %s97
    %s99 = sphi 0, %s97
    %s100 = sphi 0, %s99
    %s114 = sphi 0, %s100
  $region4: #{tpu_custom_call.1} parent=0 // loop_header_branch
    %12 = sbr.rel (%p10) target = $region8
  $region5: #{tpu_custom_call.1} parent=0 // loop_body
    %s14 = ssub.s32 %s9, 1
    %s15 = ssub.s32 %s9, 2
    %s22 = sadd.s32 1, %s17
    %p23 = scmp.ge.s32.totalorder %s22, 2
    %s24 = scalar_select %p23, 0, %s22
    %s25 = sadd.s32 1, %s16
    %s26 = scalar_select %p23, %s25, %s16
    %p27 = scmp.ge.s32.totalorder %s26, 5
    %s28 = scalar_select %p27, 0, %s26
    %s29 = ssub.s32 %s17, %s24
    %p30 = scmp.eq.s32.totalorder %s29, 0
    %s32 = sadd.s32 %s31, 1
    %s33 = scalar_select %p30, %s31, %s32
    %p36 = pneg %p30
    %p37 = scmp.eq.s32.totalorder %s9, 9
    %p38 = por %p36, %p37
    %p39 = scmp.ne.s32.totalorder %s31, %s34
    %p40 = scmp.eq.s32.totalorder %s9, 0
    %p41 = por %p39, %p40
    %p42 = scmp.ne.s32.totalorder %s31, %s34
    %p43 = scmp.eq.s32.totalorder %s14, 9
    %p44 = por %p42, %p43
    %p45 = scmp.ne.s32.totalorder %s34, %s35
    %p46 = scmp.eq.s32.totalorder %s14, 0
    %p47 = por %p45, %p46
    %p48 = scmp.ne.s32.totalorder %s34, %s35
    %p49 = scmp.eq.s32.totalorder %s15, 9
    %p50 = por %p48, %p49
    %p52 = scmp.ne.s32.totalorder %s35, %s51
    %p53 = scmp.eq.s32.totalorder %s15, 0
    %p54 = por %p52, %p53
    %s56 = sadd.s32 %s55, 1
    %p59 = scmp.eq.s32.totalorder %s9, 9
    %p60 = scmp.ne.s32.totalorder %s55, %s57
    %p61 = scmp.eq.s32.totalorder %s9, 0
    %p62 = por %p60, %p61
    %p63 = scmp.ne.s32.totalorder %s55, %s57
    %p64 = scmp.eq.s32.totalorder %s14, 9
    %p65 = por %p63, %p64
    %p66 = scmp.ne.s32.totalorder %s57, %s58
    %p67 = scmp.eq.s32.totalorder %s14, 0
    %p68 = por %p66, %p67
    %p69 = scmp.ne.s32.totalorder %s57, %s58
    %p70 = scmp.eq.s32.totalorder %s15, 9
    %p71 = por %p69, %p70
    %p73 = scmp.ne.s32.totalorder %s58, %s72
    %p74 = scmp.eq.s32.totalorder %s15, 0
    %p75 = por %p73, %p74
    %s77 = sadd.s32 %s76, 1
    %p80 = scmp.eq.s32.totalorder %s9, 9
    %p81 = scmp.ne.s32.totalorder %s76, %s78
    %p82 = scmp.eq.s32.totalorder %s9, 0
    %p83 = por %p81, %p82
    %p84 = scmp.ne.s32.totalorder %s76, %s78
    %p85 = scmp.eq.s32.totalorder %s14, 9
    %p86 = por %p84, %p85
    %p87 = scmp.ne.s32.totalorder %s78, %s79
    %p88 = scmp.eq.s32.totalorder %s14, 0
    %p89 = por %p87, %p88
    %p90 = scmp.ne.s32.totalorder %s78, %s79
    %p91 = scmp.eq.s32.totalorder %s15, 9
    %p92 = por %p90, %p91
    %p94 = scmp.ne.s32.totalorder %s79, %s93
    %p95 = scmp.eq.s32.totalorder %s15, 0
    %p96 = por %p94, %p95
    %s98 = sadd.s32 %s97, 1
    %p101 = scmp.eq.s32.totalorder %s9, 9
    %p102 = scmp.ne.s32.totalorder %s97, %s99
    %p103 = scmp.eq.s32.totalorder %s9, 0
    %p104 = por %p102, %p103
    %p105 = scmp.ne.s32.totalorder %s97, %s99
    %p106 = scmp.eq.s32.totalorder %s14, 9
    %p107 = por %p105, %p106
    %p108 = scmp.ne.s32.totalorder %s99, %s100
    %p109 = scmp.eq.s32.totalorder %s14, 0
    %p110 = por %p108, %p109
    %p111 = scmp.ne.s32.totalorder %s99, %s100
    %p112 = scmp.eq.s32.totalorder %s15, 9
    %p113 = por %p111, %p112
    %p115 = scmp.ne.s32.totalorder %s100, %s114
    %p116 = scmp.eq.s32.totalorder %s15, 0
    %p117 = por %p115, %p116
    %p118 = scmp.le.s32.totalorder 1, %s9
    %p119 = scmp.lt.s32.totalorder %s9, 11
    %p120 = pnand %p118, %p119
    %p121 = pneg %p120
    // Predicated region
    $region9: #{tpu_custom_call.1} parent=5 // pred_check
      _
    $region10: #{tpu_custom_call.1} parent=5 // pred_check_branch
      %123 = sbr.rel (%p120) target = $region12
    $region11: #{tpu_custom_call.1} parent=5 // pred_region
      %s124 = ssub.s32 %s9, 1
      // Predicated region
      $region13: #{tpu_custom_call.1} parent=11 // pred_check
        %p125 = pneg %p68
      $region14: #{tpu_custom_call.1} parent=11 // pred_check_branch
        %127 = sbr.rel (%p125) target = $region16
      $region15: #{tpu_custom_call.1} parent=11 // pred_region
        _
      $region16: #{tpu_custom_call.1} parent=11 // pred_fallthru
        _
      // Predicated region
      $region17: #{tpu_custom_call.1} parent=11 // pred_check
        %p128 = pneg %p89
      $region18: #{tpu_custom_call.1} parent=11 // pred_check_branch
        %130 = sbr.rel (%p128) target = $region20
      $region19: #{tpu_custom_call.1} parent=11 // pred_region
        _
      $region20: #{tpu_custom_call.1} parent=11 // pred_fallthru
        _
    $region12: #{tpu_custom_call.1} parent=5 // pred_fallthru
      _
    %p131 = scmp.lt.s32.totalorder %s9, 10
    // Predicated region
    $region21: #{tpu_custom_call.1} parent=5 // pred_check
      %p132 = pneg %p131
    $region22: #{tpu_custom_call.1} parent=5 // pred_check_branch
      %134 = sbr.rel (%p132) target = $region24
    $region23: #{tpu_custom_call.1} parent=5 // pred_region
      // Predicated region
      $region25: #{tpu_custom_call.1} parent=23 // pred_check
        %p135 = pneg %p41
      $region26: #{tpu_custom_call.1} parent=23 // pred_check_branch
        %137 = sbr.rel (%p135) target = $region28
      $region27: #{tpu_custom_call.1} parent=23 // pred_region
        %s138 = smul.u32 16, %s17
        %p139 = scmp.lt.s32.totalorder %s138, 31
        %s140 = scalar_select %p139, %s138, 31
        %s141 = smul.addr %s140, 2
        %s142 = smul.addr %s141, 4
        %s143 = scalar_lea.vmem %s0, %s142
        %s144 = smul.u32 16, %s17
      $region28: #{tpu_custom_call.1} parent=23 // pred_fallthru
        _
    $region24: #{tpu_custom_call.1} parent=5 // pred_fallthru
      _
    %p145 = scmp.le.s32.totalorder 1, %s9
    %p146 = scmp.lt.s32.totalorder %s9, 11
    %p147 = pnand %p145, %p146
    %p148 = pneg %p147
    // Predicated region
    $region29: #{tpu_custom_call.1} parent=5 // pred_check
      _
    $region30: #{tpu_custom_call.1} parent=5 // pred_check_branch
      %150 = sbr.rel (%p147) target = $region32
    $region31: #{tpu_custom_call.1} parent=5 // pred_region
      %s151 = ssub.s32 %s9, 1
      %s152 = smul.u32 16, %s19
      %p153 = scmp.lt.s32.totalorder %s152, 31
      %s154 = scalar_select %p153, %s152, 31
      %s155 = smul.addr %s154, 2
      %s156 = smul.addr %s155, 4
      %s157 = scalar_lea.vmem %s0, %s156
      %p158 = pneg %p47
      %p159 = pneg %p44
      %p160 = pneg %p68
      %p161 = pneg %p65
      %p162 = pneg %p89
      %p163 = pneg %p86
      %p164 = pneg %p110
      %p165 = pneg %p107
      %s166 = smul.u32 16, %s19
      %p167 = scmp.lt.s32.totalorder %s166, 31
      %s168 = scalar_select %p167, %s166, 31
      %s169 = smul.addr %s168, 2
      %s170 = smul.addr %s169, 4
      %s171 = scalar_lea.vmem %s0, %s170
      %s172 = smul.u32 16, %s19
      %s173 = smul.u32 %s19, 128
      %v174 = vld [vmem:[%s2] sm:$0x1]
      %p175 = scmp.eq.s32.totalorder %s18, 0
      // Predicated region
      $region33: #{tpu_custom_call.1} parent=31 // pred_check
        %p176 = pneg %p175
      $region34: #{tpu_custom_call.1} parent=31 // pred_check_branch
        %178 = sbr.rel (%p176) target = $region36
      $region35: #{tpu_custom_call.1} parent=31 // pred_region
        %v179 = vld [vmem:[%s171] sm:$0xff]
        %v180 = vld [vmem:[%s171 + $0x8] sm:$0xff]
        %v181 = vld [vmem:[%s171 + $0x10] sm:$0xff]
        %v182 = vld [vmem:[%s171 + $0x18] sm:$0xff]
        %v183 = vld [vmem:[%s171 + $0x20] sm:$0xff]
        %v184 = vld [vmem:[%s171 + $0x28] sm:$0xff]
        %v185 = vld [vmem:[%s171 + $0x30] sm:$0xff]
        %v186 = vld [vmem:[%s171 + $0x38] sm:$0xff]
        %v187 = vld [vmem:[%s171 + $0x40] sm:$0xff]
        %v188 = vld [vmem:[%s171 + $0x48] sm:$0xff]
        %v189 = vld [vmem:[%s171 + $0x50] sm:$0xff]
        %v190 = vld [vmem:[%s171 + $0x58] sm:$0xff]
        %v191 = vld [vmem:[%s171 + $0x60] sm:$0xff]
        %v192 = vld [vmem:[%s171 + $0x68] sm:$0xff]
        %v193 = vld [vmem:[%s171 + $0x70] sm:$0xff]
        %v194 = vld [vmem:[%s171 + $0x78] sm:$0xff]
        %v195 = vunpack.c.l.bf16 %v179
        %v196 = vunpack.c.h.bf16 %v179
        %v197 = vunpack.c.l.bf16 %v180
        %v198 = vunpack.c.h.bf16 %v180
        %v199 = vunpack.c.l.bf16 %v181
        %v200 = vunpack.c.h.bf16 %v181
        %v201 = vunpack.c.l.bf16 %v182
        %v202 = vunpack.c.h.bf16 %v182
        %v203 = vunpack.c.l.bf16 %v183
        %v204 = vunpack.c.h.bf16 %v183
        %v205 = vunpack.c.l.bf16 %v184
        %v206 = vunpack.c.h.bf16 %v184
        %v207 = vunpack.c.l.bf16 %v185
        %v208 = vunpack.c.h.bf16 %v185
        %v209 = vunpack.c.l.bf16 %v186
        %v210 = vunpack.c.h.bf16 %v186
        %v211 = vunpack.c.l.bf16 %v187
        %v212 = vunpack.c.h.bf16 %v187
        %v213 = vunpack.c.l.bf16 %v188
        %v214 = vunpack.c.h.bf16 %v188
        %v215 = vunpack.c.l.bf16 %v189
        %v216 = vunpack.c.h.bf16 %v189
        %v217 = vunpack.c.l.bf16 %v190
        %v218 = vunpack.c.h.bf16 %v190
        %v219 = vunpack.c.l.bf16 %v191
        %v220 = vunpack.c.h.bf16 %v191
        %v221 = vunpack.c.l.bf16 %v192
        %v222 = vunpack.c.h.bf16 %v192
        %v223 = vunpack.c.l.bf16 %v193
        %v224 = vunpack.c.h.bf16 %v193
        %v225 = vunpack.c.l.bf16 %v194
        %v226 = vunpack.c.h.bf16 %v194
        %v227 = vadd.f32 %v195, %v196
        %228 = vadd.xlane.f32.xlu0 %v227
        %v229 = vpop.xlane.xlu0 %228
        %v230 = vadd.f32 %v197, %v198
        %231 = vadd.xlane.f32.xlu0 %v230
        %v232 = vpop.xlane.xlu0 %231
        %v233 = vadd.f32 %v199, %v200
        %234 = vadd.xlane.f32.xlu0 %v233
        %v235 = vpop.xlane.xlu0 %234
        %v236 = vadd.f32 %v201, %v202
        %237 = vadd.xlane.f32.xlu0 %v236
        %v238 = vpop.xlane.xlu0 %237
        %v239 = vadd.f32 %v203, %v204
        %240 = vadd.xlane.f32.xlu0 %v239
        %v241 = vpop.xlane.xlu0 %240
        %v242 = vadd.f32 %v205, %v206
        %243 = vadd.xlane.f32.xlu0 %v242
        %v244 = vpop.xlane.xlu0 %243
        %v245 = vadd.f32 %v207, %v208
        %246 = vadd.xlane.f32.xlu0 %v245
        %v247 = vpop.xlane.xlu0 %246
        %v248 = vadd.f32 %v209, %v210
        %249 = vadd.xlane.f32.xlu0 %v248
        %v250 = vpop.xlane.xlu0 %249
        %v251 = vadd.f32 %v211, %v212
        %252 = vadd.xlane.f32.xlu0 %v251
        %v253 = vpop.xlane.xlu0 %252
        %v254 = vadd.f32 %v213, %v214
        %255 = vadd.xlane.f32.xlu0 %v254
        %v256 = vpop.xlane.xlu0 %255
        %v257 = vadd.f32 %v215, %v216
        %258 = vadd.xlane.f32.xlu0 %v257
        %v259 = vpop.xlane.xlu0 %258
        %v260 = vadd.f32 %v217, %v218
        %261 = vadd.xlane.f32.xlu0 %v260
        %v262 = vpop.xlane.xlu0 %261
        %v263 = vadd.f32 %v219, %v220
        %264 = vadd.xlane.f32.xlu0 %v263
        %v265 = vpop.xlane.xlu0 %264
        %v266 = vadd.f32 %v221, %v222
        %267 = vadd.xlane.f32.xlu0 %v266
        %v268 = vpop.xlane.xlu0 %267
        %v269 = vadd.f32 %v223, %v224
        %270 = vadd.xlane.f32.xlu0 %v269
        %v271 = vpop.xlane.xlu0 %270
        %v272 = vadd.f32 %v225, %v226
        %273 = vadd.xlane.f32.xlu0 %v272
        %v274 = vpop.xlane.xlu0 %273
        %v275 = vmax.f32 %v229, 1.0
        %v276 = vmax.f32 %v232, 1.0
        %v277 = vmax.f32 %v235, 1.0
        %v278 = vmax.f32 %v238, 1.0
        %v279 = vmax.f32 %v241, 1.0
        %v280 = vmax.f32 %v244, 1.0
        %v281 = vmax.f32 %v247, 1.0
        %v282 = vmax.f32 %v250, 1.0
        %v283 = vmax.f32 %v253, 1.0
        %v284 = vmax.f32 %v256, 1.0
        %v285 = vmax.f32 %v259, 1.0
        %v286 = vmax.f32 %v262, 1.0
        %v287 = vmax.f32 %v265, 1.0
        %v288 = vmax.f32 %v268, 1.0
        %v289 = vmax.f32 %v271, 1.0
        %v290 = vmax.f32 %v274, 1.0
        %v291 = vrsqrt.pop %v275
        %v292 = vmul.f32 %v291, %v275
        %v293 = vmul.f32 %v292, %v291
        %v294 = vmul.f32 0.5, %v293
        %v295 = vsub.f32 1.5, %v294
        %v296 = vmul.f32 %v291, %v295
        %vm297 = vweird.f32 %v275
        %vm298 = vweird.f32 %v291
        %vm299 = vmor %vm297, %vm298
        %v300 = vsel %vm299, %v291, %v296
        %v301 = vrsqrt.pop %v276
        %v302 = vmul.f32 %v301, %v276
        %v303 = vmul.f32 %v302, %v301
        %v304 = vmul.f32 0.5, %v303
        %v305 = vsub.f32 1.5, %v304
        %v306 = vmul.f32 %v301, %v305
        %vm307 = vweird.f32 %v276
        %vm308 = vweird.f32 %v301
        %vm309 = vmor %vm307, %vm308
        %v310 = vsel %vm309, %v301, %v306
        %v311 = vrsqrt.pop %v277
        %v312 = vmul.f32 %v311, %v277
        %v313 = vmul.f32 %v312, %v311
        %v314 = vmul.f32 0.5, %v313
        %v315 = vsub.f32 1.5, %v314
        %v316 = vmul.f32 %v311, %v315
        %vm317 = vweird.f32 %v277
        %vm318 = vweird.f32 %v311
        %vm319 = vmor %vm317, %vm318
        %v320 = vsel %vm319, %v311, %v316
        %v321 = vrsqrt.pop %v278
        %v322 = vmul.f32 %v321, %v278
        %v323 = vmul.f32 %v322, %v321
        %v324 = vmul.f32 0.5, %v323
        %v325 = vsub.f32 1.5, %v324
        %v326 = vmul.f32 %v321, %v325
        %vm327 = vweird.f32 %v278
        %vm328 = vweird.f32 %v321
        %vm329 = vmor %vm327, %vm328
        %v330 = vsel %vm329, %v321, %v326
        %v331 = vrsqrt.pop %v279
        %v332 = vmul.f32 %v331, %v279
        %v333 = vmul.f32 %v332, %v331
        %v334 = vmul.f32 0.5, %v333
        %v335 = vsub.f32 1.5, %v334
        %v336 = vmul.f32 %v331, %v335
        %vm337 = vweird.f32 %v279
        %vm338 = vweird.f32 %v331
        %vm339 = vmor %vm337, %vm338
        %v340 = vsel %vm339, %v331, %v336
        %v341 = vrsqrt.pop %v280
        %v342 = vmul.f32 %v341, %v280
        %v343 = vmul.f32 %v342, %v341
        %v344 = vmul.f32 0.5, %v343
        %v345 = vsub.f32 1.5, %v344
        %v346 = vmul.f32 %v341, %v345
        %vm347 = vweird.f32 %v280
        %vm348 = vweird.f32 %v341
        %vm349 = vmor %vm347, %vm348
        %v350 = vsel %vm349, %v341, %v346
        %v351 = vrsqrt.pop %v281
        %v352 = vmul.f32 %v351, %v281
        %v353 = vmul.f32 %v352, %v351
        %v354 = vmul.f32 0.5, %v353
        %v355 = vsub.f32 1.5, %v354
        %v356 = vmul.f32 %v351, %v355
        %vm357 = vweird.f32 %v281
        %vm358 = vweird.f32 %v351
        %vm359 = vmor %vm357, %vm358
        %v360 = vsel %vm359, %v351, %v356
        %v361 = vrsqrt.pop %v282
        %v362 = vmul.f32 %v361, %v282
        %v363 = vmul.f32 %v362, %v361
        %v364 = vmul.f32 0.5, %v363
        %v365 = vsub.f32 1.5, %v364
        %v366 = vmul.f32 %v361, %v365
        %vm367 = vweird.f32 %v282
        %vm368 = vweird.f32 %v361
        %vm369 = vmor %vm367, %vm368
        %v370 = vsel %vm369, %v361, %v366
        %v371 = vrsqrt.pop %v283
        %v372 = vmul.f32 %v371, %v283
        %v373 = vmul.f32 %v372, %v371
        %v374 = vmul.f32 0.5, %v373
        %v375 = vsub.f32 1.5, %v374
        %v376 = vmul.f32 %v371, %v375
        %vm377 = vweird.f32 %v283
        %vm378 = vweird.f32 %v371
        %vm379 = vmor %vm377, %vm378
        %v380 = vsel %vm379, %v371, %v376
        %v381 = vrsqrt.pop %v284
        %v382 = vmul.f32 %v381, %v284
        %v383 = vmul.f32 %v382, %v381
        %v384 = vmul.f32 0.5, %v383
        %v385 = vsub.f32 1.5, %v384
        %v386 = vmul.f32 %v381, %v385
        %vm387 = vweird.f32 %v284
        %vm388 = vweird.f32 %v381
        %vm389 = vmor %vm387, %vm388
        %v390 = vsel %vm389, %v381, %v386
        %v391 = vrsqrt.pop %v285
        %v392 = vmul.f32 %v391, %v285
        %v393 = vmul.f32 %v392, %v391
        %v394 = vmul.f32 0.5, %v393
        %v395 = vsub.f32 1.5, %v394
        %v396 = vmul.f32 %v391, %v395
        %vm397 = vweird.f32 %v285
        %vm398 = vweird.f32 %v391
        %vm399 = vmor %vm397, %vm398
        %v400 = vsel %vm399, %v391, %v396
        %v401 = vrsqrt.pop %v286
        %v402 = vmul.f32 %v401, %v286
        %v403 = vmul.f32 %v402, %v401
        %v404 = vmul.f32 0.5, %v403
        %v405 = vsub.f32 1.5, %v404
        %v406 = vmul.f32 %v401, %v405
        %vm407 = vweird.f32 %v286
        %vm408 = vweird.f32 %v401
        %vm409 = vmor %vm407, %vm408
        %v410 = vsel %vm409, %v401, %v406
        %v411 = vrsqrt.pop %v287
        %v412 = vmul.f32 %v411, %v287
        %v413 = vmul.f32 %v412, %v411
        %v414 = vmul.f32 0.5, %v413
        %v415 = vsub.f32 1.5, %v414
        %v416 = vmul.f32 %v411, %v415
        %vm417 = vweird.f32 %v287
        %vm418 = vweird.f32 %v411
        %vm419 = vmor %vm417, %vm418
        %v420 = vsel %vm419, %v411, %v416
        %v421 = vrsqrt.pop %v288
        %v422 = vmul.f32 %v421, %v288
        %v423 = vmul.f32 %v422, %v421
        %v424 = vmul.f32 0.5, %v423
        %v425 = vsub.f32 1.5, %v424
        %v426 = vmul.f32 %v421, %v425
        %vm427 = vweird.f32 %v288
        %vm428 = vweird.f32 %v421
        %vm429 = vmor %vm427, %vm428
        %v430 = vsel %vm429, %v421, %v426
        %v431 = vrsqrt.pop %v289
        %v432 = vmul.f32 %v431, %v289
        %v433 = vmul.f32 %v432, %v431
        %v434 = vmul.f32 0.5, %v433
        %v435 = vsub.f32 1.5, %v434
        %v436 = vmul.f32 %v431, %v435
        %vm437 = vweird.f32 %v289
        %vm438 = vweird.f32 %v431
        %vm439 = vmor %vm437, %vm438
        %v440 = vsel %vm439, %v431, %v436
        %v441 = vrsqrt.pop %v290
        %v442 = vmul.f32 %v441, %v290
        %v443 = vmul.f32 %v442, %v441
        %v444 = vmul.f32 0.5, %v443
        %v445 = vsub.f32 1.5, %v444
        %v446 = vmul.f32 %v441, %v445
        %vm447 = vweird.f32 %v290
        %vm448 = vweird.f32 %v441
        %vm449 = vmor %vm447, %vm448
        %v450 = vsel %vm449, %v441, %v446
        %s451 = scalar_lea.vmem [#allocation4], %s173
        %vm452 = vcmask 7168
        %453 = vst.msk [vmem:[%s451] sm:$0xff] %vm452, %v300
        %454 = vst.msk [vmem:[%s451 + $0x8] sm:$0xff] %vm452, %v310
        %455 = vst.msk [vmem:[%s451 + $0x10] sm:$0xff] %vm452, %v320
        %456 = vst.msk [vmem:[%s451 + $0x18] sm:$0xff] %vm452, %v330
        %457 = vst.msk [vmem:[%s451 + $0x20] sm:$0xff] %vm452, %v340
        %458 = vst.msk [vmem:[%s451 + $0x28] sm:$0xff] %vm452, %v350
        %459 = vst.msk [vmem:[%s451 + $0x30] sm:$0xff] %vm452, %v360
        %460 = vst.msk [vmem:[%s451 + $0x38] sm:$0xff] %vm452, %v370
        %461 = vst.msk [vmem:[%s451 + $0x40] sm:$0xff] %vm452, %v380
        %462 = vst.msk [vmem:[%s451 + $0x48] sm:$0xff] %vm452, %v390
        %463 = vst.msk [vmem:[%s451 + $0x50] sm:$0xff] %vm452, %v400
        %464 = vst.msk [vmem:[%s451 + $0x58] sm:$0xff] %vm452, %v410
        %465 = vst.msk [vmem:[%s451 + $0x60] sm:$0xff] %vm452, %v420
        %466 = vst.msk [vmem:[%s451 + $0x68] sm:$0xff] %vm452, %v430
        %467 = vst.msk [vmem:[%s451 + $0x70] sm:$0xff] %vm452, %v440
        %468 = vst.msk [vmem:[%s451 + $0x78] sm:$0xff] %vm452, %v450
        %p469 = scmp.eq.s32.totalorder %s19, 0
        // Predicated region
        $region37: #{tpu_custom_call.1} parent=35 // pred_check
          %p470 = pneg %p469
        $region38: #{tpu_custom_call.1} parent=35 // pred_check_branch
          %472 = sbr.rel (%p470) target = $region40
        $region39: #{tpu_custom_call.1} parent=35 // pred_region
          %v473 = vld [vmem:[%s1] sm:$0xff]
          %v474 = vld [vmem:[%s1 + $0x8] sm:$0xff]
          %v475 = vld [vmem:[%s1 + $0x10] sm:$0xff]
          %v476 = vld [vmem:[%s1 + $0x18] sm:$0xff]
          %v477 = vld [vmem:[%s1 + $0x20] sm:$0xff]
          %v478 = vld [vmem:[%s1 + $0x28] sm:$0xff]
          %v479 = vld [vmem:[%s1 + $0x30] sm:$0xff]
          %v480 = vld [vmem:[%s1 + $0x38] sm:$0xff]
          %v481 = vld [vmem:[%s1 + $0x40] sm:$0xff]
          %v482 = vld [vmem:[%s1 + $0x48] sm:$0xff]
          %v483 = vld [vmem:[%s1 + $0x50] sm:$0xff]
          %v484 = vld [vmem:[%s1 + $0x58] sm:$0xff]
          %v485 = vld [vmem:[%s1 + $0x60] sm:$0xff]
          %v486 = vld [vmem:[%s1 + $0x68] sm:$0xff]
          %v487 = vld [vmem:[%s1 + $0x70] sm:$0xff]
          %v488 = vld [vmem:[%s1 + $0x78] sm:$0xff]
          %v489 = vld [vmem:[%s1 + $0x80] sm:$0xff]
          %v490 = vld [vmem:[%s1 + $0x88] sm:$0xff]
          %v491 = vld [vmem:[%s1 + $0x90] sm:$0xff]
          %v492 = vld [vmem:[%s1 + $0x98] sm:$0xff]
          %v493 = vld [vmem:[%s1 + $0xa0] sm:$0xff]
          %v494 = vld [vmem:[%s1 + $0xa8] sm:$0xff]
          %v495 = vld [vmem:[%s1 + $0xb0] sm:$0xff]
          %v496 = vld [vmem:[%s1 + $0xb8] sm:$0xff]
          %v497 = vld [vmem:[%s1 + $0xc0] sm:$0xff]
          %v498 = vld [vmem:[%s1 + $0xc8] sm:$0xff]
          %v499 = vld [vmem:[%s1 + $0xd0] sm:$0xff]
          %v500 = vld [vmem:[%s1 + $0xd8] sm:$0xff]
          %v501 = vld [vmem:[%s1 + $0xe0] sm:$0xff]
          %v502 = vld [vmem:[%s1 + $0xe8] sm:$0xff]
          %v503 = vld [vmem:[%s1 + $0xf0] sm:$0xff]
          %v504 = vld [vmem:[%s1 + $0xf8] sm:$0xff]
          %vm505 = vcmask 64512
          %506 = vst.msk [vmem:[#allocation2] sm:$0xff] %vm505, %v473
          %507 = vst.msk [vmem:[#allocation2 + $0x8] sm:$0xff] %vm505, %v474
          %508 = vst.msk [vmem:[#allocation2 + $0x10] sm:$0xff] %vm505, %v475
          %509 = vst.msk [vmem:[#allocation2 + $0x18] sm:$0xff] %vm505, %v476
          %510 = vst.msk [vmem:[#allocation2 + $0x20] sm:$0xff] %vm505, %v477
          %511 = vst.msk [vmem:[#allocation2 + $0x28] sm:$0xff] %vm505, %v478
          %512 = vst.msk [vmem:[#allocation2 + $0x30] sm:$0xff] %vm505, %v479
          %513 = vst.msk [vmem:[#allocation2 + $0x38] sm:$0xff] %vm505, %v480
          %514 = vst.msk [vmem:[#allocation2 + $0x40] sm:$0xff] %vm505, %v481
          %515 = vst.msk [vmem:[#allocation2 + $0x48] sm:$0xff] %vm505, %v482
          %516 = vst.msk [vmem:[#allocation2 + $0x50] sm:$0xff] %vm505, %v483
          %517 = vst.msk [vmem:[#allocation2 + $0x58] sm:$0xff] %vm505, %v484
          %518 = vst.msk [vmem:[#allocation2 + $0x60] sm:$0xff] %vm505, %v485
          %519 = vst.msk [vmem:[#allocation2 + $0x68] sm:$0xff] %vm505, %v486
          %520 = vst.msk [vmem:[#allocation2 + $0x70] sm:$0xff] %vm505, %v487
          %521 = vst.msk [vmem:[#allocation2 + $0x78] sm:$0xff] %vm505, %v488
          %522 = vst.msk [vmem:[#allocation2 + $0x80] sm:$0xff] %vm505, %v489
          %523 = vst.msk [vmem:[#allocation2 + $0x88] sm:$0xff] %vm505, %v490
          %524 = vst.msk [vmem:[#allocation2 + $0x90] sm:$0xff] %vm505, %v491
          %525 = vst.msk [vmem:[#allocation2 + $0x98] sm:$0xff] %vm505, %v492
          %526 = vst.msk [vmem:[#allocation2 + $0xa0] sm:$0xff] %vm505, %v493
          %527 = vst.msk [vmem:[#allocation2 + $0xa8] sm:$0xff] %vm505, %v494
          %528 = vst.msk [vmem:[#allocation2 + $0xb0] sm:$0xff] %vm505, %v495
          %529 = vst.msk [vmem:[#allocation2 + $0xb8] sm:$0xff] %vm505, %v496
          %530 = vst.msk [vmem:[#allocation2 + $0xc0] sm:$0xff] %vm505, %v497
          %531 = vst.msk [vmem:[#allocation2 + $0xc8] sm:$0xff] %vm505, %v498
          %532 = vst.msk [vmem:[#allocation2 + $0xd0] sm:$0xff] %vm505, %v499
          %533 = vst.msk [vmem:[#allocation2 + $0xd8] sm:$0xff] %vm505, %v500
          %534 = vst.msk [vmem:[#allocation2 + $0xe0] sm:$0xff] %vm505, %v501
          %535 = vst.msk [vmem:[#allocation2 + $0xe8] sm:$0xff] %vm505, %v502
          %536 = vst.msk [vmem:[#allocation2 + $0xf0] sm:$0xff] %vm505, %v503
          %537 = vst.msk [vmem:[#allocation2 + $0xf8] sm:$0xff] %vm505, %v504
          %v539 = vperm.slane %v174, 0
          %v541 = vmul.f32 %v473, %v539
          %v542 = vmul.f32 %v474, %v539
          %v543 = vmul.f32 %v475, %v539
          %v544 = vmul.f32 %v476, %v539
          %v545 = vmul.f32 %v477, %v539
          %v546 = vmul.f32 %v478, %v539
          %v547 = vmul.f32 %v479, %v539
          %v548 = vmul.f32 %v480, %v539
          %v549 = vmul.f32 %v481, %v539
          %v550 = vmul.f32 %v482, %v539
          %v551 = vmul.f32 %v483, %v539
          %v552 = vmul.f32 %v484, %v539
          %v553 = vmul.f32 %v485, %v539
          %v554 = vmul.f32 %v486, %v539
          %v555 = vmul.f32 %v487, %v539
          %v556 = vmul.f32 %v488, %v539
          %v557 = vmul.f32 %v489, %v539
          %v558 = vmul.f32 %v490, %v539
          %v559 = vmul.f32 %v491, %v539
          %v560 = vmul.f32 %v492, %v539
          %v561 = vmul.f32 %v493, %v539
          %v562 = vmul.f32 %v494, %v539
          %v563 = vmul.f32 %v495, %v539
          %v564 = vmul.f32 %v496, %v539
          %v565 = vmul.f32 %v497, %v539
          %v566 = vmul.f32 %v498, %v539
          %v567 = vmul.f32 %v499, %v539
          %v568 = vmul.f32 %v500, %v539
          %v569 = vmul.f32 %v501, %v539
          %v570 = vmul.f32 %v502, %v539
          %v571 = vmul.f32 %v503, %v539
          %v572 = vmul.f32 %v504, %v539
          %v573 = vsel %vm505, %v541, 0.0
          %574 = vadd.xlane.f32.xlu0 %v573
          %v575 = vpop.xlane.xlu0 %574
          %v576 = vsel %vm505, %v542, 0.0
          %577 = vadd.xlane.f32.xlu0 %v576
          %v578 = vpop.xlane.xlu0 %577
          %v579 = vsel %vm505, %v543, 0.0
          %580 = vadd.xlane.f32.xlu0 %v579
          %v581 = vpop.xlane.xlu0 %580
          %v582 = vsel %vm505, %v544, 0.0
          %583 = vadd.xlane.f32.xlu0 %v582
          %v584 = vpop.xlane.xlu0 %583
          %v585 = vsel %vm505, %v545, 0.0
          %586 = vadd.xlane.f32.xlu0 %v585
          %v587 = vpop.xlane.xlu0 %586
          %v588 = vsel %vm505, %v546, 0.0
          %589 = vadd.xlane.f32.xlu0 %v588
          %v590 = vpop.xlane.xlu0 %589
          %v591 = vsel %vm505, %v547, 0.0
          %592 = vadd.xlane.f32.xlu0 %v591
          %v593 = vpop.xlane.xlu0 %592
          %v594 = vsel %vm505, %v548, 0.0
          %595 = vadd.xlane.f32.xlu0 %v594
          %v596 = vpop.xlane.xlu0 %595
          %v597 = vsel %vm505, %v549, 0.0
          %598 = vadd.xlane.f32.xlu0 %v597
          %v599 = vpop.xlane.xlu0 %598
          %v600 = vsel %vm505, %v550, 0.0
          %601 = vadd.xlane.f32.xlu0 %v600
          %v602 = vpop.xlane.xlu0 %601
          %v603 = vsel %vm505, %v551, 0.0
          %604 = vadd.xlane.f32.xlu0 %v603
          %v605 = vpop.xlane.xlu0 %604
          %v606 = vsel %vm505, %v552, 0.0
          %607 = vadd.xlane.f32.xlu0 %v606
          %v608 = vpop.xlane.xlu0 %607
          %v609 = vsel %vm505, %v553, 0.0
          %610 = vadd.xlane.f32.xlu0 %v609
          %v611 = vpop.xlane.xlu0 %610
          %v612 = vsel %vm505, %v554, 0.0
          %613 = vadd.xlane.f32.xlu0 %v612
          %v614 = vpop.xlane.xlu0 %613
          %v615 = vsel %vm505, %v555, 0.0
          %616 = vadd.xlane.f32.xlu0 %v615
          %v617 = vpop.xlane.xlu0 %616
          %v618 = vsel %vm505, %v556, 0.0
          %619 = vadd.xlane.f32.xlu0 %v618
          %v620 = vpop.xlane.xlu0 %619
          %v621 = vsel %vm505, %v557, 0.0
          %622 = vadd.xlane.f32.xlu0 %v621
          %v623 = vpop.xlane.xlu0 %622
          %v624 = vsel %vm505, %v558, 0.0
          %625 = vadd.xlane.f32.xlu0 %v624
          %v626 = vpop.xlane.xlu0 %625
          %v627 = vsel %vm505, %v559, 0.0
          %628 = vadd.xlane.f32.xlu0 %v627
          %v629 = vpop.xlane.xlu0 %628
          %v630 = vsel %vm505, %v560, 0.0
          %631 = vadd.xlane.f32.xlu0 %v630
          %v632 = vpop.xlane.xlu0 %631
          %v633 = vsel %vm505, %v561, 0.0
          %634 = vadd.xlane.f32.xlu0 %v633
          %v635 = vpop.xlane.xlu0 %634
          %v636 = vsel %vm505, %v562, 0.0
          %637 = vadd.xlane.f32.xlu0 %v636
          %v638 = vpop.xlane.xlu0 %637
          %v639 = vsel %vm505, %v563, 0.0
          %640 = vadd.xlane.f32.xlu0 %v639
          %v641 = vpop.xlane.xlu0 %640
          %v642 = vsel %vm505, %v564, 0.0
          %643 = vadd.xlane.f32.xlu0 %v642
          %v644 = vpop.xlane.xlu0 %643
          %v645 = vsel %vm505, %v565, 0.0
          %646 = vadd.xlane.f32.xlu0 %v645
          %v647 = vpop.xlane.xlu0 %646
          %v648 = vsel %vm505, %v566, 0.0
          %649 = vadd.xlane.f32.xlu0 %v648
          %v650 = vpop.xlane.xlu0 %649
          %v651 = vsel %vm505, %v567, 0.0
          %652 = vadd.xlane.f32.xlu0 %v651
          %v653 = vpop.xlane.xlu0 %652
          %v654 = vsel %vm505, %v568, 0.0
          %655 = vadd.xlane.f32.xlu0 %v654
          %v656 = vpop.xlane.xlu0 %655
          %v657 = vsel %vm505, %v569, 0.0
          %658 = vadd.xlane.f32.xlu0 %v657
          %v659 = vpop.xlane.xlu0 %658
          %v660 = vsel %vm505, %v570, 0.0
          %661 = vadd.xlane.f32.xlu0 %v660
          %v662 = vpop.xlane.xlu0 %661
          %v663 = vsel %vm505, %v571, 0.0
          %664 = vadd.xlane.f32.xlu0 %v663
          %v665 = vpop.xlane.xlu0 %664
          %v666 = vsel %vm505, %v572, 0.0
          %667 = vadd.xlane.f32.xlu0 %v666
          %v668 = vpop.xlane.xlu0 %667
          %v669 = vsub.f32 0.0, %v575
          %v670 = vsub.f32 0.0, %v578
          %v671 = vsub.f32 0.0, %v581
          %v672 = vsub.f32 0.0, %v584
          %v673 = vsub.f32 0.0, %v587
          %v674 = vsub.f32 0.0, %v590
          %v675 = vsub.f32 0.0, %v593
          %v676 = vsub.f32 0.0, %v596
          %v677 = vsub.f32 0.0, %v599
          %v678 = vsub.f32 0.0, %v602
          %v679 = vsub.f32 0.0, %v605
          %v680 = vsub.f32 0.0, %v608
          %v681 = vsub.f32 0.0, %v611
          %v682 = vsub.f32 0.0, %v614
          %v683 = vsub.f32 0.0, %v617
          %v684 = vsub.f32 0.0, %v620
          %v685 = vsub.f32 0.0, %v623
          %v686 = vsub.f32 0.0, %v626
          %v687 = vsub.f32 0.0, %v629
          %v688 = vsub.f32 0.0, %v632
          %v689 = vsub.f32 0.0, %v635
          %v690 = vsub.f32 0.0, %v638
          %v691 = vsub.f32 0.0, %v641
          %v692 = vsub.f32 0.0, %v644
          %v693 = vsub.f32 0.0, %v647
          %v694 = vsub.f32 0.0, %v650
          %v695 = vsub.f32 0.0, %v653
          %v696 = vsub.f32 0.0, %v656
          %v697 = vsub.f32 0.0, %v659
          %v698 = vsub.f32 0.0, %v662
          %v699 = vsub.f32 0.0, %v665
          %v700 = vsub.f32 0.0, %v668
          %v701 = vmul.f32 %v669, 1.442695
          %v702 = vpow.pop %v701
          %v703 = vmul.f32 %v670, 1.442695
          %v704 = vpow.pop %v703
          %v705 = vmul.f32 %v671, 1.442695
          %v706 = vpow.pop %v705
          %v707 = vmul.f32 %v672, 1.442695
          %v708 = vpow.pop %v707
          %v709 = vmul.f32 %v673, 1.442695
          %v710 = vpow.pop %v709
          %v711 = vmul.f32 %v674, 1.442695
          %v712 = vpow.pop %v711
          %v713 = vmul.f32 %v675, 1.442695
          %v714 = vpow.pop %v713
          %v715 = vmul.f32 %v676, 1.442695
          %v716 = vpow.pop %v715
          %v717 = vmul.f32 %v677, 1.442695
          %v718 = vpow.pop %v717
          %v719 = vmul.f32 %v678, 1.442695
          %v720 = vpow.pop %v719
          %v721 = vmul.f32 %v679, 1.442695
          %v722 = vpow.pop %v721
          %v723 = vmul.f32 %v680, 1.442695
          %v724 = vpow.pop %v723
          %v725 = vmul.f32 %v681, 1.442695
          %v726 = vpow.pop %v725
          %v727 = vmul.f32 %v682, 1.442695
          %v728 = vpow.pop %v727
          %v729 = vmul.f32 %v683, 1.442695
          %v730 = vpow.pop %v729
          %v731 = vmul.f32 %v684, 1.442695
          %v732 = vpow.pop %v731
          %v733 = vmul.f32 %v685, 1.442695
          %v734 = vpow.pop %v733
          %v735 = vmul.f32 %v686, 1.442695
          %v736 = vpow.pop %v735
          %v737 = vmul.f32 %v687, 1.442695
          %v738 = vpow.pop %v737
          %v739 = vmul.f32 %v688, 1.442695
          %v740 = vpow.pop %v739
          %v741 = vmul.f32 %v689, 1.442695
          %v742 = vpow.pop %v741
          %v743 = vmul.f32 %v690, 1.442695
          %v744 = vpow.pop %v743
          %v745 = vmul.f32 %v691, 1.442695
          %v746 = vpow.pop %v745
          %v747 = vmul.f32 %v692, 1.442695
          %v748 = vpow.pop %v747
          %v749 = vmul.f32 %v693, 1.442695
          %v750 = vpow.pop %v749
          %v751 = vmul.f32 %v694, 1.442695
          %v752 = vpow.pop %v751
          %v753 = vmul.f32 %v695, 1.442695
          %v754 = vpow.pop %v753
          %v755 = vmul.f32 %v696, 1.442695
          %v756 = vpow.pop %v755
          %v757 = vmul.f32 %v697, 1.442695
          %v758 = vpow.pop %v757
          %v759 = vmul.f32 %v698, 1.442695
          %v760 = vpow.pop %v759
          %v761 = vmul.f32 %v699, 1.442695
          %v762 = vpow.pop %v761
          %v763 = vmul.f32 %v700, 1.442695
          %v764 = vpow.pop %v763
          %v765 = vadd.f32 %v702, 1.0
          %v766 = vadd.f32 %v704, 1.0
          %v767 = vadd.f32 %v706, 1.0
          %v768 = vadd.f32 %v708, 1.0
          %v769 = vadd.f32 %v710, 1.0
          %v770 = vadd.f32 %v712, 1.0
          %v771 = vadd.f32 %v714, 1.0
          %v772 = vadd.f32 %v716, 1.0
          %v773 = vadd.f32 %v718, 1.0
          %v774 = vadd.f32 %v720, 1.0
          %v775 = vadd.f32 %v722, 1.0
          %v776 = vadd.f32 %v724, 1.0
          %v777 = vadd.f32 %v726, 1.0
          %v778 = vadd.f32 %v728, 1.0
          %v779 = vadd.f32 %v730, 1.0
          %v780 = vadd.f32 %v732, 1.0
          %v781 = vadd.f32 %v734, 1.0
          %v782 = vadd.f32 %v736, 1.0
          %v783 = vadd.f32 %v738, 1.0
          %v784 = vadd.f32 %v740, 1.0
          %v785 = vadd.f32 %v742, 1.0
          %v786 = vadd.f32 %v744, 1.0
          %v787 = vadd.f32 %v746, 1.0
          %v788 = vadd.f32 %v748, 1.0
          %v789 = vadd.f32 %v750, 1.0
          %v790 = vadd.f32 %v752, 1.0
          %v791 = vadd.f32 %v754, 1.0
          %v792 = vadd.f32 %v756, 1.0
          %v793 = vadd.f32 %v758, 1.0
          %v794 = vadd.f32 %v760, 1.0
          %v795 = vadd.f32 %v762, 1.0
          %v796 = vadd.f32 %v764, 1.0
          %v797 = vrcp.pop %v765
          %v798 = vmul.f32 %v765, %v797
          %v799 = vsub.f32 1.0, %v798
          %v800 = vmul.f32 %v797, %v799
          %v801 = vadd.f32 %v797, %v800
          %vm802 = vweird.f32 %v765
          %vm803 = vweird.f32 %v797
          %vm804 = vmor %vm802, %vm803
          %v805 = vsel %vm804, %v797, %v801
          %v806 = vand.u32 2147483647, %v765
          %vm807 = vcmp.eq.f32.partialorder %v806, 8.507059e+37
          %v808 = vand.u32 %v765, 2147483648
          %v809 = vor.u32 1.1754944e-38, %v808
          %v810 = vsel %vm807, %v809, %v805
          %v811 = vmul.f32 1.0, %v810
          %v812 = vrcp.pop %v766
          %v813 = vmul.f32 %v766, %v812
          %v814 = vsub.f32 1.0, %v813
          %v815 = vmul.f32 %v812, %v814
          %v816 = vadd.f32 %v812, %v815
          %vm817 = vweird.f32 %v766
          %vm818 = vweird.f32 %v812
          %vm819 = vmor %vm817, %vm818
          %v820 = vsel %vm819, %v812, %v816
          %v821 = vand.u32 2147483647, %v766
          %vm822 = vcmp.eq.f32.partialorder %v821, 8.507059e+37
          %v823 = vand.u32 %v766, 2147483648
          %v824 = vor.u32 1.1754944e-38, %v823
          %v825 = vsel %vm822, %v824, %v820
          %v826 = vmul.f32 1.0, %v825
          %v827 = vrcp.pop %v767
          %v828 = vmul.f32 %v767, %v827
          %v829 = vsub.f32 1.0, %v828
          %v830 = vmul.f32 %v827, %v829
          %v831 = vadd.f32 %v827, %v830
          %vm832 = vweird.f32 %v767
          %vm833 = vweird.f32 %v827
          %vm834 = vmor %vm832, %vm833
          %v835 = vsel %vm834, %v827, %v831
          %v836 = vand.u32 2147483647, %v767
          %vm837 = vcmp.eq.f32.partialorder %v836, 8.507059e+37
          %v838 = vand.u32 %v767, 2147483648
          %v839 = vor.u32 1.1754944e-38, %v838
          %v840 = vsel %vm837, %v839, %v835
          %v841 = vmul.f32 1.0, %v840
          %v842 = vrcp.pop %v768
          %v843 = vmul.f32 %v768, %v842
          %v844 = vsub.f32 1.0, %v843
          %v845 = vmul.f32 %v842, %v844
          %v846 = vadd.f32 %v842, %v845
          %vm847 = vweird.f32 %v768
          %vm848 = vweird.f32 %v842
          %vm849 = vmor %vm847, %vm848
          %v850 = vsel %vm849, %v842, %v846
          %v851 = vand.u32 2147483647, %v768
          %vm852 = vcmp.eq.f32.partialorder %v851, 8.507059e+37
          %v853 = vand.u32 %v768, 2147483648
          %v854 = vor.u32 1.1754944e-38, %v853
          %v855 = vsel %vm852, %v854, %v850
          %v856 = vmul.f32 1.0, %v855
          %v857 = vrcp.pop %v769
          %v858 = vmul.f32 %v769, %v857
          %v859 = vsub.f32 1.0, %v858
          %v860 = vmul.f32 %v857, %v859
          %v861 = vadd.f32 %v857, %v860
          %vm862 = vweird.f32 %v769
          %vm863 = vweird.f32 %v857
          %vm864 = vmor %vm862, %vm863
          %v865 = vsel %vm864, %v857, %v861
          %v866 = vand.u32 2147483647, %v769
          %vm867 = vcmp.eq.f32.partialorder %v866, 8.507059e+37
          %v868 = vand.u32 %v769, 2147483648
          %v869 = vor.u32 1.1754944e-38, %v868
          %v870 = vsel %vm867, %v869, %v865
          %v871 = vmul.f32 1.0, %v870
          %v872 = vrcp.pop %v770
          %v873 = vmul.f32 %v770, %v872
          %v874 = vsub.f32 1.0, %v873
          %v875 = vmul.f32 %v872, %v874
          %v876 = vadd.f32 %v872, %v875
          %vm877 = vweird.f32 %v770
          %vm878 = vweird.f32 %v872
          %vm879 = vmor %vm877, %vm878
          %v880 = vsel %vm879, %v872, %v876
          %v881 = vand.u32 2147483647, %v770
          %vm882 = vcmp.eq.f32.partialorder %v881, 8.507059e+37
          %v883 = vand.u32 %v770, 2147483648
          %v884 = vor.u32 1.1754944e-38, %v883
          %v885 = vsel %vm882, %v884, %v880
          %v886 = vmul.f32 1.0, %v885
          %v887 = vrcp.pop %v771
          %v888 = vmul.f32 %v771, %v887
          %v889 = vsub.f32 1.0, %v888
          %v890 = vmul.f32 %v887, %v889
          %v891 = vadd.f32 %v887, %v890
          %vm892 = vweird.f32 %v771
          %vm893 = vweird.f32 %v887
          %vm894 = vmor %vm892, %vm893
          %v895 = vsel %vm894, %v887, %v891
          %v896 = vand.u32 2147483647, %v771
          %vm897 = vcmp.eq.f32.partialorder %v896, 8.507059e+37
          %v898 = vand.u32 %v771, 2147483648
          %v899 = vor.u32 1.1754944e-38, %v898
          %v900 = vsel %vm897, %v899, %v895
          %v901 = vmul.f32 1.0, %v900
          %v902 = vrcp.pop %v772
          %v903 = vmul.f32 %v772, %v902
          %v904 = vsub.f32 1.0, %v903
          %v905 = vmul.f32 %v902, %v904
          %v906 = vadd.f32 %v902, %v905
          %vm907 = vweird.f32 %v772
          %vm908 = vweird.f32 %v902
          %vm909 = vmor %vm907, %vm908
          %v910 = vsel %vm909, %v902, %v906
          %v911 = vand.u32 2147483647, %v772
          %vm912 = vcmp.eq.f32.partialorder %v911, 8.507059e+37
          %v913 = vand.u32 %v772, 2147483648
          %v914 = vor.u32 1.1754944e-38, %v913
          %v915 = vsel %vm912, %v914, %v910
          %v916 = vmul.f32 1.0, %v915
          %v917 = vrcp.pop %v773
          %v918 = vmul.f32 %v773, %v917
          %v919 = vsub.f32 1.0, %v918
          %v920 = vmul.f32 %v917, %v919
          %v921 = vadd.f32 %v917, %v920
          %vm922 = vweird.f32 %v773
          %vm923 = vweird.f32 %v917
          %vm924 = vmor %vm922, %vm923
          %v925 = vsel %vm924, %v917, %v921
          %v926 = vand.u32 2147483647, %v773
          %vm927 = vcmp.eq.f32.partialorder %v926, 8.507059e+37
          %v928 = vand.u32 %v773, 2147483648
          %v929 = vor.u32 1.1754944e-38, %v928
          %v930 = vsel %vm927, %v929, %v925
          %v931 = vmul.f32 1.0, %v930
          %v932 = vrcp.pop %v774
          %v933 = vmul.f32 %v774, %v932
          %v934 = vsub.f32 1.0, %v933
          %v935 = vmul.f32 %v932, %v934
          %v936 = vadd.f32 %v932, %v935
          %vm937 = vweird.f32 %v774
          %vm938 = vweird.f32 %v932
          %vm939 = vmor %vm937, %vm938
          %v940 = vsel %vm939, %v932, %v936
          %v941 = vand.u32 2147483647, %v774
          %vm942 = vcmp.eq.f32.partialorder %v941, 8.507059e+37
          %v943 = vand.u32 %v774, 2147483648
          %v944 = vor.u32 1.1754944e-38, %v943
          %v945 = vsel %vm942, %v944, %v940
          %v946 = vmul.f32 1.0, %v945
          %v947 = vrcp.pop %v775
          %v948 = vmul.f32 %v775, %v947
          %v949 = vsub.f32 1.0, %v948
          %v950 = vmul.f32 %v947, %v949
          %v951 = vadd.f32 %v947, %v950
          %vm952 = vweird.f32 %v775
          %vm953 = vweird.f32 %v947
          %vm954 = vmor %vm952, %vm953
          %v955 = vsel %vm954, %v947, %v951
          %v956 = vand.u32 2147483647, %v775
          %vm957 = vcmp.eq.f32.partialorder %v956, 8.507059e+37
          %v958 = vand.u32 %v775, 2147483648
          %v959 = vor.u32 1.1754944e-38, %v958
          %v960 = vsel %vm957, %v959, %v955
          %v961 = vmul.f32 1.0, %v960
          %v962 = vrcp.pop %v776
          %v963 = vmul.f32 %v776, %v962
          %v964 = vsub.f32 1.0, %v963
          %v965 = vmul.f32 %v962, %v964
          %v966 = vadd.f32 %v962, %v965
          %vm967 = vweird.f32 %v776
          %vm968 = vweird.f32 %v962
          %vm969 = vmor %vm967, %vm968
          %v970 = vsel %vm969, %v962, %v966
          %v971 = vand.u32 2147483647, %v776
          %vm972 = vcmp.eq.f32.partialorder %v971, 8.507059e+37
          %v973 = vand.u32 %v776, 2147483648
          %v974 = vor.u32 1.1754944e-38, %v973
          %v975 = vsel %vm972, %v974, %v970
          %v976 = vmul.f32 1.0, %v975
          %v977 = vrcp.pop %v777
          %v978 = vmul.f32 %v777, %v977
          %v979 = vsub.f32 1.0, %v978
          %v980 = vmul.f32 %v977, %v979
          %v981 = vadd.f32 %v977, %v980
          %vm982 = vweird.f32 %v777
          %vm983 = vweird.f32 %v977
          %vm984 = vmor %vm982, %vm983
          %v985 = vsel %vm984, %v977, %v981
          %v986 = vand.u32 2147483647, %v777
          %vm987 = vcmp.eq.f32.partialorder %v986, 8.507059e+37
          %v988 = vand.u32 %v777, 2147483648
          %v989 = vor.u32 1.1754944e-38, %v988
          %v990 = vsel %vm987, %v989, %v985
          %v991 = vmul.f32 1.0, %v990
          %v992 = vrcp.pop %v778
          %v993 = vmul.f32 %v778, %v992
          %v994 = vsub.f32 1.0, %v993
          %v995 = vmul.f32 %v992, %v994
          %v996 = vadd.f32 %v992, %v995
          %vm997 = vweird.f32 %v778
          %vm998 = vweird.f32 %v992
          %vm999 = vmor %vm997, %vm998
          %v1000 = vsel %vm999, %v992, %v996
          %v1001 = vand.u32 2147483647, %v778
          %vm1002 = vcmp.eq.f32.partialorder %v1001, 8.507059e+37
          %v1003 = vand.u32 %v778, 2147483648
          %v1004 = vor.u32 1.1754944e-38, %v1003
          %v1005 = vsel %vm1002, %v1004, %v1000
          %v1006 = vmul.f32 1.0, %v1005
          %v1007 = vrcp.pop %v779
          %v1008 = vmul.f32 %v779, %v1007
          %v1009 = vsub.f32 1.0, %v1008
          %v1010 = vmul.f32 %v1007, %v1009
          %v1011 = vadd.f32 %v1007, %v1010
          %vm1012 = vweird.f32 %v779
          %vm1013 = vweird.f32 %v1007
          %vm1014 = vmor %vm1012, %vm1013
          %v1015 = vsel %vm1014, %v1007, %v1011
          %v1016 = vand.u32 2147483647, %v779
          %vm1017 = vcmp.eq.f32.partialorder %v1016, 8.507059e+37
          %v1018 = vand.u32 %v779, 2147483648
          %v1019 = vor.u32 1.1754944e-38, %v1018
          %v1020 = vsel %vm1017, %v1019, %v1015
          %v1021 = vmul.f32 1.0, %v1020
          %v1022 = vrcp.pop %v780
          %v1023 = vmul.f32 %v780, %v1022
          %v1024 = vsub.f32 1.0, %v1023
          %v1025 = vmul.f32 %v1022, %v1024
          %v1026 = vadd.f32 %v1022, %v1025
          %vm1027 = vweird.f32 %v780
          %vm1028 = vweird.f32 %v1022
          %vm1029 = vmor %vm1027, %vm1028
          %v1030 = vsel %vm1029, %v1022, %v1026
          %v1031 = vand.u32 2147483647, %v780
          %vm1032 = vcmp.eq.f32.partialorder %v1031, 8.507059e+37
          %v1033 = vand.u32 %v780, 2147483648
          %v1034 = vor.u32 1.1754944e-38, %v1033
          %v1035 = vsel %vm1032, %v1034, %v1030
          %v1036 = vmul.f32 1.0, %v1035
          %v1037 = vrcp.pop %v781
          %v1038 = vmul.f32 %v781, %v1037
          %v1039 = vsub.f32 1.0, %v1038
          %v1040 = vmul.f32 %v1037, %v1039
          %v1041 = vadd.f32 %v1037, %v1040
          %vm1042 = vweird.f32 %v781
          %vm1043 = vweird.f32 %v1037
          %vm1044 = vmor %vm1042, %vm1043
          %v1045 = vsel %vm1044, %v1037, %v1041
          %v1046 = vand.u32 2147483647, %v781
          %vm1047 = vcmp.eq.f32.partialorder %v1046, 8.507059e+37
          %v1048 = vand.u32 %v781, 2147483648
          %v1049 = vor.u32 1.1754944e-38, %v1048
          %v1050 = vsel %vm1047, %v1049, %v1045
          %v1051 = vmul.f32 1.0, %v1050
          %v1052 = vrcp.pop %v782
          %v1053 = vmul.f32 %v782, %v1052
          %v1054 = vsub.f32 1.0, %v1053
          %v1055 = vmul.f32 %v1052, %v1054
          %v1056 = vadd.f32 %v1052, %v1055
          %vm1057 = vweird.f32 %v782
          %vm1058 = vweird.f32 %v1052
          %vm1059 = vmor %vm1057, %vm1058
          %v1060 = vsel %vm1059, %v1052, %v1056
          %v1061 = vand.u32 2147483647, %v782
          %vm1062 = vcmp.eq.f32.partialorder %v1061, 8.507059e+37
          %v1063 = vand.u32 %v782, 2147483648
          %v1064 = vor.u32 1.1754944e-38, %v1063
          %v1065 = vsel %vm1062, %v1064, %v1060
          %v1066 = vmul.f32 1.0, %v1065
          %v1067 = vrcp.pop %v783
          %v1068 = vmul.f32 %v783, %v1067
          %v1069 = vsub.f32 1.0, %v1068
          %v1070 = vmul.f32 %v1067, %v1069
          %v1071 = vadd.f32 %v1067, %v1070
          %vm1072 = vweird.f32 %v783
          %vm1073 = vweird.f32 %v1067
          %vm1074 = vmor %vm1072, %vm1073
          %v1075 = vsel %vm1074, %v1067, %v1071
          %v1076 = vand.u32 2147483647, %v783
          %vm1077 = vcmp.eq.f32.partialorder %v1076, 8.507059e+37
          %v1078 = vand.u32 %v783, 2147483648
          %v1079 = vor.u32 1.1754944e-38, %v1078
          %v1080 = vsel %vm1077, %v1079, %v1075
          %v1081 = vmul.f32 1.0, %v1080
          %v1082 = vrcp.pop %v784
          %v1083 = vmul.f32 %v784, %v1082
          %v1084 = vsub.f32 1.0, %v1083
          %v1085 = vmul.f32 %v1082, %v1084
          %v1086 = vadd.f32 %v1082, %v1085
          %vm1087 = vweird.f32 %v784
          %vm1088 = vweird.f32 %v1082
          %vm1089 = vmor %vm1087, %vm1088
          %v1090 = vsel %vm1089, %v1082, %v1086
          %v1091 = vand.u32 2147483647, %v784
          %vm1092 = vcmp.eq.f32.partialorder %v1091, 8.507059e+37
          %v1093 = vand.u32 %v784, 2147483648
          %v1094 = vor.u32 1.1754944e-38, %v1093
          %v1095 = vsel %vm1092, %v1094, %v1090
          %v1096 = vmul.f32 1.0, %v1095
          %v1097 = vrcp.pop %v785
          %v1098 = vmul.f32 %v785, %v1097
          %v1099 = vsub.f32 1.0, %v1098
          %v1100 = vmul.f32 %v1097, %v1099
          %v1101 = vadd.f32 %v1097, %v1100
          %vm1102 = vweird.f32 %v785
          %vm1103 = vweird.f32 %v1097
          %vm1104 = vmor %vm1102, %vm1103
          %v1105 = vsel %vm1104, %v1097, %v1101
          %v1106 = vand.u32 2147483647, %v785
          %vm1107 = vcmp.eq.f32.partialorder %v1106, 8.507059e+37
          %v1108 = vand.u32 %v785, 2147483648
          %v1109 = vor.u32 1.1754944e-38, %v1108
          %v1110 = vsel %vm1107, %v1109, %v1105
          %v1111 = vmul.f32 1.0, %v1110
          %v1112 = vrcp.pop %v786
          %v1113 = vmul.f32 %v786, %v1112
          %v1114 = vsub.f32 1.0, %v1113
          %v1115 = vmul.f32 %v1112, %v1114
          %v1116 = vadd.f32 %v1112, %v1115
          %vm1117 = vweird.f32 %v786
          %vm1118 = vweird.f32 %v1112
          %vm1119 = vmor %vm1117, %vm1118
          %v1120 = vsel %vm1119, %v1112, %v1116
          %v1121 = vand.u32 2147483647, %v786
          %vm1122 = vcmp.eq.f32.partialorder %v1121, 8.507059e+37
          %v1123 = vand.u32 %v786, 2147483648
          %v1124 = vor.u32 1.1754944e-38, %v1123
          %v1125 = vsel %vm1122, %v1124, %v1120
          %v1126 = vmul.f32 1.0, %v1125
          %v1127 = vrcp.pop %v787
          %v1128 = vmul.f32 %v787, %v1127
          %v1129 = vsub.f32 1.0, %v1128
          %v1130 = vmul.f32 %v1127, %v1129
          %v1131 = vadd.f32 %v1127, %v1130
          %vm1132 = vweird.f32 %v787
          %vm1133 = vweird.f32 %v1127
          %vm1134 = vmor %vm1132, %vm1133
          %v1135 = vsel %vm1134, %v1127, %v1131
          %v1136 = vand.u32 2147483647, %v787
          %vm1137 = vcmp.eq.f32.partialorder %v1136, 8.507059e+37
          %v1138 = vand.u32 %v787, 2147483648
          %v1139 = vor.u32 1.1754944e-38, %v1138
          %v1140 = vsel %vm1137, %v1139, %v1135
          %v1141 = vmul.f32 1.0, %v1140
          %v1142 = vrcp.pop %v788
          %v1143 = vmul.f32 %v788, %v1142
          %v1144 = vsub.f32 1.0, %v1143
          %v1145 = vmul.f32 %v1142, %v1144
          %v1146 = vadd.f32 %v1142, %v1145
          %vm1147 = vweird.f32 %v788
          %vm1148 = vweird.f32 %v1142
          %vm1149 = vmor %vm1147, %vm1148
          %v1150 = vsel %vm1149, %v1142, %v1146
          %v1151 = vand.u32 2147483647, %v788
          %vm1152 = vcmp.eq.f32.partialorder %v1151, 8.507059e+37
          %v1153 = vand.u32 %v788, 2147483648
          %v1154 = vor.u32 1.1754944e-38, %v1153
          %v1155 = vsel %vm1152, %v1154, %v1150
          %v1156 = vmul.f32 1.0, %v1155
          %v1157 = vrcp.pop %v789
          %v1158 = vmul.f32 %v789, %v1157
          %v1159 = vsub.f32 1.0, %v1158
          %v1160 = vmul.f32 %v1157, %v1159
          %v1161 = vadd.f32 %v1157, %v1160
          %vm1162 = vweird.f32 %v789
          %vm1163 = vweird.f32 %v1157
          %vm1164 = vmor %vm1162, %vm1163
          %v1165 = vsel %vm1164, %v1157, %v1161
          %v1166 = vand.u32 2147483647, %v789
          %vm1167 = vcmp.eq.f32.partialorder %v1166, 8.507059e+37
          %v1168 = vand.u32 %v789, 2147483648
          %v1169 = vor.u32 1.1754944e-38, %v1168
          %v1170 = vsel %vm1167, %v1169, %v1165
          %v1171 = vmul.f32 1.0, %v1170
          %v1172 = vrcp.pop %v790
          %v1173 = vmul.f32 %v790, %v1172
          %v1174 = vsub.f32 1.0, %v1173
          %v1175 = vmul.f32 %v1172, %v1174
          %v1176 = vadd.f32 %v1172, %v1175
          %vm1177 = vweird.f32 %v790
          %vm1178 = vweird.f32 %v1172
          %vm1179 = vmor %vm1177, %vm1178
          %v1180 = vsel %vm1179, %v1172, %v1176
          %v1181 = vand.u32 2147483647, %v790
          %vm1182 = vcmp.eq.f32.partialorder %v1181, 8.507059e+37
          %v1183 = vand.u32 %v790, 2147483648
          %v1184 = vor.u32 1.1754944e-38, %v1183
          %v1185 = vsel %vm1182, %v1184, %v1180
          %v1186 = vmul.f32 1.0, %v1185
          %v1187 = vrcp.pop %v791
          %v1188 = vmul.f32 %v791, %v1187
          %v1189 = vsub.f32 1.0, %v1188
          %v1190 = vmul.f32 %v1187, %v1189
          %v1191 = vadd.f32 %v1187, %v1190
          %vm1192 = vweird.f32 %v791
          %vm1193 = vweird.f32 %v1187
          %vm1194 = vmor %vm1192, %vm1193
          %v1195 = vsel %vm1194, %v1187, %v1191
          %v1196 = vand.u32 2147483647, %v791
          %vm1197 = vcmp.eq.f32.partialorder %v1196, 8.507059e+37
          %v1198 = vand.u32 %v791, 2147483648
          %v1199 = vor.u32 1.1754944e-38, %v1198
          %v1200 = vsel %vm1197, %v1199, %v1195
          %v1201 = vmul.f32 1.0, %v1200
          %v1202 = vrcp.pop %v792
          %v1203 = vmul.f32 %v792, %v1202
          %v1204 = vsub.f32 1.0, %v1203
          %v1205 = vmul.f32 %v1202, %v1204
          %v1206 = vadd.f32 %v1202, %v1205
          %vm1207 = vweird.f32 %v792
          %vm1208 = vweird.f32 %v1202
          %vm1209 = vmor %vm1207, %vm1208
          %v1210 = vsel %vm1209, %v1202, %v1206
          %v1211 = vand.u32 2147483647, %v792
          %vm1212 = vcmp.eq.f32.partialorder %v1211, 8.507059e+37
          %v1213 = vand.u32 %v792, 2147483648
          %v1214 = vor.u32 1.1754944e-38, %v1213
          %v1215 = vsel %vm1212, %v1214, %v1210
          %v1216 = vmul.f32 1.0, %v1215
          %v1217 = vrcp.pop %v793
          %v1218 = vmul.f32 %v793, %v1217
          %v1219 = vsub.f32 1.0, %v1218
          %v1220 = vmul.f32 %v1217, %v1219
          %v1221 = vadd.f32 %v1217, %v1220
          %vm1222 = vweird.f32 %v793
          %vm1223 = vweird.f32 %v1217
          %vm1224 = vmor %vm1222, %vm1223
          %v1225 = vsel %vm1224, %v1217, %v1221
          %v1226 = vand.u32 2147483647, %v793
          %vm1227 = vcmp.eq.f32.partialorder %v1226, 8.507059e+37
          %v1228 = vand.u32 %v793, 2147483648
          %v1229 = vor.u32 1.1754944e-38, %v1228
          %v1230 = vsel %vm1227, %v1229, %v1225
          %v1231 = vmul.f32 1.0, %v1230
          %v1232 = vrcp.pop %v794
          %v1233 = vmul.f32 %v794, %v1232
          %v1234 = vsub.f32 1.0, %v1233
          %v1235 = vmul.f32 %v1232, %v1234
          %v1236 = vadd.f32 %v1232, %v1235
          %vm1237 = vweird.f32 %v794
          %vm1238 = vweird.f32 %v1232
          %vm1239 = vmor %vm1237, %vm1238
          %v1240 = vsel %vm1239, %v1232, %v1236
          %v1241 = vand.u32 2147483647, %v794
          %vm1242 = vcmp.eq.f32.partialorder %v1241, 8.507059e+37
          %v1243 = vand.u32 %v794, 2147483648
          %v1244 = vor.u32 1.1754944e-38, %v1243
          %v1245 = vsel %vm1242, %v1244, %v1240
          %v1246 = vmul.f32 1.0, %v1245
          %v1247 = vrcp.pop %v795
          %v1248 = vmul.f32 %v795, %v1247
          %v1249 = vsub.f32 1.0, %v1248
          %v1250 = vmul.f32 %v1247, %v1249
          %v1251 = vadd.f32 %v1247, %v1250
          %vm1252 = vweird.f32 %v795
          %vm1253 = vweird.f32 %v1247
          %vm1254 = vmor %vm1252, %vm1253
          %v1255 = vsel %vm1254, %v1247, %v1251
          %v1256 = vand.u32 2147483647, %v795
          %vm1257 = vcmp.eq.f32.partialorder %v1256, 8.507059e+37
          %v1258 = vand.u32 %v795, 2147483648
          %v1259 = vor.u32 1.1754944e-38, %v1258
          %v1260 = vsel %vm1257, %v1259, %v1255
          %v1261 = vmul.f32 1.0, %v1260
          %v1262 = vrcp.pop %v796
          %v1263 = vmul.f32 %v796, %v1262
          %v1264 = vsub.f32 1.0, %v1263
          %v1265 = vmul.f32 %v1262, %v1264
          %v1266 = vadd.f32 %v1262, %v1265
          %vm1267 = vweird.f32 %v796
          %vm1268 = vweird.f32 %v1262
          %vm1269 = vmor %vm1267, %vm1268
          %v1270 = vsel %vm1269, %v1262, %v1266
          %v1271 = vand.u32 2147483647, %v796
          %vm1272 = vcmp.eq.f32.partialorder %v1271, 8.507059e+37
          %v1273 = vand.u32 %v796, 2147483648
          %v1274 = vor.u32 1.1754944e-38, %v1273
          %v1275 = vsel %vm1272, %v1274, %v1270
          %v1276 = vmul.f32 1.0, %v1275
          %v1277 = vmul.f32 %v811, %v473
          %v1278 = vmul.f32 %v826, %v474
          %v1279 = vmul.f32 %v841, %v475
          %v1280 = vmul.f32 %v856, %v476
          %v1281 = vmul.f32 %v871, %v477
          %v1282 = vmul.f32 %v886, %v478
          %v1283 = vmul.f32 %v901, %v479
          %v1284 = vmul.f32 %v916, %v480
          %v1285 = vmul.f32 %v931, %v481
          %v1286 = vmul.f32 %v946, %v482
          %v1287 = vmul.f32 %v961, %v483
          %v1288 = vmul.f32 %v976, %v484
          %v1289 = vmul.f32 %v991, %v485
          %v1290 = vmul.f32 %v1006, %v486
          %v1291 = vmul.f32 %v1021, %v487
          %v1292 = vmul.f32 %v1036, %v488
          %v1293 = vmul.f32 %v1051, %v489
          %v1294 = vmul.f32 %v1066, %v490
          %v1295 = vmul.f32 %v1081, %v491
          %v1296 = vmul.f32 %v1096, %v492
          %v1297 = vmul.f32 %v1111, %v493
          %v1298 = vmul.f32 %v1126, %v494
          %v1299 = vmul.f32 %v1141, %v495
          %v1300 = vmul.f32 %v1156, %v496
          %v1301 = vmul.f32 %v1171, %v497
          %v1302 = vmul.f32 %v1186, %v498
          %v1303 = vmul.f32 %v1201, %v499
          %v1304 = vmul.f32 %v1216, %v500
          %v1305 = vmul.f32 %v1231, %v501
          %v1306 = vmul.f32 %v1246, %v502
          %v1307 = vmul.f32 %v1261, %v503
          %v1308 = vmul.f32 %v1276, %v504
          %1309 = vst.msk [vmem:[%s3] sm:$0xff] %vm505, %v1277
          %1310 = vst.msk [vmem:[%s3 + $0x8] sm:$0xff] %vm505, %v1278
          %1311 = vst.msk [vmem:[%s3 + $0x10] sm:$0xff] %vm505, %v1279
          %1312 = vst.msk [vmem:[%s3 + $0x18] sm:$0xff] %vm505, %v1280
          %1313 = vst.msk [vmem:[%s3 + $0x20] sm:$0xff] %vm505, %v1281
          %1314 = vst.msk [vmem:[%s3 + $0x28] sm:$0xff] %vm505, %v1282
          %1315 = vst.msk [vmem:[%s3 + $0x30] sm:$0xff] %vm505, %v1283
          %1316 = vst.msk [vmem:[%s3 + $0x38] sm:$0xff] %vm505, %v1284
          %1317 = vst.msk [vmem:[%s3 + $0x40] sm:$0xff] %vm505, %v1285
          %1318 = vst.msk [vmem:[%s3 + $0x48] sm:$0xff] %vm505, %v1286
          %1319 = vst.msk [vmem:[%s3 + $0x50] sm:$0xff] %vm505, %v1287
          %1320 = vst.msk [vmem:[%s3 + $0x58] sm:$0xff] %vm505, %v1288
          %1321 = vst.msk [vmem:[%s3 + $0x60] sm:$0xff] %vm505, %v1289
          %1322 = vst.msk [vmem:[%s3 + $0x68] sm:$0xff] %vm505, %v1290
          %1323 = vst.msk [vmem:[%s3 + $0x70] sm:$0xff] %vm505, %v1291
          %1324 = vst.msk [vmem:[%s3 + $0x78] sm:$0xff] %vm505, %v1292
          %1325 = vst.msk [vmem:[%s3 + $0x80] sm:$0xff] %vm505, %v1293
          %1326 = vst.msk [vmem:[%s3 + $0x88] sm:$0xff] %vm505, %v1294
          %1327 = vst.msk [vmem:[%s3 + $0x90] sm:$0xff] %vm505, %v1295
          %1328 = vst.msk [vmem:[%s3 + $0x98] sm:$0xff] %vm505, %v1296
          %1329 = vst.msk [vmem:[%s3 + $0xa0] sm:$0xff] %vm505, %v1297
          %1330 = vst.msk [vmem:[%s3 + $0xa8] sm:$0xff] %vm505, %v1298
          %1331 = vst.msk [vmem:[%s3 + $0xb0] sm:$0xff] %vm505, %v1299
          %1332 = vst.msk [vmem:[%s3 + $0xb8] sm:$0xff] %vm505, %v1300
          %1333 = vst.msk [vmem:[%s3 + $0xc0] sm:$0xff] %vm505, %v1301
          %1334 = vst.msk [vmem:[%s3 + $0xc8] sm:$0xff] %vm505, %v1302
          %1335 = vst.msk [vmem:[%s3 + $0xd0] sm:$0xff] %vm505, %v1303
          %1336 = vst.msk [vmem:[%s3 + $0xd8] sm:$0xff] %vm505, %v1304
          %1337 = vst.msk [vmem:[%s3 + $0xe0] sm:$0xff] %vm505, %v1305
          %1338 = vst.msk [vmem:[%s3 + $0xe8] sm:$0xff] %vm505, %v1306
          %1339 = vst.msk [vmem:[%s3 + $0xf0] sm:$0xff] %vm505, %v1307
          %1340 = vst.msk [vmem:[%s3 + $0xf8] sm:$0xff] %vm505, %v1308
        $region40: #{tpu_custom_call.1} parent=35 // pred_fallthru
          _
      $region36: #{tpu_custom_call.1} parent=31 // pred_fallthru
        _
      %p1341 = scmp.gt.s32.totalorder %s18, 0
      %p1342 = scmp.lt.s32.totalorder %s18, 0
      %s1343 = ssub.s32 0, %s18
      %s1344 = scalar_select %p1342, %s1343, %s18
      %s1345 = sand.u32 %s1344, 1
      %s1346 = ssub.s32 0, %s1345
      %s1347 = scalar_select %p1342, %s1346, %s1345
      %p1348 = scmp.ne.s32.totalorder %s1347, 0
      %p1349 = scmp.lt.s32.totalorder %s1347, 0
      %p1350 = pnand %p1349, %p1348
      %p1351 = pneg %p1350
      %s1352 = sadd.s32 %s1347, 2
      %s1353 = scalar_select %p1351, %s1352, %s1347
      %p1354 = scmp.eq.s32.totalorder %s1353, 1
      %p1355 = pnand %p1341, %p1354
      %p1356 = pneg %p1355
      // Predicated region
      $region41: #{tpu_custom_call.1} parent=31 // pred_check
        _
      $region42: #{tpu_custom_call.1} parent=31 // pred_check_branch
        %1358 = sbr.rel (%p1355) target = $region44
      $region43: #{tpu_custom_call.1} parent=31 // pred_region
        %p1359 = scmp.eq.s32.totalorder %s19, 0
        // Predicated region
        $region45: #{tpu_custom_call.1} parent=43 // pred_check
          %p1360 = pneg %p1359
        $region46: #{tpu_custom_call.1} parent=43 // pred_check_branch
          %1362 = sbr.rel (%p1360) target = $region48
        $region47: #{tpu_custom_call.1} parent=43 // pred_region
          %v1363 = vld [vmem:[#allocation2] sm:$0xff]
          %v1364 = vld [vmem:[#allocation2 + $0x8] sm:$0xff]
          %v1365 = vld [vmem:[#allocation2 + $0x10] sm:$0xff]
          %v1366 = vld [vmem:[#allocation2 + $0x18] sm:$0xff]
          %v1367 = vld [vmem:[#allocation2 + $0x20] sm:$0xff]
          %v1368 = vld [vmem:[#allocation2 + $0x28] sm:$0xff]
          %v1369 = vld [vmem:[#allocation2 + $0x30] sm:$0xff]
          %v1370 = vld [vmem:[#allocation2 + $0x38] sm:$0xff]
          %v1371 = vld [vmem:[#allocation2 + $0x40] sm:$0xff]
          %v1372 = vld [vmem:[#allocation2 + $0x48] sm:$0xff]
          %v1373 = vld [vmem:[#allocation2 + $0x50] sm:$0xff]
          %v1374 = vld [vmem:[#allocation2 + $0x58] sm:$0xff]
          %v1375 = vld [vmem:[#allocation2 + $0x60] sm:$0xff]
          %v1376 = vld [vmem:[#allocation2 + $0x68] sm:$0xff]
          %v1377 = vld [vmem:[#allocation2 + $0x70] sm:$0xff]
          %v1378 = vld [vmem:[#allocation2 + $0x78] sm:$0xff]
          %v1379 = vld [vmem:[#allocation2 + $0x80] sm:$0xff]
          %v1380 = vld [vmem:[#allocation2 + $0x88] sm:$0xff]
          %v1381 = vld [vmem:[#allocation2 + $0x90] sm:$0xff]
          %v1382 = vld [vmem:[#allocation2 + $0x98] sm:$0xff]
          %v1383 = vld [vmem:[#allocation2 + $0xa0] sm:$0xff]
          %v1384 = vld [vmem:[#allocation2 + $0xa8] sm:$0xff]
          %v1385 = vld [vmem:[#allocation2 + $0xb0] sm:$0xff]
          %v1386 = vld [vmem:[#allocation2 + $0xb8] sm:$0xff]
          %v1387 = vld [vmem:[#allocation2 + $0xc0] sm:$0xff]
          %v1388 = vld [vmem:[#allocation2 + $0xc8] sm:$0xff]
          %v1389 = vld [vmem:[#allocation2 + $0xd0] sm:$0xff]
          %v1390 = vld [vmem:[#allocation2 + $0xd8] sm:$0xff]
          %v1391 = vld [vmem:[#allocation2 + $0xe0] sm:$0xff]
          %v1392 = vld [vmem:[#allocation2 + $0xe8] sm:$0xff]
          %v1393 = vld [vmem:[#allocation2 + $0xf0] sm:$0xff]
          %v1394 = vld [vmem:[#allocation2 + $0xf8] sm:$0xff]
          %v1395 = vld [vmem:[#allocation4] sm:$0xff]
          %v1396 = vld [vmem:[#allocation4 + $0x8] sm:$0xff]
          %v1397 = vld [vmem:[#allocation4 + $0x10] sm:$0xff]
          %v1398 = vld [vmem:[#allocation4 + $0x18] sm:$0xff]
          %v1399 = vld [vmem:[#allocation4 + $0x20] sm:$0xff]
          %v1400 = vld [vmem:[#allocation4 + $0x28] sm:$0xff]
          %v1401 = vld [vmem:[#allocation4 + $0x30] sm:$0xff]
          %v1402 = vld [vmem:[#allocation4 + $0x38] sm:$0xff]
          %v1403 = vld [vmem:[#allocation4 + $0x40] sm:$0xff]
          %v1404 = vld [vmem:[#allocation4 + $0x48] sm:$0xff]
          %v1405 = vld [vmem:[#allocation4 + $0x50] sm:$0xff]
          %v1406 = vld [vmem:[#allocation4 + $0x58] sm:$0xff]
          %v1407 = vld [vmem:[#allocation4 + $0x60] sm:$0xff]
          %v1408 = vld [vmem:[#allocation4 + $0x68] sm:$0xff]
          %v1409 = vld [vmem:[#allocation4 + $0x70] sm:$0xff]
          %v1410 = vld [vmem:[#allocation4 + $0x78] sm:$0xff]
          %v1411 = vld [vmem:[#allocation4 + $0x80] sm:$0xff]
          %v1412 = vld [vmem:[#allocation4 + $0x88] sm:$0xff]
          %v1413 = vld [vmem:[#allocation4 + $0x90] sm:$0xff]
          %v1414 = vld [vmem:[#allocation4 + $0x98] sm:$0xff]
          %v1415 = vld [vmem:[#allocation4 + $0xa0] sm:$0xff]
          %v1416 = vld [vmem:[#allocation4 + $0xa8] sm:$0xff]
          %v1417 = vld [vmem:[#allocation4 + $0xb0] sm:$0xff]
          %v1418 = vld [vmem:[#allocation4 + $0xb8] sm:$0xff]
          %v1419 = vld [vmem:[#allocation4 + $0xc0] sm:$0xff]
          %v1420 = vld [vmem:[#allocation4 + $0xc8] sm:$0xff]
          %v1421 = vld [vmem:[#allocation4 + $0xd0] sm:$0xff]
          %v1422 = vld [vmem:[#allocation4 + $0xd8] sm:$0xff]
          %v1423 = vld [vmem:[#allocation4 + $0xe0] sm:$0xff]
          %v1424 = vld [vmem:[#allocation4 + $0xe8] sm:$0xff]
          %v1425 = vld [vmem:[#allocation4 + $0xf0] sm:$0xff]
          %v1426 = vld [vmem:[#allocation4 + $0xf8] sm:$0xff]
          %1428 = vset.pattern.permute.xlu0 0
          %1429 = vperm.xlu0 %1428, %v1395
          %v1430 = vpop.permute.xlu0 %1429
          %1433 = vset.pattern.permute.xlu0 0
          %1434 = vperm.xlu0 %1433, %v1396
          %v1435 = vpop.permute.xlu0 %1434
          %1438 = vset.pattern.permute.xlu0 0
          %1439 = vperm.xlu0 %1438, %v1397
          %v1440 = vpop.permute.xlu0 %1439
          %1443 = vset.pattern.permute.xlu0 0
          %1444 = vperm.xlu0 %1443, %v1398
          %v1445 = vpop.permute.xlu0 %1444
          %1448 = vset.pattern.permute.xlu0 0
          %1449 = vperm.xlu0 %1448, %v1399
          %v1450 = vpop.permute.xlu0 %1449
          %1453 = vset.pattern.permute.xlu0 0
          %1454 = vperm.xlu0 %1453, %v1400
          %v1455 = vpop.permute.xlu0 %1454
          %1458 = vset.pattern.permute.xlu0 0
          %1459 = vperm.xlu0 %1458, %v1401
          %v1460 = vpop.permute.xlu0 %1459
          %1463 = vset.pattern.permute.xlu0 0
          %1464 = vperm.xlu0 %1463, %v1402
          %v1465 = vpop.permute.xlu0 %1464
          %1468 = vset.pattern.permute.xlu0 0
          %1469 = vperm.xlu0 %1468, %v1403
          %v1470 = vpop.permute.xlu0 %1469
          %1473 = vset.pattern.permute.xlu0 0
          %1474 = vperm.xlu0 %1473, %v1404
          %v1475 = vpop.permute.xlu0 %1474
          %1478 = vset.pattern.permute.xlu0 0
          %1479 = vperm.xlu0 %1478, %v1405
          %v1480 = vpop.permute.xlu0 %1479
          %1483 = vset.pattern.permute.xlu0 0
          %1484 = vperm.xlu0 %1483, %v1406
          %v1485 = vpop.permute.xlu0 %1484
          %1488 = vset.pattern.permute.xlu0 0
          %1489 = vperm.xlu0 %1488, %v1407
          %v1490 = vpop.permute.xlu0 %1489
          %1493 = vset.pattern.permute.xlu0 0
          %1494 = vperm.xlu0 %1493, %v1408
          %v1495 = vpop.permute.xlu0 %1494
          %1498 = vset.pattern.permute.xlu0 0
          %1499 = vperm.xlu0 %1498, %v1409
          %v1500 = vpop.permute.xlu0 %1499
          %1503 = vset.pattern.permute.xlu0 0
          %1504 = vperm.xlu0 %1503, %v1410
          %v1505 = vpop.permute.xlu0 %1504
          %1508 = vset.pattern.permute.xlu0 0
          %1509 = vperm.xlu0 %1508, %v1411
          %v1510 = vpop.permute.xlu0 %1509
          %1513 = vset.pattern.permute.xlu0 0
          %1514 = vperm.xlu0 %1513, %v1412
          %v1515 = vpop.permute.xlu0 %1514
          %1518 = vset.pattern.permute.xlu0 0
          %1519 = vperm.xlu0 %1518, %v1413
          %v1520 = vpop.permute.xlu0 %1519
          %1523 = vset.pattern.permute.xlu0 0
          %1524 = vperm.xlu0 %1523, %v1414
          %v1525 = vpop.permute.xlu0 %1524
          %1528 = vset.pattern.permute.xlu0 0
          %1529 = vperm.xlu0 %1528, %v1415
          %v1530 = vpop.permute.xlu0 %1529
          %1533 = vset.pattern.permute.xlu0 0
          %1534 = vperm.xlu0 %1533, %v1416
          %v1535 = vpop.permute.xlu0 %1534
          %1538 = vset.pattern.permute.xlu0 0
          %1539 = vperm.xlu0 %1538, %v1417
          %v1540 = vpop.permute.xlu0 %1539
          %1543 = vset.pattern.permute.xlu0 0
          %1544 = vperm.xlu0 %1543, %v1418
          %v1545 = vpop.permute.xlu0 %1544
          %1548 = vset.pattern.permute.xlu0 0
          %1549 = vperm.xlu0 %1548, %v1419
          %v1550 = vpop.permute.xlu0 %1549
          %1553 = vset.pattern.permute.xlu0 0
          %1554 = vperm.xlu0 %1553, %v1420
          %v1555 = vpop.permute.xlu0 %1554
          %1558 = vset.pattern.permute.xlu0 0
          %1559 = vperm.xlu0 %1558, %v1421
          %v1560 = vpop.permute.xlu0 %1559
          %1563 = vset.pattern.permute.xlu0 0
          %1564 = vperm.xlu0 %1563, %v1422
          %v1565 = vpop.permute.xlu0 %1564
          %1568 = vset.pattern.permute.xlu0 0
          %1569 = vperm.xlu0 %1568, %v1423
          %v1570 = vpop.permute.xlu0 %1569
          %1573 = vset.pattern.permute.xlu0 0
          %1574 = vperm.xlu0 %1573, %v1424
          %v1575 = vpop.permute.xlu0 %1574
          %1578 = vset.pattern.permute.xlu0 0
          %1579 = vperm.xlu0 %1578, %v1425
          %v1580 = vpop.permute.xlu0 %1579
          %1583 = vset.pattern.permute.xlu0 0
          %1584 = vperm.xlu0 %1583, %v1426
          %v1585 = vpop.permute.xlu0 %1584
          %v1587 = vmul.f32 %v1363, %v1430
          %v1588 = vmul.f32 %v1364, %v1435
          %v1589 = vmul.f32 %v1365, %v1440
          %v1590 = vmul.f32 %v1366, %v1445
          %v1591 = vmul.f32 %v1367, %v1450
          %v1592 = vmul.f32 %v1368, %v1455
          %v1593 = vmul.f32 %v1369, %v1460
          %v1594 = vmul.f32 %v1370, %v1465
          %v1595 = vmul.f32 %v1371, %v1470
          %v1596 = vmul.f32 %v1372, %v1475
          %v1597 = vmul.f32 %v1373, %v1480
          %v1598 = vmul.f32 %v1374, %v1485
          %v1599 = vmul.f32 %v1375, %v1490
          %v1600 = vmul.f32 %v1376, %v1495
          %v1601 = vmul.f32 %v1377, %v1500
          %v1602 = vmul.f32 %v1378, %v1505
          %v1603 = vmul.f32 %v1379, %v1510
          %v1604 = vmul.f32 %v1380, %v1515
          %v1605 = vmul.f32 %v1381, %v1520
          %v1606 = vmul.f32 %v1382, %v1525
          %v1607 = vmul.f32 %v1383, %v1530
          %v1608 = vmul.f32 %v1384, %v1535
          %v1609 = vmul.f32 %v1385, %v1540
          %v1610 = vmul.f32 %v1386, %v1545
          %v1611 = vmul.f32 %v1387, %v1550
          %v1612 = vmul.f32 %v1388, %v1555
          %v1613 = vmul.f32 %v1389, %v1560
          %v1614 = vmul.f32 %v1390, %v1565
          %v1615 = vmul.f32 %v1391, %v1570
          %v1616 = vmul.f32 %v1392, %v1575
          %v1617 = vmul.f32 %v1393, %v1580
          %v1618 = vmul.f32 %v1394, %v1585
          %vm1619 = vcmask 64512
          %1620 = vst.msk [vmem:[#allocation2] sm:$0xff] %vm1619, %v1587
          %1621 = vst.msk [vmem:[#allocation2 + $0x8] sm:$0xff] %vm1619, %v1588
          %1622 = vst.msk [vmem:[#allocation2 + $0x10] sm:$0xff] %vm1619, %v1589
          %1623 = vst.msk [vmem:[#allocation2 + $0x18] sm:$0xff] %vm1619, %v1590
          %1624 = vst.msk [vmem:[#allocation2 + $0x20] sm:$0xff] %vm1619, %v1591
          %1625 = vst.msk [vmem:[#allocation2 + $0x28] sm:$0xff] %vm1619, %v1592
          %1626 = vst.msk [vmem:[#allocation2 + $0x30] sm:$0xff] %vm1619, %v1593
          %1627 = vst.msk [vmem:[#allocation2 + $0x38] sm:$0xff] %vm1619, %v1594
          %1628 = vst.msk [vmem:[#allocation2 + $0x40] sm:$0xff] %vm1619, %v1595
          %1629 = vst.msk [vmem:[#allocation2 + $0x48] sm:$0xff] %vm1619, %v1596
          %1630 = vst.msk [vmem:[#allocation2 + $0x50] sm:$0xff] %vm1619, %v1597
          %1631 = vst.msk [vmem:[#allocation2 + $0x58] sm:$0xff] %vm1619, %v1598
          %1632 = vst.msk [vmem:[#allocation2 + $0x60] sm:$0xff] %vm1619, %v1599
          %1633 = vst.msk [vmem:[#allocation2 + $0x68] sm:$0xff] %vm1619, %v1600
          %1634 = vst.msk [vmem:[#allocation2 + $0x70] sm:$0xff] %vm1619, %v1601
          %1635 = vst.msk [vmem:[#allocation2 + $0x78] sm:$0xff] %vm1619, %v1602
          %1636 = vst.msk [vmem:[#allocation2 + $0x80] sm:$0xff] %vm1619, %v1603
          %1637 = vst.msk [vmem:[#allocation2 + $0x88] sm:$0xff] %vm1619, %v1604
          %1638 = vst.msk [vmem:[#allocation2 + $0x90] sm:$0xff] %vm1619, %v1605
          %1639 = vst.msk [vmem:[#allocation2 + $0x98] sm:$0xff] %vm1619, %v1606
          %1640 = vst.msk [vmem:[#allocation2 + $0xa0] sm:$0xff] %vm1619, %v1607
          %1641 = vst.msk [vmem:[#allocation2 + $0xa8] sm:$0xff] %vm1619, %v1608
          %1642 = vst.msk [vmem:[#allocation2 + $0xb0] sm:$0xff] %vm1619, %v1609
          %1643 = vst.msk [vmem:[#allocation2 + $0xb8] sm:$0xff] %vm1619, %v1610
          %1644 = vst.msk [vmem:[#allocation2 + $0xc0] sm:$0xff] %vm1619, %v1611
          %1645 = vst.msk [vmem:[#allocation2 + $0xc8] sm:$0xff] %vm1619, %v1612
          %1646 = vst.msk [vmem:[#allocation2 + $0xd0] sm:$0xff] %vm1619, %v1613
          %1647 = vst.msk [vmem:[#allocation2 + $0xd8] sm:$0xff] %vm1619, %v1614
          %1648 = vst.msk [vmem:[#allocation2 + $0xe0] sm:$0xff] %vm1619, %v1615
          %1649 = vst.msk [vmem:[#allocation2 + $0xe8] sm:$0xff] %vm1619, %v1616
          %1650 = vst.msk [vmem:[#allocation2 + $0xf0] sm:$0xff] %vm1619, %v1617
          %1651 = vst.msk [vmem:[#allocation2 + $0xf8] sm:$0xff] %vm1619, %v1618
        $region48: #{tpu_custom_call.1} parent=43 // pred_fallthru
          _
        %v1652 = vld [vmem:[%s171] sm:$0xff]
        %v1653 = vld [vmem:[%s171 + $0x8] sm:$0xff]
        %v1654 = vld [vmem:[%s171 + $0x10] sm:$0xff]
        %v1655 = vld [vmem:[%s171 + $0x18] sm:$0xff]
        %v1656 = vld [vmem:[%s171 + $0x20] sm:$0xff]
        %v1657 = vld [vmem:[%s171 + $0x28] sm:$0xff]
        %v1658 = vld [vmem:[%s171 + $0x30] sm:$0xff]
        %v1659 = vld [vmem:[%s171 + $0x38] sm:$0xff]
        %v1660 = vld [vmem:[%s171 + $0x40] sm:$0xff]
        %v1661 = vld [vmem:[%s171 + $0x48] sm:$0xff]
        %v1662 = vld [vmem:[%s171 + $0x50] sm:$0xff]
        %v1663 = vld [vmem:[%s171 + $0x58] sm:$0xff]
        %v1664 = vld [vmem:[%s171 + $0x60] sm:$0xff]
        %v1665 = vld [vmem:[%s171 + $0x68] sm:$0xff]
        %v1666 = vld [vmem:[%s171 + $0x70] sm:$0xff]
        %v1667 = vld [vmem:[%s171 + $0x78] sm:$0xff]
        %v1668 = vunpack.c.l.bf16 %v1652
        %v1669 = vunpack.c.h.bf16 %v1652
        %v1670 = vunpack.c.l.bf16 %v1653
        %v1671 = vunpack.c.h.bf16 %v1653
        %v1672 = vunpack.c.l.bf16 %v1654
        %v1673 = vunpack.c.h.bf16 %v1654
        %v1674 = vunpack.c.l.bf16 %v1655
        %v1675 = vunpack.c.h.bf16 %v1655
        %v1676 = vunpack.c.l.bf16 %v1656
        %v1677 = vunpack.c.h.bf16 %v1656
        %v1678 = vunpack.c.l.bf16 %v1657
        %v1679 = vunpack.c.h.bf16 %v1657
        %v1680 = vunpack.c.l.bf16 %v1658
        %v1681 = vunpack.c.h.bf16 %v1658
        %v1682 = vunpack.c.l.bf16 %v1659
        %v1683 = vunpack.c.h.bf16 %v1659
        %v1684 = vunpack.c.l.bf16 %v1660
        %v1685 = vunpack.c.h.bf16 %v1660
        %v1686 = vunpack.c.l.bf16 %v1661
        %v1687 = vunpack.c.h.bf16 %v1661
        %v1688 = vunpack.c.l.bf16 %v1662
        %v1689 = vunpack.c.h.bf16 %v1662
        %v1690 = vunpack.c.l.bf16 %v1663
        %v1691 = vunpack.c.h.bf16 %v1663
        %v1692 = vunpack.c.l.bf16 %v1664
        %v1693 = vunpack.c.h.bf16 %v1664
        %v1694 = vunpack.c.l.bf16 %v1665
        %v1695 = vunpack.c.h.bf16 %v1665
        %v1696 = vunpack.c.l.bf16 %v1666
        %v1697 = vunpack.c.h.bf16 %v1666
        %v1698 = vunpack.c.l.bf16 %v1667
        %v1699 = vunpack.c.h.bf16 %v1667
        %v1700 = vld [vmem:[#allocation2] sm:$0xff]
        %v1701 = vld [vmem:[#allocation2 + $0x8] sm:$0xff]
        %v1702 = vld [vmem:[#allocation2 + $0x10] sm:$0xff]
        %v1703 = vld [vmem:[#allocation2 + $0x18] sm:$0xff]
        %v1704 = vld [vmem:[#allocation2 + $0x20] sm:$0xff]
        %v1705 = vld [vmem:[#allocation2 + $0x28] sm:$0xff]
        %v1706 = vld [vmem:[#allocation2 + $0x30] sm:$0xff]
        %v1707 = vld [vmem:[#allocation2 + $0x38] sm:$0xff]
        %v1708 = vld [vmem:[#allocation2 + $0x40] sm:$0xff]
        %v1709 = vld [vmem:[#allocation2 + $0x48] sm:$0xff]
        %v1710 = vld [vmem:[#allocation2 + $0x50] sm:$0xff]
        %v1711 = vld [vmem:[#allocation2 + $0x58] sm:$0xff]
        %v1712 = vld [vmem:[#allocation2 + $0x60] sm:$0xff]
        %v1713 = vld [vmem:[#allocation2 + $0x68] sm:$0xff]
        %v1714 = vld [vmem:[#allocation2 + $0x70] sm:$0xff]
        %v1715 = vld [vmem:[#allocation2 + $0x78] sm:$0xff]
        %v1716 = vld [vmem:[#allocation2 + $0x80] sm:$0xff]
        %v1717 = vld [vmem:[#allocation2 + $0x88] sm:$0xff]
        %v1718 = vld [vmem:[#allocation2 + $0x90] sm:$0xff]
        %v1719 = vld [vmem:[#allocation2 + $0x98] sm:$0xff]
        %v1720 = vld [vmem:[#allocation2 + $0xa0] sm:$0xff]
        %v1721 = vld [vmem:[#allocation2 + $0xa8] sm:$0xff]
        %v1722 = vld [vmem:[#allocation2 + $0xb0] sm:$0xff]
        %v1723 = vld [vmem:[#allocation2 + $0xb8] sm:$0xff]
        %v1724 = vld [vmem:[#allocation2 + $0xc0] sm:$0xff]
        %v1725 = vld [vmem:[#allocation2 + $0xc8] sm:$0xff]
        %v1726 = vld [vmem:[#allocation2 + $0xd0] sm:$0xff]
        %v1727 = vld [vmem:[#allocation2 + $0xd8] sm:$0xff]
        %v1728 = vld [vmem:[#allocation2 + $0xe0] sm:$0xff]
        %v1729 = vld [vmem:[#allocation2 + $0xe8] sm:$0xff]
        %v1730 = vld [vmem:[#allocation2 + $0xf0] sm:$0xff]
        %v1731 = vld [vmem:[#allocation2 + $0xf8] sm:$0xff]
        %1732 = vmatpush.msra.mxu0 %v1715
        %1733 = vmatpush.msra.mxu0 %v1714
        %1734 = vmatpush.msra.mxu0 %v1713
        %1735 = vmatpush.msra.mxu0 %v1712
        %1736 = vmatpush.msra.mxu0 %v1711
        %1737 = vmatpush.msra.mxu0 %v1710
        %1738 = vmatpush.msra.mxu0 %v1709
        %1739 = vmatpush.msra.mxu0 %v1708
        %1740 = vmatpush.msra.mxu0 %v1707
        %1741 = vmatpush.msra.mxu0 %v1706
        %1742 = vmatpush.msra.mxu0 %v1705
        %1743 = vmatpush.msra.mxu0 %v1704
        %1744 = vmatpush.msra.mxu0 %v1703
        %1745 = vmatpush.msra.mxu0 %v1702
        %1746 = vmatpush.msra.mxu0 %v1701
        %1747 = vmatpush.msra.mxu0 %v1700
        %1748 = vmatmul.f32.gmra.mxu0 %v1668
        %v1749 = vpop.f32.mrf.mxu0
        %v1750 = vadd.f32 0.0, %v1749
        %1751 = vmatmul.f32.gmra.mxu0 %v1670
        %v1752 = vpop.f32.mrf.mxu0
        %v1753 = vadd.f32 0.0, %v1752
        %1754 = vmatmul.f32.gmra.mxu0 %v1672
        %v1755 = vpop.f32.mrf.mxu0
        %v1756 = vadd.f32 0.0, %v1755
        %1757 = vmatmul.f32.gmra.mxu0 %v1674
        %v1758 = vpop.f32.mrf.mxu0
        %v1759 = vadd.f32 0.0, %v1758
        %1760 = vmatmul.f32.gmra.mxu0 %v1676
        %v1761 = vpop.f32.mrf.mxu0
        %v1762 = vadd.f32 0.0, %v1761
        %1763 = vmatmul.f32.gmra.mxu0 %v1678
        %v1764 = vpop.f32.mrf.mxu0
        %v1765 = vadd.f32 0.0, %v1764
        %1766 = vmatmul.f32.gmra.mxu0 %v1680
        %v1767 = vpop.f32.mrf.mxu0
        %v1768 = vadd.f32 0.0, %v1767
        %1769 = vmatmul.f32.gmra.mxu0 %v1682
        %v1770 = vpop.f32.mrf.mxu0
        %v1771 = vadd.f32 0.0, %v1770
        %1772 = vmatmul.f32.gmra.mxu0 %v1684
        %v1773 = vpop.f32.mrf.mxu0
        %v1774 = vadd.f32 0.0, %v1773
        %1775 = vmatmul.f32.gmra.mxu0 %v1686
        %v1776 = vpop.f32.mrf.mxu0
        %v1777 = vadd.f32 0.0, %v1776
        %1778 = vmatmul.f32.gmra.mxu0 %v1688
        %v1779 = vpop.f32.mrf.mxu0
        %v1780 = vadd.f32 0.0, %v1779
        %1781 = vmatmul.f32.gmra.mxu0 %v1690
        %v1782 = vpop.f32.mrf.mxu0
        %v1783 = vadd.f32 0.0, %v1782
        %1784 = vmatmul.f32.gmra.mxu0 %v1692
        %v1785 = vpop.f32.mrf.mxu0
        %v1786 = vadd.f32 0.0, %v1785
        %1787 = vmatmul.f32.gmra.mxu0 %v1694
        %v1788 = vpop.f32.mrf.mxu0
        %v1789 = vadd.f32 0.0, %v1788
        %1790 = vmatmul.f32.gmra.mxu0 %v1696
        %v1791 = vpop.f32.mrf.mxu0
        %v1792 = vadd.f32 0.0, %v1791
        %1793 = vmatmul.f32.gmra.mxu0 %v1698
        %v1794 = vpop.f32.mrf.mxu0
        %v1795 = vadd.f32 0.0, %v1794
        %1796 = vdwg.mxu0
        %1797 = vmatpush.msra.mxu0 %v1731
        %1798 = vmatpush.msra.mxu0 %v1730
        %1799 = vmatpush.msra.mxu0 %v1729
        %1800 = vmatpush.msra.mxu0 %v1728
        %1801 = vmatpush.msra.mxu0 %v1727
        %1802 = vmatpush.msra.mxu0 %v1726
        %1803 = vmatpush.msra.mxu0 %v1725
        %1804 = vmatpush.msra.mxu0 %v1724
        %1805 = vmatpush.msra.mxu0 %v1723
        %1806 = vmatpush.msra.mxu0 %v1722
        %1807 = vmatpush.msra.mxu0 %v1721
        %1808 = vmatpush.msra.mxu0 %v1720
        %1809 = vmatpush.msra.mxu0 %v1719
        %1810 = vmatpush.msra.mxu0 %v1718
        %1811 = vmatpush.msra.mxu0 %v1717
        %1812 = vmatpush.msra.mxu0 %v1716
        %1813 = vmatmul.f32.gmra.mxu0 %v1669
        %v1814 = vpop.f32.mrf.mxu0
        %v1815 = vadd.f32 %v1750, %v1814
        %1816 = vmatmul.f32.gmra.mxu0 %v1671
        %v1817 = vpop.f32.mrf.mxu0
        %v1818 = vadd.f32 %v1753, %v1817
        %1819 = vmatmul.f32.gmra.mxu0 %v1673
        %v1820 = vpop.f32.mrf.mxu0
        %v1821 = vadd.f32 %v1756, %v1820
        %1822 = vmatmul.f32.gmra.mxu0 %v1675
        %v1823 = vpop.f32.mrf.mxu0
        %v1824 = vadd.f32 %v1759, %v1823
        %1825 = vmatmul.f32.gmra.mxu0 %v1677
        %v1826 = vpop.f32.mrf.mxu0
        %v1827 = vadd.f32 %v1762, %v1826
        %1828 = vmatmul.f32.gmra.mxu0 %v1679
        %v1829 = vpop.f32.mrf.mxu0
        %v1830 = vadd.f32 %v1765, %v1829
        %1831 = vmatmul.f32.gmra.mxu0 %v1681
        %v1832 = vpop.f32.mrf.mxu0
        %v1833 = vadd.f32 %v1768, %v1832
        %1834 = vmatmul.f32.gmra.mxu0 %v1683
        %v1835 = vpop.f32.mrf.mxu0
        %v1836 = vadd.f32 %v1771, %v1835
        %1837 = vmatmul.f32.gmra.mxu0 %v1685
        %v1838 = vpop.f32.mrf.mxu0
        %v1839 = vadd.f32 %v1774, %v1838
        %1840 = vmatmul.f32.gmra.mxu0 %v1687
        %v1841 = vpop.f32.mrf.mxu0
        %v1842 = vadd.f32 %v1777, %v1841
        %1843 = vmatmul.f32.gmra.mxu0 %v1689
        %v1844 = vpop.f32.mrf.mxu0
        %v1845 = vadd.f32 %v1780, %v1844
        %1846 = vmatmul.f32.gmra.mxu0 %v1691
        %v1847 = vpop.f32.mrf.mxu0
        %v1848 = vadd.f32 %v1783, %v1847
        %1849 = vmatmul.f32.gmra.mxu0 %v1693
        %v1850 = vpop.f32.mrf.mxu0
        %v1851 = vadd.f32 %v1786, %v1850
        %1852 = vmatmul.f32.gmra.mxu0 %v1695
        %v1853 = vpop.f32.mrf.mxu0
        %v1854 = vadd.f32 %v1789, %v1853
        %1855 = vmatmul.f32.gmra.mxu0 %v1697
        %v1856 = vpop.f32.mrf.mxu0
        %v1857 = vadd.f32 %v1792, %v1856
        %1858 = vmatmul.f32.gmra.mxu0 %v1699
        %v1859 = vpop.f32.mrf.mxu0
        %v1860 = vadd.f32 %v1795, %v1859
        %1861 = vdwg.mxu0
        %s1862 = scalar_lea.vmem [#allocation4], %s173
        %v1863 = vld [vmem:[%s1862] sm:$0xff]
        %v1864 = vld [vmem:[%s1862 + $0x8] sm:$0xff]
        %v1865 = vld [vmem:[%s1862 + $0x10] sm:$0xff]
        %v1866 = vld [vmem:[%s1862 + $0x18] sm:$0xff]
        %v1867 = vld [vmem:[%s1862 + $0x20] sm:$0xff]
        %v1868 = vld [vmem:[%s1862 + $0x28] sm:$0xff]
        %v1869 = vld [vmem:[%s1862 + $0x30] sm:$0xff]
        %v1870 = vld [vmem:[%s1862 + $0x38] sm:$0xff]
        %v1871 = vld [vmem:[%s1862 + $0x40] sm:$0xff]
        %v1872 = vld [vmem:[%s1862 + $0x48] sm:$0xff]
        %v1873 = vld [vmem:[%s1862 + $0x50] sm:$0xff]
        %v1874 = vld [vmem:[%s1862 + $0x58] sm:$0xff]
        %v1875 = vld [vmem:[%s1862 + $0x60] sm:$0xff]
        %v1876 = vld [vmem:[%s1862 + $0x68] sm:$0xff]
        %v1877 = vld [vmem:[%s1862 + $0x70] sm:$0xff]
        %v1878 = vld [vmem:[%s1862 + $0x78] sm:$0xff]
        %1880 = vset.pattern.permute.xlu0 0
        %1881 = vperm.xlu0 %1880, %v1863
        %v1882 = vpop.permute.xlu0 %1881
        %1885 = vset.pattern.permute.xlu0 0
        %1886 = vperm.xlu0 %1885, %v1864
        %v1887 = vpop.permute.xlu0 %1886
        %1890 = vset.pattern.permute.xlu0 0
        %1891 = vperm.xlu0 %1890, %v1865
        %v1892 = vpop.permute.xlu0 %1891
        %1895 = vset.pattern.permute.xlu0 0
        %1896 = vperm.xlu0 %1895, %v1866
        %v1897 = vpop.permute.xlu0 %1896
        %1900 = vset.pattern.permute.xlu0 0
        %1901 = vperm.xlu0 %1900, %v1867
        %v1902 = vpop.permute.xlu0 %1901
        %1905 = vset.pattern.permute.xlu0 0
        %1906 = vperm.xlu0 %1905, %v1868
        %v1907 = vpop.permute.xlu0 %1906
        %1910 = vset.pattern.permute.xlu0 0
        %1911 = vperm.xlu0 %1910, %v1869
        %v1912 = vpop.permute.xlu0 %1911
        %1915 = vset.pattern.permute.xlu0 0
        %1916 = vperm.xlu0 %1915, %v1870
        %v1917 = vpop.permute.xlu0 %1916
        %1920 = vset.pattern.permute.xlu0 0
        %1921 = vperm.xlu0 %1920, %v1871
        %v1922 = vpop.permute.xlu0 %1921
        %1925 = vset.pattern.permute.xlu0 0
        %1926 = vperm.xlu0 %1925, %v1872
        %v1927 = vpop.permute.xlu0 %1926
        %1930 = vset.pattern.permute.xlu0 0
        %1931 = vperm.xlu0 %1930, %v1873
        %v1932 = vpop.permute.xlu0 %1931
        %1935 = vset.pattern.permute.xlu0 0
        %1936 = vperm.xlu0 %1935, %v1874
        %v1937 = vpop.permute.xlu0 %1936
        %1940 = vset.pattern.permute.xlu0 0
        %1941 = vperm.xlu0 %1940, %v1875
        %v1942 = vpop.permute.xlu0 %1941
        %1945 = vset.pattern.permute.xlu0 0
        %1946 = vperm.xlu0 %1945, %v1876
        %v1947 = vpop.permute.xlu0 %1946
        %1950 = vset.pattern.permute.xlu0 0
        %1951 = vperm.xlu0 %1950, %v1877
        %v1952 = vpop.permute.xlu0 %1951
        %1955 = vset.pattern.permute.xlu0 0
        %1956 = vperm.xlu0 %1955, %v1878
        %v1957 = vpop.permute.xlu0 %1956
        %v1959 = vmul.f32 %v1815, %v1882
        %v1960 = vmul.f32 %v1818, %v1887
        %v1961 = vmul.f32 %v1821, %v1892
        %v1962 = vmul.f32 %v1824, %v1897
        %v1963 = vmul.f32 %v1827, %v1902
        %v1964 = vmul.f32 %v1830, %v1907
        %v1965 = vmul.f32 %v1833, %v1912
        %v1966 = vmul.f32 %v1836, %v1917
        %v1967 = vmul.f32 %v1839, %v1922
        %v1968 = vmul.f32 %v1842, %v1927
        %v1969 = vmul.f32 %v1845, %v1932
        %v1970 = vmul.f32 %v1848, %v1937
        %v1971 = vmul.f32 %v1851, %v1942
        %v1972 = vmul.f32 %v1854, %v1947
        %v1973 = vmul.f32 %v1857, %v1952
        %v1974 = vmul.f32 %v1860, %v1957
        %s1975 = scalar_lea.vmem [#allocation3], %s173
        %vm1976 = vcmask 64512
        %1977 = vst.msk [vmem:[%s1975] sm:$0xff] %vm1976, %v1959
        %1978 = vst.msk [vmem:[%s1975 + $0x8] sm:$0xff] %vm1976, %v1960
        %1979 = vst.msk [vmem:[%s1975 + $0x10] sm:$0xff] %vm1976, %v1961
        %1980 = vst.msk [vmem:[%s1975 + $0x18] sm:$0xff] %vm1976, %v1962
        %1981 = vst.msk [vmem:[%s1975 + $0x20] sm:$0xff] %vm1976, %v1963
        %1982 = vst.msk [vmem:[%s1975 + $0x28] sm:$0xff] %vm1976, %v1964
        %1983 = vst.msk [vmem:[%s1975 + $0x30] sm:$0xff] %vm1976, %v1965
        %1984 = vst.msk [vmem:[%s1975 + $0x38] sm:$0xff] %vm1976, %v1966
        %1985 = vst.msk [vmem:[%s1975 + $0x40] sm:$0xff] %vm1976, %v1967
        %1986 = vst.msk [vmem:[%s1975 + $0x48] sm:$0xff] %vm1976, %v1968
        %1987 = vst.msk [vmem:[%s1975 + $0x50] sm:$0xff] %vm1976, %v1969
        %1988 = vst.msk [vmem:[%s1975 + $0x58] sm:$0xff] %vm1976, %v1970
        %1989 = vst.msk [vmem:[%s1975 + $0x60] sm:$0xff] %vm1976, %v1971
        %1990 = vst.msk [vmem:[%s1975 + $0x68] sm:$0xff] %vm1976, %v1972
        %1991 = vst.msk [vmem:[%s1975 + $0x70] sm:$0xff] %vm1976, %v1973
        %1992 = vst.msk [vmem:[%s1975 + $0x78] sm:$0xff] %vm1976, %v1974
        %s1993 = scalar_lea.vmem %s3, %s173
        %v1994 = vld [vmem:[%s1993] sm:$0xff]
        %v1995 = vld [vmem:[%s1993 + $0x8] sm:$0xff]
        %v1996 = vld [vmem:[%s1993 + $0x10] sm:$0xff]
        %v1997 = vld [vmem:[%s1993 + $0x18] sm:$0xff]
        %v1998 = vld [vmem:[%s1993 + $0x20] sm:$0xff]
        %v1999 = vld [vmem:[%s1993 + $0x28] sm:$0xff]
        %v2000 = vld [vmem:[%s1993 + $0x30] sm:$0xff]
        %v2001 = vld [vmem:[%s1993 + $0x38] sm:$0xff]
        %v2002 = vld [vmem:[%s1993 + $0x40] sm:$0xff]
        %v2003 = vld [vmem:[%s1993 + $0x48] sm:$0xff]
        %v2004 = vld [vmem:[%s1993 + $0x50] sm:$0xff]
        %v2005 = vld [vmem:[%s1993 + $0x58] sm:$0xff]
        %v2006 = vld [vmem:[%s1993 + $0x60] sm:$0xff]
        %v2007 = vld [vmem:[%s1993 + $0x68] sm:$0xff]
        %v2008 = vld [vmem:[%s1993 + $0x70] sm:$0xff]
        %v2009 = vld [vmem:[%s1993 + $0x78] sm:$0xff]
        %v2011 = vperm.slane %v174, 0
        %v2013 = vmul.f32 %v1959, %v2011
        %v2014 = vmul.f32 %v1960, %v2011
        %v2015 = vmul.f32 %v1961, %v2011
        %v2016 = vmul.f32 %v1962, %v2011
        %v2017 = vmul.f32 %v1963, %v2011
        %v2018 = vmul.f32 %v1964, %v2011
        %v2019 = vmul.f32 %v1965, %v2011
        %v2020 = vmul.f32 %v1966, %v2011
        %v2021 = vmul.f32 %v1967, %v2011
        %v2022 = vmul.f32 %v1968, %v2011
        %v2023 = vmul.f32 %v1969, %v2011
        %v2024 = vmul.f32 %v1970, %v2011
        %v2025 = vmul.f32 %v1971, %v2011
        %v2026 = vmul.f32 %v1972, %v2011
        %v2027 = vmul.f32 %v1973, %v2011
        %v2028 = vmul.f32 %v1974, %v2011
        %v2029 = vsel %vm1976, %v2013, 0.0
        %2030 = vadd.xlane.f32.xlu0 %v2029
        %v2031 = vpop.xlane.xlu0 %2030
        %v2032 = vsel %vm1976, %v2014, 0.0
        %2033 = vadd.xlane.f32.xlu0 %v2032
        %v2034 = vpop.xlane.xlu0 %2033
        %v2035 = vsel %vm1976, %v2015, 0.0
        %2036 = vadd.xlane.f32.xlu0 %v2035
        %v2037 = vpop.xlane.xlu0 %2036
        %v2038 = vsel %vm1976, %v2016, 0.0
        %2039 = vadd.xlane.f32.xlu0 %v2038
        %v2040 = vpop.xlane.xlu0 %2039
        %v2041 = vsel %vm1976, %v2017, 0.0
        %2042 = vadd.xlane.f32.xlu0 %v2041
        %v2043 = vpop.xlane.xlu0 %2042
        %v2044 = vsel %vm1976, %v2018, 0.0
        %2045 = vadd.xlane.f32.xlu0 %v2044
        %v2046 = vpop.xlane.xlu0 %2045
        %v2047 = vsel %vm1976, %v2019, 0.0
        %2048 = vadd.xlane.f32.xlu0 %v2047
        %v2049 = vpop.xlane.xlu0 %2048
        %v2050 = vsel %vm1976, %v2020, 0.0
        %2051 = vadd.xlane.f32.xlu0 %v2050
        %v2052 = vpop.xlane.xlu0 %2051
        %v2053 = vsel %vm1976, %v2021, 0.0
        %2054 = vadd.xlane.f32.xlu0 %v2053
        %v2055 = vpop.xlane.xlu0 %2054
        %v2056 = vsel %vm1976, %v2022, 0.0
        %2057 = vadd.xlane.f32.xlu0 %v2056
        %v2058 = vpop.xlane.xlu0 %2057
        %v2059 = vsel %vm1976, %v2023, 0.0
        %2060 = vadd.xlane.f32.xlu0 %v2059
        %v2061 = vpop.xlane.xlu0 %2060
        %v2062 = vsel %vm1976, %v2024, 0.0
        %2063 = vadd.xlane.f32.xlu0 %v2062
        %v2064 = vpop.xlane.xlu0 %2063
        %v2065 = vsel %vm1976, %v2025, 0.0
        %2066 = vadd.xlane.f32.xlu0 %v2065
        %v2067 = vpop.xlane.xlu0 %2066
        %v2068 = vsel %vm1976, %v2026, 0.0
        %2069 = vadd.xlane.f32.xlu0 %v2068
        %v2070 = vpop.xlane.xlu0 %2069
        %v2071 = vsel %vm1976, %v2027, 0.0
        %2072 = vadd.xlane.f32.xlu0 %v2071
        %v2073 = vpop.xlane.xlu0 %2072
        %v2074 = vsel %vm1976, %v2028, 0.0
        %2075 = vadd.xlane.f32.xlu0 %v2074
        %v2076 = vpop.xlane.xlu0 %2075
        %v2077 = vsub.f32 0.0, %v2031
        %v2078 = vsub.f32 0.0, %v2034
        %v2079 = vsub.f32 0.0, %v2037
        %v2080 = vsub.f32 0.0, %v2040
        %v2081 = vsub.f32 0.0, %v2043
        %v2082 = vsub.f32 0.0, %v2046
        %v2083 = vsub.f32 0.0, %v2049
        %v2084 = vsub.f32 0.0, %v2052
        %v2085 = vsub.f32 0.0, %v2055
        %v2086 = vsub.f32 0.0, %v2058
        %v2087 = vsub.f32 0.0, %v2061
        %v2088 = vsub.f32 0.0, %v2064
        %v2089 = vsub.f32 0.0, %v2067
        %v2090 = vsub.f32 0.0, %v2070
        %v2091 = vsub.f32 0.0, %v2073
        %v2092 = vsub.f32 0.0, %v2076
        %v2093 = vmul.f32 %v2077, 1.442695
        %v2094 = vpow.pop %v2093
        %v2095 = vmul.f32 %v2078, 1.442695
        %v2096 = vpow.pop %v2095
        %v2097 = vmul.f32 %v2079, 1.442695
        %v2098 = vpow.pop %v2097
        %v2099 = vmul.f32 %v2080, 1.442695
        %v2100 = vpow.pop %v2099
        %v2101 = vmul.f32 %v2081, 1.442695
        %v2102 = vpow.pop %v2101
        %v2103 = vmul.f32 %v2082, 1.442695
        %v2104 = vpow.pop %v2103
        %v2105 = vmul.f32 %v2083, 1.442695
        %v2106 = vpow.pop %v2105
        %v2107 = vmul.f32 %v2084, 1.442695
        %v2108 = vpow.pop %v2107
        %v2109 = vmul.f32 %v2085, 1.442695
        %v2110 = vpow.pop %v2109
        %v2111 = vmul.f32 %v2086, 1.442695
        %v2112 = vpow.pop %v2111
        %v2113 = vmul.f32 %v2087, 1.442695
        %v2114 = vpow.pop %v2113
        %v2115 = vmul.f32 %v2088, 1.442695
        %v2116 = vpow.pop %v2115
        %v2117 = vmul.f32 %v2089, 1.442695
        %v2118 = vpow.pop %v2117
        %v2119 = vmul.f32 %v2090, 1.442695
        %v2120 = vpow.pop %v2119
        %v2121 = vmul.f32 %v2091, 1.442695
        %v2122 = vpow.pop %v2121
        %v2123 = vmul.f32 %v2092, 1.442695
        %v2124 = vpow.pop %v2123
        %v2125 = vadd.f32 %v2094, 1.0
        %v2126 = vadd.f32 %v2096, 1.0
        %v2127 = vadd.f32 %v2098, 1.0
        %v2128 = vadd.f32 %v2100, 1.0
        %v2129 = vadd.f32 %v2102, 1.0
        %v2130 = vadd.f32 %v2104, 1.0
        %v2131 = vadd.f32 %v2106, 1.0
        %v2132 = vadd.f32 %v2108, 1.0
        %v2133 = vadd.f32 %v2110, 1.0
        %v2134 = vadd.f32 %v2112, 1.0
        %v2135 = vadd.f32 %v2114, 1.0
        %v2136 = vadd.f32 %v2116, 1.0
        %v2137 = vadd.f32 %v2118, 1.0
        %v2138 = vadd.f32 %v2120, 1.0
        %v2139 = vadd.f32 %v2122, 1.0
        %v2140 = vadd.f32 %v2124, 1.0
        %v2141 = vrcp.pop %v2125
        %v2142 = vmul.f32 %v2125, %v2141
        %v2143 = vsub.f32 1.0, %v2142
        %v2144 = vmul.f32 %v2141, %v2143
        %v2145 = vadd.f32 %v2141, %v2144
        %vm2146 = vweird.f32 %v2125
        %vm2147 = vweird.f32 %v2141
        %vm2148 = vmor %vm2146, %vm2147
        %v2149 = vsel %vm2148, %v2141, %v2145
        %v2150 = vand.u32 2147483647, %v2125
        %vm2151 = vcmp.eq.f32.partialorder %v2150, 8.507059e+37
        %v2152 = vand.u32 %v2125, 2147483648
        %v2153 = vor.u32 1.1754944e-38, %v2152
        %v2154 = vsel %vm2151, %v2153, %v2149
        %v2155 = vmul.f32 1.0, %v2154
        %v2156 = vrcp.pop %v2126
        %v2157 = vmul.f32 %v2126, %v2156
        %v2158 = vsub.f32 1.0, %v2157
        %v2159 = vmul.f32 %v2156, %v2158
        %v2160 = vadd.f32 %v2156, %v2159
        %vm2161 = vweird.f32 %v2126
        %vm2162 = vweird.f32 %v2156
        %vm2163 = vmor %vm2161, %vm2162
        %v2164 = vsel %vm2163, %v2156, %v2160
        %v2165 = vand.u32 2147483647, %v2126
        %vm2166 = vcmp.eq.f32.partialorder %v2165, 8.507059e+37
        %v2167 = vand.u32 %v2126, 2147483648
        %v2168 = vor.u32 1.1754944e-38, %v2167
        %v2169 = vsel %vm2166, %v2168, %v2164
        %v2170 = vmul.f32 1.0, %v2169
        %v2171 = vrcp.pop %v2127
        %v2172 = vmul.f32 %v2127, %v2171
        %v2173 = vsub.f32 1.0, %v2172
        %v2174 = vmul.f32 %v2171, %v2173
        %v2175 = vadd.f32 %v2171, %v2174
        %vm2176 = vweird.f32 %v2127
        %vm2177 = vweird.f32 %v2171
        %vm2178 = vmor %vm2176, %vm2177
        %v2179 = vsel %vm2178, %v2171, %v2175
        %v2180 = vand.u32 2147483647, %v2127
        %vm2181 = vcmp.eq.f32.partialorder %v2180, 8.507059e+37
        %v2182 = vand.u32 %v2127, 2147483648
        %v2183 = vor.u32 1.1754944e-38, %v2182
        %v2184 = vsel %vm2181, %v2183, %v2179
        %v2185 = vmul.f32 1.0, %v2184
        %v2186 = vrcp.pop %v2128
        %v2187 = vmul.f32 %v2128, %v2186
        %v2188 = vsub.f32 1.0, %v2187
        %v2189 = vmul.f32 %v2186, %v2188
        %v2190 = vadd.f32 %v2186, %v2189
        %vm2191 = vweird.f32 %v2128
        %vm2192 = vweird.f32 %v2186
        %vm2193 = vmor %vm2191, %vm2192
        %v2194 = vsel %vm2193, %v2186, %v2190
        %v2195 = vand.u32 2147483647, %v2128
        %vm2196 = vcmp.eq.f32.partialorder %v2195, 8.507059e+37
        %v2197 = vand.u32 %v2128, 2147483648
        %v2198 = vor.u32 1.1754944e-38, %v2197
        %v2199 = vsel %vm2196, %v2198, %v2194
        %v2200 = vmul.f32 1.0, %v2199
        %v2201 = vrcp.pop %v2129
        %v2202 = vmul.f32 %v2129, %v2201
        %v2203 = vsub.f32 1.0, %v2202
        %v2204 = vmul.f32 %v2201, %v2203
        %v2205 = vadd.f32 %v2201, %v2204
        %vm2206 = vweird.f32 %v2129
        %vm2207 = vweird.f32 %v2201
        %vm2208 = vmor %vm2206, %vm2207
        %v2209 = vsel %vm2208, %v2201, %v2205
        %v2210 = vand.u32 2147483647, %v2129
        %vm2211 = vcmp.eq.f32.partialorder %v2210, 8.507059e+37
        %v2212 = vand.u32 %v2129, 2147483648
        %v2213 = vor.u32 1.1754944e-38, %v2212
        %v2214 = vsel %vm2211, %v2213, %v2209
        %v2215 = vmul.f32 1.0, %v2214
        %v2216 = vrcp.pop %v2130
        %v2217 = vmul.f32 %v2130, %v2216
        %v2218 = vsub.f32 1.0, %v2217
        %v2219 = vmul.f32 %v2216, %v2218
        %v2220 = vadd.f32 %v2216, %v2219
        %vm2221 = vweird.f32 %v2130
        %vm2222 = vweird.f32 %v2216
        %vm2223 = vmor %vm2221, %vm2222
        %v2224 = vsel %vm2223, %v2216, %v2220
        %v2225 = vand.u32 2147483647, %v2130
        %vm2226 = vcmp.eq.f32.partialorder %v2225, 8.507059e+37
        %v2227 = vand.u32 %v2130, 2147483648
        %v2228 = vor.u32 1.1754944e-38, %v2227
        %v2229 = vsel %vm2226, %v2228, %v2224
        %v2230 = vmul.f32 1.0, %v2229
        %v2231 = vrcp.pop %v2131
        %v2232 = vmul.f32 %v2131, %v2231
        %v2233 = vsub.f32 1.0, %v2232
        %v2234 = vmul.f32 %v2231, %v2233
        %v2235 = vadd.f32 %v2231, %v2234
        %vm2236 = vweird.f32 %v2131
        %vm2237 = vweird.f32 %v2231
        %vm2238 = vmor %vm2236, %vm2237
        %v2239 = vsel %vm2238, %v2231, %v2235
        %v2240 = vand.u32 2147483647, %v2131
        %vm2241 = vcmp.eq.f32.partialorder %v2240, 8.507059e+37
        %v2242 = vand.u32 %v2131, 2147483648
        %v2243 = vor.u32 1.1754944e-38, %v2242
        %v2244 = vsel %vm2241, %v2243, %v2239
        %v2245 = vmul.f32 1.0, %v2244
        %v2246 = vrcp.pop %v2132
        %v2247 = vmul.f32 %v2132, %v2246
        %v2248 = vsub.f32 1.0, %v2247
        %v2249 = vmul.f32 %v2246, %v2248
        %v2250 = vadd.f32 %v2246, %v2249
        %vm2251 = vweird.f32 %v2132
        %vm2252 = vweird.f32 %v2246
        %vm2253 = vmor %vm2251, %vm2252
        %v2254 = vsel %vm2253, %v2246, %v2250
        %v2255 = vand.u32 2147483647, %v2132
        %vm2256 = vcmp.eq.f32.partialorder %v2255, 8.507059e+37
        %v2257 = vand.u32 %v2132, 2147483648
        %v2258 = vor.u32 1.1754944e-38, %v2257
        %v2259 = vsel %vm2256, %v2258, %v2254
        %v2260 = vmul.f32 1.0, %v2259
        %v2261 = vrcp.pop %v2133
        %v2262 = vmul.f32 %v2133, %v2261
        %v2263 = vsub.f32 1.0, %v2262
        %v2264 = vmul.f32 %v2261, %v2263
        %v2265 = vadd.f32 %v2261, %v2264
        %vm2266 = vweird.f32 %v2133
        %vm2267 = vweird.f32 %v2261
        %vm2268 = vmor %vm2266, %vm2267
        %v2269 = vsel %vm2268, %v2261, %v2265
        %v2270 = vand.u32 2147483647, %v2133
        %vm2271 = vcmp.eq.f32.partialorder %v2270, 8.507059e+37
        %v2272 = vand.u32 %v2133, 2147483648
        %v2273 = vor.u32 1.1754944e-38, %v2272
        %v2274 = vsel %vm2271, %v2273, %v2269
        %v2275 = vmul.f32 1.0, %v2274
        %v2276 = vrcp.pop %v2134
        %v2277 = vmul.f32 %v2134, %v2276
        %v2278 = vsub.f32 1.0, %v2277
        %v2279 = vmul.f32 %v2276, %v2278
        %v2280 = vadd.f32 %v2276, %v2279
        %vm2281 = vweird.f32 %v2134
        %vm2282 = vweird.f32 %v2276
        %vm2283 = vmor %vm2281, %vm2282
        %v2284 = vsel %vm2283, %v2276, %v2280
        %v2285 = vand.u32 2147483647, %v2134
        %vm2286 = vcmp.eq.f32.partialorder %v2285, 8.507059e+37
        %v2287 = vand.u32 %v2134, 2147483648
        %v2288 = vor.u32 1.1754944e-38, %v2287
        %v2289 = vsel %vm2286, %v2288, %v2284
        %v2290 = vmul.f32 1.0, %v2289
        %v2291 = vrcp.pop %v2135
        %v2292 = vmul.f32 %v2135, %v2291
        %v2293 = vsub.f32 1.0, %v2292
        %v2294 = vmul.f32 %v2291, %v2293
        %v2295 = vadd.f32 %v2291, %v2294
        %vm2296 = vweird.f32 %v2135
        %vm2297 = vweird.f32 %v2291
        %vm2298 = vmor %vm2296, %vm2297
        %v2299 = vsel %vm2298, %v2291, %v2295
        %v2300 = vand.u32 2147483647, %v2135
        %vm2301 = vcmp.eq.f32.partialorder %v2300, 8.507059e+37
        %v2302 = vand.u32 %v2135, 2147483648
        %v2303 = vor.u32 1.1754944e-38, %v2302
        %v2304 = vsel %vm2301, %v2303, %v2299
        %v2305 = vmul.f32 1.0, %v2304
        %v2306 = vrcp.pop %v2136
        %v2307 = vmul.f32 %v2136, %v2306
        %v2308 = vsub.f32 1.0, %v2307
        %v2309 = vmul.f32 %v2306, %v2308
        %v2310 = vadd.f32 %v2306, %v2309
        %vm2311 = vweird.f32 %v2136
        %vm2312 = vweird.f32 %v2306
        %vm2313 = vmor %vm2311, %vm2312
        %v2314 = vsel %vm2313, %v2306, %v2310
        %v2315 = vand.u32 2147483647, %v2136
        %vm2316 = vcmp.eq.f32.partialorder %v2315, 8.507059e+37
        %v2317 = vand.u32 %v2136, 2147483648
        %v2318 = vor.u32 1.1754944e-38, %v2317
        %v2319 = vsel %vm2316, %v2318, %v2314
        %v2320 = vmul.f32 1.0, %v2319
        %v2321 = vrcp.pop %v2137
        %v2322 = vmul.f32 %v2137, %v2321
        %v2323 = vsub.f32 1.0, %v2322
        %v2324 = vmul.f32 %v2321, %v2323
        %v2325 = vadd.f32 %v2321, %v2324
        %vm2326 = vweird.f32 %v2137
        %vm2327 = vweird.f32 %v2321
        %vm2328 = vmor %vm2326, %vm2327
        %v2329 = vsel %vm2328, %v2321, %v2325
        %v2330 = vand.u32 2147483647, %v2137
        %vm2331 = vcmp.eq.f32.partialorder %v2330, 8.507059e+37
        %v2332 = vand.u32 %v2137, 2147483648
        %v2333 = vor.u32 1.1754944e-38, %v2332
        %v2334 = vsel %vm2331, %v2333, %v2329
        %v2335 = vmul.f32 1.0, %v2334
        %v2336 = vrcp.pop %v2138
        %v2337 = vmul.f32 %v2138, %v2336
        %v2338 = vsub.f32 1.0, %v2337
        %v2339 = vmul.f32 %v2336, %v2338
        %v2340 = vadd.f32 %v2336, %v2339
        %vm2341 = vweird.f32 %v2138
        %vm2342 = vweird.f32 %v2336
        %vm2343 = vmor %vm2341, %vm2342
        %v2344 = vsel %vm2343, %v2336, %v2340
        %v2345 = vand.u32 2147483647, %v2138
        %vm2346 = vcmp.eq.f32.partialorder %v2345, 8.507059e+37
        %v2347 = vand.u32 %v2138, 2147483648
        %v2348 = vor.u32 1.1754944e-38, %v2347
        %v2349 = vsel %vm2346, %v2348, %v2344
        %v2350 = vmul.f32 1.0, %v2349
        %v2351 = vrcp.pop %v2139
        %v2352 = vmul.f32 %v2139, %v2351
        %v2353 = vsub.f32 1.0, %v2352
        %v2354 = vmul.f32 %v2351, %v2353
        %v2355 = vadd.f32 %v2351, %v2354
        %vm2356 = vweird.f32 %v2139
        %vm2357 = vweird.f32 %v2351
        %vm2358 = vmor %vm2356, %vm2357
        %v2359 = vsel %vm2358, %v2351, %v2355
        %v2360 = vand.u32 2147483647, %v2139
        %vm2361 = vcmp.eq.f32.partialorder %v2360, 8.507059e+37
        %v2362 = vand.u32 %v2139, 2147483648
        %v2363 = vor.u32 1.1754944e-38, %v2362
        %v2364 = vsel %vm2361, %v2363, %v2359
        %v2365 = vmul.f32 1.0, %v2364
        %v2366 = vrcp.pop %v2140
        %v2367 = vmul.f32 %v2140, %v2366
        %v2368 = vsub.f32 1.0, %v2367
        %v2369 = vmul.f32 %v2366, %v2368
        %v2370 = vadd.f32 %v2366, %v2369
        %vm2371 = vweird.f32 %v2140
        %vm2372 = vweird.f32 %v2366
        %vm2373 = vmor %vm2371, %vm2372
        %v2374 = vsel %vm2373, %v2366, %v2370
        %v2375 = vand.u32 2147483647, %v2140
        %vm2376 = vcmp.eq.f32.partialorder %v2375, 8.507059e+37
        %v2377 = vand.u32 %v2140, 2147483648
        %v2378 = vor.u32 1.1754944e-38, %v2377
        %v2379 = vsel %vm2376, %v2378, %v2374
        %v2380 = vmul.f32 1.0, %v2379
        %v2381 = vmul.f32 %v2155, %v1959
        %v2382 = vmul.f32 %v2170, %v1960
        %v2383 = vmul.f32 %v2185, %v1961
        %v2384 = vmul.f32 %v2200, %v1962
        %v2385 = vmul.f32 %v2215, %v1963
        %v2386 = vmul.f32 %v2230, %v1964
        %v2387 = vmul.f32 %v2245, %v1965
        %v2388 = vmul.f32 %v2260, %v1966
        %v2389 = vmul.f32 %v2275, %v1967
        %v2390 = vmul.f32 %v2290, %v1968
        %v2391 = vmul.f32 %v2305, %v1969
        %v2392 = vmul.f32 %v2320, %v1970
        %v2393 = vmul.f32 %v2335, %v1971
        %v2394 = vmul.f32 %v2350, %v1972
        %v2395 = vmul.f32 %v2365, %v1973
        %v2396 = vmul.f32 %v2380, %v1974
        %v2397 = vadd.f32 %v1994, %v2381
        %v2398 = vadd.f32 %v1995, %v2382
        %v2399 = vadd.f32 %v1996, %v2383
        %v2400 = vadd.f32 %v1997, %v2384
        %v2401 = vadd.f32 %v1998, %v2385
        %v2402 = vadd.f32 %v1999, %v2386
        %v2403 = vadd.f32 %v2000, %v2387
        %v2404 = vadd.f32 %v2001, %v2388
        %v2405 = vadd.f32 %v2002, %v2389
        %v2406 = vadd.f32 %v2003, %v2390
        %v2407 = vadd.f32 %v2004, %v2391
        %v2408 = vadd.f32 %v2005, %v2392
        %v2409 = vadd.f32 %v2006, %v2393
        %v2410 = vadd.f32 %v2007, %v2394
        %v2411 = vadd.f32 %v2008, %v2395
        %v2412 = vadd.f32 %v2009, %v2396
        %2413 = vst.msk [vmem:[%s1993] sm:$0xff] %vm1976, %v2397
        %2414 = vst.msk [vmem:[%s1993 + $0x8] sm:$0xff] %vm1976, %v2398
        %2415 = vst.msk [vmem:[%s1993 + $0x10] sm:$0xff] %vm1976, %v2399
        %2416 = vst.msk [vmem:[%s1993 + $0x18] sm:$0xff] %vm1976, %v2400
        %2417 = vst.msk [vmem:[%s1993 + $0x20] sm:$0xff] %vm1976, %v2401
        %2418 = vst.msk [vmem:[%s1993 + $0x28] sm:$0xff] %vm1976, %v2402
        %2419 = vst.msk [vmem:[%s1993 + $0x30] sm:$0xff] %vm1976, %v2403
        %2420 = vst.msk [vmem:[%s1993 + $0x38] sm:$0xff] %vm1976, %v2404
        %2421 = vst.msk [vmem:[%s1993 + $0x40] sm:$0xff] %vm1976, %v2405
        %2422 = vst.msk [vmem:[%s1993 + $0x48] sm:$0xff] %vm1976, %v2406
        %2423 = vst.msk [vmem:[%s1993 + $0x50] sm:$0xff] %vm1976, %v2407
        %2424 = vst.msk [vmem:[%s1993 + $0x58] sm:$0xff] %vm1976, %v2408
        %2425 = vst.msk [vmem:[%s1993 + $0x60] sm:$0xff] %vm1976, %v2409
        %2426 = vst.msk [vmem:[%s1993 + $0x68] sm:$0xff] %vm1976, %v2410
        %2427 = vst.msk [vmem:[%s1993 + $0x70] sm:$0xff] %vm1976, %v2411
        %2428 = vst.msk [vmem:[%s1993 + $0x78] sm:$0xff] %vm1976, %v2412
      $region44: #{tpu_custom_call.1} parent=31 // pred_fallthru
        _
      %p2429 = scmp.eq.s32.totalorder %s1353, 0
      %p2430 = pnand %p1341, %p2429
      %p2431 = pneg %p2430
      // Predicated region
      $region49: #{tpu_custom_call.1} parent=31 // pred_check
        _
      $region50: #{tpu_custom_call.1} parent=31 // pred_check_branch
        %2433 = sbr.rel (%p2430) target = $region52
      $region51: #{tpu_custom_call.1} parent=31 // pred_region
        %p2434 = scmp.eq.s32.totalorder %s19, 0
        // Predicated region
        $region53: #{tpu_custom_call.1} parent=51 // pred_check
          %p2435 = pneg %p2434
        $region54: #{tpu_custom_call.1} parent=51 // pred_check_branch
          %2437 = sbr.rel (%p2435) target = $region56
        $region55: #{tpu_custom_call.1} parent=51 // pred_region
          %v2438 = vld [vmem:[#allocation3] sm:$0xff]
          %v2439 = vld [vmem:[#allocation3 + $0x8] sm:$0xff]
          %v2440 = vld [vmem:[#allocation3 + $0x10] sm:$0xff]
          %v2441 = vld [vmem:[#allocation3 + $0x18] sm:$0xff]
          %v2442 = vld [vmem:[#allocation3 + $0x20] sm:$0xff]
          %v2443 = vld [vmem:[#allocation3 + $0x28] sm:$0xff]
          %v2444 = vld [vmem:[#allocation3 + $0x30] sm:$0xff]
          %v2445 = vld [vmem:[#allocation3 + $0x38] sm:$0xff]
          %v2446 = vld [vmem:[#allocation3 + $0x40] sm:$0xff]
          %v2447 = vld [vmem:[#allocation3 + $0x48] sm:$0xff]
          %v2448 = vld [vmem:[#allocation3 + $0x50] sm:$0xff]
          %v2449 = vld [vmem:[#allocation3 + $0x58] sm:$0xff]
          %v2450 = vld [vmem:[#allocation3 + $0x60] sm:$0xff]
          %v2451 = vld [vmem:[#allocation3 + $0x68] sm:$0xff]
          %v2452 = vld [vmem:[#allocation3 + $0x70] sm:$0xff]
          %v2453 = vld [vmem:[#allocation3 + $0x78] sm:$0xff]
          %v2454 = vld [vmem:[#allocation3 + $0x80] sm:$0xff]
          %v2455 = vld [vmem:[#allocation3 + $0x88] sm:$0xff]
          %v2456 = vld [vmem:[#allocation3 + $0x90] sm:$0xff]
          %v2457 = vld [vmem:[#allocation3 + $0x98] sm:$0xff]
          %v2458 = vld [vmem:[#allocation3 + $0xa0] sm:$0xff]
          %v2459 = vld [vmem:[#allocation3 + $0xa8] sm:$0xff]
          %v2460 = vld [vmem:[#allocation3 + $0xb0] sm:$0xff]
          %v2461 = vld [vmem:[#allocation3 + $0xb8] sm:$0xff]
          %v2462 = vld [vmem:[#allocation3 + $0xc0] sm:$0xff]
          %v2463 = vld [vmem:[#allocation3 + $0xc8] sm:$0xff]
          %v2464 = vld [vmem:[#allocation3 + $0xd0] sm:$0xff]
          %v2465 = vld [vmem:[#allocation3 + $0xd8] sm:$0xff]
          %v2466 = vld [vmem:[#allocation3 + $0xe0] sm:$0xff]
          %v2467 = vld [vmem:[#allocation3 + $0xe8] sm:$0xff]
          %v2468 = vld [vmem:[#allocation3 + $0xf0] sm:$0xff]
          %v2469 = vld [vmem:[#allocation3 + $0xf8] sm:$0xff]
          %v2470 = vld [vmem:[#allocation4] sm:$0xff]
          %v2471 = vld [vmem:[#allocation4 + $0x8] sm:$0xff]
          %v2472 = vld [vmem:[#allocation4 + $0x10] sm:$0xff]
          %v2473 = vld [vmem:[#allocation4 + $0x18] sm:$0xff]
          %v2474 = vld [vmem:[#allocation4 + $0x20] sm:$0xff]
          %v2475 = vld [vmem:[#allocation4 + $0x28] sm:$0xff]
          %v2476 = vld [vmem:[#allocation4 + $0x30] sm:$0xff]
          %v2477 = vld [vmem:[#allocation4 + $0x38] sm:$0xff]
          %v2478 = vld [vmem:[#allocation4 + $0x40] sm:$0xff]
          %v2479 = vld [vmem:[#allocation4 + $0x48] sm:$0xff]
          %v2480 = vld [vmem:[#allocation4 + $0x50] sm:$0xff]
          %v2481 = vld [vmem:[#allocation4 + $0x58] sm:$0xff]
          %v2482 = vld [vmem:[#allocation4 + $0x60] sm:$0xff]
          %v2483 = vld [vmem:[#allocation4 + $0x68] sm:$0xff]
          %v2484 = vld [vmem:[#allocation4 + $0x70] sm:$0xff]
          %v2485 = vld [vmem:[#allocation4 + $0x78] sm:$0xff]
          %v2486 = vld [vmem:[#allocation4 + $0x80] sm:$0xff]
          %v2487 = vld [vmem:[#allocation4 + $0x88] sm:$0xff]
          %v2488 = vld [vmem:[#allocation4 + $0x90] sm:$0xff]
          %v2489 = vld [vmem:[#allocation4 + $0x98] sm:$0xff]
          %v2490 = vld [vmem:[#allocation4 + $0xa0] sm:$0xff]
          %v2491 = vld [vmem:[#allocation4 + $0xa8] sm:$0xff]
          %v2492 = vld [vmem:[#allocation4 + $0xb0] sm:$0xff]
          %v2493 = vld [vmem:[#allocation4 + $0xb8] sm:$0xff]
          %v2494 = vld [vmem:[#allocation4 + $0xc0] sm:$0xff]
          %v2495 = vld [vmem:[#allocation4 + $0xc8] sm:$0xff]
          %v2496 = vld [vmem:[#allocation4 + $0xd0] sm:$0xff]
          %v2497 = vld [vmem:[#allocation4 + $0xd8] sm:$0xff]
          %v2498 = vld [vmem:[#allocation4 + $0xe0] sm:$0xff]
          %v2499 = vld [vmem:[#allocation4 + $0xe8] sm:$0xff]
          %v2500 = vld [vmem:[#allocation4 + $0xf0] sm:$0xff]
          %v2501 = vld [vmem:[#allocation4 + $0xf8] sm:$0xff]
          %2503 = vset.pattern.permute.xlu0 0
          %2504 = vperm.xlu0 %2503, %v2470
          %v2505 = vpop.permute.xlu0 %2504
          %2508 = vset.pattern.permute.xlu0 0
          %2509 = vperm.xlu0 %2508, %v2471
          %v2510 = vpop.permute.xlu0 %2509
          %2513 = vset.pattern.permute.xlu0 0
          %2514 = vperm.xlu0 %2513, %v2472
          %v2515 = vpop.permute.xlu0 %2514
          %2518 = vset.pattern.permute.xlu0 0
          %2519 = vperm.xlu0 %2518, %v2473
          %v2520 = vpop.permute.xlu0 %2519
          %2523 = vset.pattern.permute.xlu0 0
          %2524 = vperm.xlu0 %2523, %v2474
          %v2525 = vpop.permute.xlu0 %2524
          %2528 = vset.pattern.permute.xlu0 0
          %2529 = vperm.xlu0 %2528, %v2475
          %v2530 = vpop.permute.xlu0 %2529
          %2533 = vset.pattern.permute.xlu0 0
          %2534 = vperm.xlu0 %2533, %v2476
          %v2535 = vpop.permute.xlu0 %2534
          %2538 = vset.pattern.permute.xlu0 0
          %2539 = vperm.xlu0 %2538, %v2477
          %v2540 = vpop.permute.xlu0 %2539
          %2543 = vset.pattern.permute.xlu0 0
          %2544 = vperm.xlu0 %2543, %v2478
          %v2545 = vpop.permute.xlu0 %2544
          %2548 = vset.pattern.permute.xlu0 0
          %2549 = vperm.xlu0 %2548, %v2479
          %v2550 = vpop.permute.xlu0 %2549
          %2553 = vset.pattern.permute.xlu0 0
          %2554 = vperm.xlu0 %2553, %v2480
          %v2555 = vpop.permute.xlu0 %2554
          %2558 = vset.pattern.permute.xlu0 0
          %2559 = vperm.xlu0 %2558, %v2481
          %v2560 = vpop.permute.xlu0 %2559
          %2563 = vset.pattern.permute.xlu0 0
          %2564 = vperm.xlu0 %2563, %v2482
          %v2565 = vpop.permute.xlu0 %2564
          %2568 = vset.pattern.permute.xlu0 0
          %2569 = vperm.xlu0 %2568, %v2483
          %v2570 = vpop.permute.xlu0 %2569
          %2573 = vset.pattern.permute.xlu0 0
          %2574 = vperm.xlu0 %2573, %v2484
          %v2575 = vpop.permute.xlu0 %2574
          %2578 = vset.pattern.permute.xlu0 0
          %2579 = vperm.xlu0 %2578, %v2485
          %v2580 = vpop.permute.xlu0 %2579
          %2583 = vset.pattern.permute.xlu0 0
          %2584 = vperm.xlu0 %2583, %v2486
          %v2585 = vpop.permute.xlu0 %2584
          %2588 = vset.pattern.permute.xlu0 0
          %2589 = vperm.xlu0 %2588, %v2487
          %v2590 = vpop.permute.xlu0 %2589
          %2593 = vset.pattern.permute.xlu0 0
          %2594 = vperm.xlu0 %2593, %v2488
          %v2595 = vpop.permute.xlu0 %2594
          %2598 = vset.pattern.permute.xlu0 0
          %2599 = vperm.xlu0 %2598, %v2489
          %v2600 = vpop.permute.xlu0 %2599
          %2603 = vset.pattern.permute.xlu0 0
          %2604 = vperm.xlu0 %2603, %v2490
          %v2605 = vpop.permute.xlu0 %2604
          %2608 = vset.pattern.permute.xlu0 0
          %2609 = vperm.xlu0 %2608, %v2491
          %v2610 = vpop.permute.xlu0 %2609
          %2613 = vset.pattern.permute.xlu0 0
          %2614 = vperm.xlu0 %2613, %v2492
          %v2615 = vpop.permute.xlu0 %2614
          %2618 = vset.pattern.permute.xlu0 0
          %2619 = vperm.xlu0 %2618, %v2493
          %v2620 = vpop.permute.xlu0 %2619
          %2623 = vset.pattern.permute.xlu0 0
          %2624 = vperm.xlu0 %2623, %v2494
          %v2625 = vpop.permute.xlu0 %2624
          %2628 = vset.pattern.permute.xlu0 0
          %2629 = vperm.xlu0 %2628, %v2495
          %v2630 = vpop.permute.xlu0 %2629
          %2633 = vset.pattern.permute.xlu0 0
          %2634 = vperm.xlu0 %2633, %v2496
          %v2635 = vpop.permute.xlu0 %2634
          %2638 = vset.pattern.permute.xlu0 0
          %2639 = vperm.xlu0 %2638, %v2497
          %v2640 = vpop.permute.xlu0 %2639
          %2643 = vset.pattern.permute.xlu0 0
          %2644 = vperm.xlu0 %2643, %v2498
          %v2645 = vpop.permute.xlu0 %2644
          %2648 = vset.pattern.permute.xlu0 0
          %2649 = vperm.xlu0 %2648, %v2499
          %v2650 = vpop.permute.xlu0 %2649
          %2653 = vset.pattern.permute.xlu0 0
          %2654 = vperm.xlu0 %2653, %v2500
          %v2655 = vpop.permute.xlu0 %2654
          %2658 = vset.pattern.permute.xlu0 0
          %2659 = vperm.xlu0 %2658, %v2501
          %v2660 = vpop.permute.xlu0 %2659
          %v2662 = vmul.f32 %v2438, %v2505
          %v2663 = vmul.f32 %v2439, %v2510
          %v2664 = vmul.f32 %v2440, %v2515
          %v2665 = vmul.f32 %v2441, %v2520
          %v2666 = vmul.f32 %v2442, %v2525
          %v2667 = vmul.f32 %v2443, %v2530
          %v2668 = vmul.f32 %v2444, %v2535
          %v2669 = vmul.f32 %v2445, %v2540
          %v2670 = vmul.f32 %v2446, %v2545
          %v2671 = vmul.f32 %v2447, %v2550
          %v2672 = vmul.f32 %v2448, %v2555
          %v2673 = vmul.f32 %v2449, %v2560
          %v2674 = vmul.f32 %v2450, %v2565
          %v2675 = vmul.f32 %v2451, %v2570
          %v2676 = vmul.f32 %v2452, %v2575
          %v2677 = vmul.f32 %v2453, %v2580
          %v2678 = vmul.f32 %v2454, %v2585
          %v2679 = vmul.f32 %v2455, %v2590
          %v2680 = vmul.f32 %v2456, %v2595
          %v2681 = vmul.f32 %v2457, %v2600
          %v2682 = vmul.f32 %v2458, %v2605
          %v2683 = vmul.f32 %v2459, %v2610
          %v2684 = vmul.f32 %v2460, %v2615
          %v2685 = vmul.f32 %v2461, %v2620
          %v2686 = vmul.f32 %v2462, %v2625
          %v2687 = vmul.f32 %v2463, %v2630
          %v2688 = vmul.f32 %v2464, %v2635
          %v2689 = vmul.f32 %v2465, %v2640
          %v2690 = vmul.f32 %v2466, %v2645
          %v2691 = vmul.f32 %v2467, %v2650
          %v2692 = vmul.f32 %v2468, %v2655
          %v2693 = vmul.f32 %v2469, %v2660
          %vm2694 = vcmask 64512
          %2695 = vst.msk [vmem:[#allocation3] sm:$0xff] %vm2694, %v2662
          %2696 = vst.msk [vmem:[#allocation3 + $0x8] sm:$0xff] %vm2694, %v2663
          %2697 = vst.msk [vmem:[#allocation3 + $0x10] sm:$0xff] %vm2694, %v2664
          %2698 = vst.msk [vmem:[#allocation3 + $0x18] sm:$0xff] %vm2694, %v2665
          %2699 = vst.msk [vmem:[#allocation3 + $0x20] sm:$0xff] %vm2694, %v2666
          %2700 = vst.msk [vmem:[#allocation3 + $0x28] sm:$0xff] %vm2694, %v2667
          %2701 = vst.msk [vmem:[#allocation3 + $0x30] sm:$0xff] %vm2694, %v2668
          %2702 = vst.msk [vmem:[#allocation3 + $0x38] sm:$0xff] %vm2694, %v2669
          %2703 = vst.msk [vmem:[#allocation3 + $0x40] sm:$0xff] %vm2694, %v2670
          %2704 = vst.msk [vmem:[#allocation3 + $0x48] sm:$0xff] %vm2694, %v2671
          %2705 = vst.msk [vmem:[#allocation3 + $0x50] sm:$0xff] %vm2694, %v2672
          %2706 = vst.msk [vmem:[#allocation3 + $0x58] sm:$0xff] %vm2694, %v2673
          %2707 = vst.msk [vmem:[#allocation3 + $0x60] sm:$0xff] %vm2694, %v2674
          %2708 = vst.msk [vmem:[#allocation3 + $0x68] sm:$0xff] %vm2694, %v2675
          %2709 = vst.msk [vmem:[#allocation3 + $0x70] sm:$0xff] %vm2694, %v2676
          %2710 = vst.msk [vmem:[#allocation3 + $0x78] sm:$0xff] %vm2694, %v2677
          %2711 = vst.msk [vmem:[#allocation3 + $0x80] sm:$0xff] %vm2694, %v2678
          %2712 = vst.msk [vmem:[#allocation3 + $0x88] sm:$0xff] %vm2694, %v2679
          %2713 = vst.msk [vmem:[#allocation3 + $0x90] sm:$0xff] %vm2694, %v2680
          %2714 = vst.msk [vmem:[#allocation3 + $0x98] sm:$0xff] %vm2694, %v2681
          %2715 = vst.msk [vmem:[#allocation3 + $0xa0] sm:$0xff] %vm2694, %v2682
          %2716 = vst.msk [vmem:[#allocation3 + $0xa8] sm:$0xff] %vm2694, %v2683
          %2717 = vst.msk [vmem:[#allocation3 + $0xb0] sm:$0xff] %vm2694, %v2684
          %2718 = vst.msk [vmem:[#allocation3 + $0xb8] sm:$0xff] %vm2694, %v2685
          %2719 = vst.msk [vmem:[#allocation3 + $0xc0] sm:$0xff] %vm2694, %v2686
          %2720 = vst.msk [vmem:[#allocation3 + $0xc8] sm:$0xff] %vm2694, %v2687
          %2721 = vst.msk [vmem:[#allocation3 + $0xd0] sm:$0xff] %vm2694, %v2688
          %2722 = vst.msk [vmem:[#allocation3 + $0xd8] sm:$0xff] %vm2694, %v2689
          %2723 = vst.msk [vmem:[#allocation3 + $0xe0] sm:$0xff] %vm2694, %v2690
          %2724 = vst.msk [vmem:[#allocation3 + $0xe8] sm:$0xff] %vm2694, %v2691
          %2725 = vst.msk [vmem:[#allocation3 + $0xf0] sm:$0xff] %vm2694, %v2692
          %2726 = vst.msk [vmem:[#allocation3 + $0xf8] sm:$0xff] %vm2694, %v2693
        $region56: #{tpu_custom_call.1} parent=51 // pred_fallthru
          _
        %v2727 = vld [vmem:[%s171] sm:$0xff]
        %v2728 = vld [vmem:[%s171 + $0x8] sm:$0xff]
        %v2729 = vld [vmem:[%s171 + $0x10] sm:$0xff]
        %v2730 = vld [vmem:[%s171 + $0x18] sm:$0xff]
        %v2731 = vld [vmem:[%s171 + $0x20] sm:$0xff]
        %v2732 = vld [vmem:[%s171 + $0x28] sm:$0xff]
        %v2733 = vld [vmem:[%s171 + $0x30] sm:$0xff]
        %v2734 = vld [vmem:[%s171 + $0x38] sm:$0xff]
        %v2735 = vld [vmem:[%s171 + $0x40] sm:$0xff]
        %v2736 = vld [vmem:[%s171 + $0x48] sm:$0xff]
        %v2737 = vld [vmem:[%s171 + $0x50] sm:$0xff]
        %v2738 = vld [vmem:[%s171 + $0x58] sm:$0xff]
        %v2739 = vld [vmem:[%s171 + $0x60] sm:$0xff]
        %v2740 = vld [vmem:[%s171 + $0x68] sm:$0xff]
        %v2741 = vld [vmem:[%s171 + $0x70] sm:$0xff]
        %v2742 = vld [vmem:[%s171 + $0x78] sm:$0xff]
        %v2743 = vunpack.c.l.bf16 %v2727
        %v2744 = vunpack.c.h.bf16 %v2727
        %v2745 = vunpack.c.l.bf16 %v2728
        %v2746 = vunpack.c.h.bf16 %v2728
        %v2747 = vunpack.c.l.bf16 %v2729
        %v2748 = vunpack.c.h.bf16 %v2729
        %v2749 = vunpack.c.l.bf16 %v2730
        %v2750 = vunpack.c.h.bf16 %v2730
        %v2751 = vunpack.c.l.bf16 %v2731
        %v2752 = vunpack.c.h.bf16 %v2731
        %v2753 = vunpack.c.l.bf16 %v2732
        %v2754 = vunpack.c.h.bf16 %v2732
        %v2755 = vunpack.c.l.bf16 %v2733
        %v2756 = vunpack.c.h.bf16 %v2733
        %v2757 = vunpack.c.l.bf16 %v2734
        %v2758 = vunpack.c.h.bf16 %v2734
        %v2759 = vunpack.c.l.bf16 %v2735
        %v2760 = vunpack.c.h.bf16 %v2735
        %v2761 = vunpack.c.l.bf16 %v2736
        %v2762 = vunpack.c.h.bf16 %v2736
        %v2763 = vunpack.c.l.bf16 %v2737
        %v2764 = vunpack.c.h.bf16 %v2737
        %v2765 = vunpack.c.l.bf16 %v2738
        %v2766 = vunpack.c.h.bf16 %v2738
        %v2767 = vunpack.c.l.bf16 %v2739
        %v2768 = vunpack.c.h.bf16 %v2739
        %v2769 = vunpack.c.l.bf16 %v2740
        %v2770 = vunpack.c.h.bf16 %v2740
        %v2771 = vunpack.c.l.bf16 %v2741
        %v2772 = vunpack.c.h.bf16 %v2741
        %v2773 = vunpack.c.l.bf16 %v2742
        %v2774 = vunpack.c.h.bf16 %v2742
        %v2775 = vld [vmem:[#allocation3] sm:$0xff]
        %v2776 = vld [vmem:[#allocation3 + $0x8] sm:$0xff]
        %v2777 = vld [vmem:[#allocation3 + $0x10] sm:$0xff]
        %v2778 = vld [vmem:[#allocation3 + $0x18] sm:$0xff]
        %v2779 = vld [vmem:[#allocation3 + $0x20] sm:$0xff]
        %v2780 = vld [vmem:[#allocation3 + $0x28] sm:$0xff]
        %v2781 = vld [vmem:[#allocation3 + $0x30] sm:$0xff]
        %v2782 = vld [vmem:[#allocation3 + $0x38] sm:$0xff]
        %v2783 = vld [vmem:[#allocation3 + $0x40] sm:$0xff]
        %v2784 = vld [vmem:[#allocation3 + $0x48] sm:$0xff]
        %v2785 = vld [vmem:[#allocation3 + $0x50] sm:$0xff]
        %v2786 = vld [vmem:[#allocation3 + $0x58] sm:$0xff]
        %v2787 = vld [vmem:[#allocation3 + $0x60] sm:$0xff]
        %v2788 = vld [vmem:[#allocation3 + $0x68] sm:$0xff]
        %v2789 = vld [vmem:[#allocation3 + $0x70] sm:$0xff]
        %v2790 = vld [vmem:[#allocation3 + $0x78] sm:$0xff]
        %v2791 = vld [vmem:[#allocation3 + $0x80] sm:$0xff]
        %v2792 = vld [vmem:[#allocation3 + $0x88] sm:$0xff]
        %v2793 = vld [vmem:[#allocation3 + $0x90] sm:$0xff]
        %v2794 = vld [vmem:[#allocation3 + $0x98] sm:$0xff]
        %v2795 = vld [vmem:[#allocation3 + $0xa0] sm:$0xff]
        %v2796 = vld [vmem:[#allocation3 + $0xa8] sm:$0xff]
        %v2797 = vld [vmem:[#allocation3 + $0xb0] sm:$0xff]
        %v2798 = vld [vmem:[#allocation3 + $0xb8] sm:$0xff]
        %v2799 = vld [vmem:[#allocation3 + $0xc0] sm:$0xff]
        %v2800 = vld [vmem:[#allocation3 + $0xc8] sm:$0xff]
        %v2801 = vld [vmem:[#allocation3 + $0xd0] sm:$0xff]
        %v2802 = vld [vmem:[#allocation3 + $0xd8] sm:$0xff]
        %v2803 = vld [vmem:[#allocation3 + $0xe0] sm:$0xff]
        %v2804 = vld [vmem:[#allocation3 + $0xe8] sm:$0xff]
        %v2805 = vld [vmem:[#allocation3 + $0xf0] sm:$0xff]
        %v2806 = vld [vmem:[#allocation3 + $0xf8] sm:$0xff]
        %2807 = vmatpush.msra.mxu0 %v2790
        %2808 = vmatpush.msra.mxu0 %v2789
        %2809 = vmatpush.msra.mxu0 %v2788
        %2810 = vmatpush.msra.mxu0 %v2787
        %2811 = vmatpush.msra.mxu0 %v2786
        %2812 = vmatpush.msra.mxu0 %v2785
        %2813 = vmatpush.msra.mxu0 %v2784
        %2814 = vmatpush.msra.mxu0 %v2783
        %2815 = vmatpush.msra.mxu0 %v2782
        %2816 = vmatpush.msra.mxu0 %v2781
        %2817 = vmatpush.msra.mxu0 %v2780
        %2818 = vmatpush.msra.mxu0 %v2779
        %2819 = vmatpush.msra.mxu0 %v2778
        %2820 = vmatpush.msra.mxu0 %v2777
        %2821 = vmatpush.msra.mxu0 %v2776
        %2822 = vmatpush.msra.mxu0 %v2775
        %2823 = vmatmul.f32.gmra.mxu0 %v2743
        %v2824 = vpop.f32.mrf.mxu0
        %v2825 = vadd.f32 0.0, %v2824
        %2826 = vmatmul.f32.gmra.mxu0 %v2745
        %v2827 = vpop.f32.mrf.mxu0
        %v2828 = vadd.f32 0.0, %v2827
        %2829 = vmatmul.f32.gmra.mxu0 %v2747
        %v2830 = vpop.f32.mrf.mxu0
        %v2831 = vadd.f32 0.0, %v2830
        %2832 = vmatmul.f32.gmra.mxu0 %v2749
        %v2833 = vpop.f32.mrf.mxu0
        %v2834 = vadd.f32 0.0, %v2833
        %2835 = vmatmul.f32.gmra.mxu0 %v2751
        %v2836 = vpop.f32.mrf.mxu0
        %v2837 = vadd.f32 0.0, %v2836
        %2838 = vmatmul.f32.gmra.mxu0 %v2753
        %v2839 = vpop.f32.mrf.mxu0
        %v2840 = vadd.f32 0.0, %v2839
        %2841 = vmatmul.f32.gmra.mxu0 %v2755
        %v2842 = vpop.f32.mrf.mxu0
        %v2843 = vadd.f32 0.0, %v2842
        %2844 = vmatmul.f32.gmra.mxu0 %v2757
        %v2845 = vpop.f32.mrf.mxu0
        %v2846 = vadd.f32 0.0, %v2845
        %2847 = vmatmul.f32.gmra.mxu0 %v2759
        %v2848 = vpop.f32.mrf.mxu0
        %v2849 = vadd.f32 0.0, %v2848
        %2850 = vmatmul.f32.gmra.mxu0 %v2761
        %v2851 = vpop.f32.mrf.mxu0
        %v2852 = vadd.f32 0.0, %v2851
        %2853 = vmatmul.f32.gmra.mxu0 %v2763
        %v2854 = vpop.f32.mrf.mxu0
        %v2855 = vadd.f32 0.0, %v2854
        %2856 = vmatmul.f32.gmra.mxu0 %v2765
        %v2857 = vpop.f32.mrf.mxu0
        %v2858 = vadd.f32 0.0, %v2857
        %2859 = vmatmul.f32.gmra.mxu0 %v2767
        %v2860 = vpop.f32.mrf.mxu0
        %v2861 = vadd.f32 0.0, %v2860
        %2862 = vmatmul.f32.gmra.mxu0 %v2769
        %v2863 = vpop.f32.mrf.mxu0
        %v2864 = vadd.f32 0.0, %v2863
        %2865 = vmatmul.f32.gmra.mxu0 %v2771
        %v2866 = vpop.f32.mrf.mxu0
        %v2867 = vadd.f32 0.0, %v2866
        %2868 = vmatmul.f32.gmra.mxu0 %v2773
        %v2869 = vpop.f32.mrf.mxu0
        %v2870 = vadd.f32 0.0, %v2869
        %2871 = vdwg.mxu0
        %2872 = vmatpush.msra.mxu0 %v2806
        %2873 = vmatpush.msra.mxu0 %v2805
        %2874 = vmatpush.msra.mxu0 %v2804
        %2875 = vmatpush.msra.mxu0 %v2803
        %2876 = vmatpush.msra.mxu0 %v2802
        %2877 = vmatpush.msra.mxu0 %v2801
        %2878 = vmatpush.msra.mxu0 %v2800
        %2879 = vmatpush.msra.mxu0 %v2799
        %2880 = vmatpush.msra.mxu0 %v2798
        %2881 = vmatpush.msra.mxu0 %v2797
        %2882 = vmatpush.msra.mxu0 %v2796
        %2883 = vmatpush.msra.mxu0 %v2795
        %2884 = vmatpush.msra.mxu0 %v2794
        %2885 = vmatpush.msra.mxu0 %v2793
        %2886 = vmatpush.msra.mxu0 %v2792
        %2887 = vmatpush.msra.mxu0 %v2791
        %2888 = vmatmul.f32.gmra.mxu0 %v2744
        %v2889 = vpop.f32.mrf.mxu0
        %v2890 = vadd.f32 %v2825, %v2889
        %2891 = vmatmul.f32.gmra.mxu0 %v2746
        %v2892 = vpop.f32.mrf.mxu0
        %v2893 = vadd.f32 %v2828, %v2892
        %2894 = vmatmul.f32.gmra.mxu0 %v2748
        %v2895 = vpop.f32.mrf.mxu0
        %v2896 = vadd.f32 %v2831, %v2895
        %2897 = vmatmul.f32.gmra.mxu0 %v2750
        %v2898 = vpop.f32.mrf.mxu0
        %v2899 = vadd.f32 %v2834, %v2898
        %2900 = vmatmul.f32.gmra.mxu0 %v2752
        %v2901 = vpop.f32.mrf.mxu0
        %v2902 = vadd.f32 %v2837, %v2901
        %2903 = vmatmul.f32.gmra.mxu0 %v2754
        %v2904 = vpop.f32.mrf.mxu0
        %v2905 = vadd.f32 %v2840, %v2904
        %2906 = vmatmul.f32.gmra.mxu0 %v2756
        %v2907 = vpop.f32.mrf.mxu0
        %v2908 = vadd.f32 %v2843, %v2907
        %2909 = vmatmul.f32.gmra.mxu0 %v2758
        %v2910 = vpop.f32.mrf.mxu0
        %v2911 = vadd.f32 %v2846, %v2910
        %2912 = vmatmul.f32.gmra.mxu0 %v2760
        %v2913 = vpop.f32.mrf.mxu0
        %v2914 = vadd.f32 %v2849, %v2913
        %2915 = vmatmul.f32.gmra.mxu0 %v2762
        %v2916 = vpop.f32.mrf.mxu0
        %v2917 = vadd.f32 %v2852, %v2916
        %2918 = vmatmul.f32.gmra.mxu0 %v2764
        %v2919 = vpop.f32.mrf.mxu0
        %v2920 = vadd.f32 %v2855, %v2919
        %2921 = vmatmul.f32.gmra.mxu0 %v2766
        %v2922 = vpop.f32.mrf.mxu0
        %v2923 = vadd.f32 %v2858, %v2922
        %2924 = vmatmul.f32.gmra.mxu0 %v2768
        %v2925 = vpop.f32.mrf.mxu0
        %v2926 = vadd.f32 %v2861, %v2925
        %2927 = vmatmul.f32.gmra.mxu0 %v2770
        %v2928 = vpop.f32.mrf.mxu0
        %v2929 = vadd.f32 %v2864, %v2928
        %2930 = vmatmul.f32.gmra.mxu0 %v2772
        %v2931 = vpop.f32.mrf.mxu0
        %v2932 = vadd.f32 %v2867, %v2931
        %2933 = vmatmul.f32.gmra.mxu0 %v2774
        %v2934 = vpop.f32.mrf.mxu0
        %v2935 = vadd.f32 %v2870, %v2934
        %2936 = vdwg.mxu0
        %s2937 = scalar_lea.vmem [#allocation4], %s173
        %v2938 = vld [vmem:[%s2937] sm:$0xff]
        %v2939 = vld [vmem:[%s2937 + $0x8] sm:$0xff]
        %v2940 = vld [vmem:[%s2937 + $0x10] sm:$0xff]
        %v2941 = vld [vmem:[%s2937 + $0x18] sm:$0xff]
        %v2942 = vld [vmem:[%s2937 + $0x20] sm:$0xff]
        %v2943 = vld [vmem:[%s2937 + $0x28] sm:$0xff]
        %v2944 = vld [vmem:[%s2937 + $0x30] sm:$0xff]
        %v2945 = vld [vmem:[%s2937 + $0x38] sm:$0xff]
        %v2946 = vld [vmem:[%s2937 + $0x40] sm:$0xff]
        %v2947 = vld [vmem:[%s2937 + $0x48] sm:$0xff]
        %v2948 = vld [vmem:[%s2937 + $0x50] sm:$0xff]
        %v2949 = vld [vmem:[%s2937 + $0x58] sm:$0xff]
        %v2950 = vld [vmem:[%s2937 + $0x60] sm:$0xff]
        %v2951 = vld [vmem:[%s2937 + $0x68] sm:$0xff]
        %v2952 = vld [vmem:[%s2937 + $0x70] sm:$0xff]
        %v2953 = vld [vmem:[%s2937 + $0x78] sm:$0xff]
        %2955 = vset.pattern.permute.xlu0 0
        %2956 = vperm.xlu0 %2955, %v2938
        %v2957 = vpop.permute.xlu0 %2956
        %2960 = vset.pattern.permute.xlu0 0
        %2961 = vperm.xlu0 %2960, %v2939
        %v2962 = vpop.permute.xlu0 %2961
        %2965 = vset.pattern.permute.xlu0 0
        %2966 = vperm.xlu0 %2965, %v2940
        %v2967 = vpop.permute.xlu0 %2966
        %2970 = vset.pattern.permute.xlu0 0
        %2971 = vperm.xlu0 %2970, %v2941
        %v2972 = vpop.permute.xlu0 %2971
        %2975 = vset.pattern.permute.xlu0 0
        %2976 = vperm.xlu0 %2975, %v2942
        %v2977 = vpop.permute.xlu0 %2976
        %2980 = vset.pattern.permute.xlu0 0
        %2981 = vperm.xlu0 %2980, %v2943
        %v2982 = vpop.permute.xlu0 %2981
        %2985 = vset.pattern.permute.xlu0 0
        %2986 = vperm.xlu0 %2985, %v2944
        %v2987 = vpop.permute.xlu0 %2986
        %2990 = vset.pattern.permute.xlu0 0
        %2991 = vperm.xlu0 %2990, %v2945
        %v2992 = vpop.permute.xlu0 %2991
        %2995 = vset.pattern.permute.xlu0 0
        %2996 = vperm.xlu0 %2995, %v2946
        %v2997 = vpop.permute.xlu0 %2996
        %3000 = vset.pattern.permute.xlu0 0
        %3001 = vperm.xlu0 %3000, %v2947
        %v3002 = vpop.permute.xlu0 %3001
        %3005 = vset.pattern.permute.xlu0 0
        %3006 = vperm.xlu0 %3005, %v2948
        %v3007 = vpop.permute.xlu0 %3006
        %3010 = vset.pattern.permute.xlu0 0
        %3011 = vperm.xlu0 %3010, %v2949
        %v3012 = vpop.permute.xlu0 %3011
        %3015 = vset.pattern.permute.xlu0 0
        %3016 = vperm.xlu0 %3015, %v2950
        %v3017 = vpop.permute.xlu0 %3016
        %3020 = vset.pattern.permute.xlu0 0
        %3021 = vperm.xlu0 %3020, %v2951
        %v3022 = vpop.permute.xlu0 %3021
        %3025 = vset.pattern.permute.xlu0 0
        %3026 = vperm.xlu0 %3025, %v2952
        %v3027 = vpop.permute.xlu0 %3026
        %3030 = vset.pattern.permute.xlu0 0
        %3031 = vperm.xlu0 %3030, %v2953
        %v3032 = vpop.permute.xlu0 %3031
        %v3034 = vmul.f32 %v2890, %v2957
        %v3035 = vmul.f32 %v2893, %v2962
        %v3036 = vmul.f32 %v2896, %v2967
        %v3037 = vmul.f32 %v2899, %v2972
        %v3038 = vmul.f32 %v2902, %v2977
        %v3039 = vmul.f32 %v2905, %v2982
        %v3040 = vmul.f32 %v2908, %v2987
        %v3041 = vmul.f32 %v2911, %v2992
        %v3042 = vmul.f32 %v2914, %v2997
        %v3043 = vmul.f32 %v2917, %v3002
        %v3044 = vmul.f32 %v2920, %v3007
        %v3045 = vmul.f32 %v2923, %v3012
        %v3046 = vmul.f32 %v2926, %v3017
        %v3047 = vmul.f32 %v2929, %v3022
        %v3048 = vmul.f32 %v2932, %v3027
        %v3049 = vmul.f32 %v2935, %v3032
        %s3050 = scalar_lea.vmem [#allocation2], %s173
        %vm3051 = vcmask 64512
        %3052 = vst.msk [vmem:[%s3050] sm:$0xff] %vm3051, %v3034
        %3053 = vst.msk [vmem:[%s3050 + $0x8] sm:$0xff] %vm3051, %v3035
        %3054 = vst.msk [vmem:[%s3050 + $0x10] sm:$0xff] %vm3051, %v3036
        %3055 = vst.msk [vmem:[%s3050 + $0x18] sm:$0xff] %vm3051, %v3037
        %3056 = vst.msk [vmem:[%s3050 + $0x20] sm:$0xff] %vm3051, %v3038
        %3057 = vst.msk [vmem:[%s3050 + $0x28] sm:$0xff] %vm3051, %v3039
        %3058 = vst.msk [vmem:[%s3050 + $0x30] sm:$0xff] %vm3051, %v3040
        %3059 = vst.msk [vmem:[%s3050 + $0x38] sm:$0xff] %vm3051, %v3041
        %3060 = vst.msk [vmem:[%s3050 + $0x40] sm:$0xff] %vm3051, %v3042
        %3061 = vst.msk [vmem:[%s3050 + $0x48] sm:$0xff] %vm3051, %v3043
        %3062 = vst.msk [vmem:[%s3050 + $0x50] sm:$0xff] %vm3051, %v3044
        %3063 = vst.msk [vmem:[%s3050 + $0x58] sm:$0xff] %vm3051, %v3045
        %3064 = vst.msk [vmem:[%s3050 + $0x60] sm:$0xff] %vm3051, %v3046
        %3065 = vst.msk [vmem:[%s3050 + $0x68] sm:$0xff] %vm3051, %v3047
        %3066 = vst.msk [vmem:[%s3050 + $0x70] sm:$0xff] %vm3051, %v3048
        %3067 = vst.msk [vmem:[%s3050 + $0x78] sm:$0xff] %vm3051, %v3049
        %s3068 = scalar_lea.vmem %s3, %s173
        %v3069 = vld [vmem:[%s3068] sm:$0xff]
        %v3070 = vld [vmem:[%s3068 + $0x8] sm:$0xff]
        %v3071 = vld [vmem:[%s3068 + $0x10] sm:$0xff]
        %v3072 = vld [vmem:[%s3068 + $0x18] sm:$0xff]
        %v3073 = vld [vmem:[%s3068 + $0x20] sm:$0xff]
        %v3074 = vld [vmem:[%s3068 + $0x28] sm:$0xff]
        %v3075 = vld [vmem:[%s3068 + $0x30] sm:$0xff]
        %v3076 = vld [vmem:[%s3068 + $0x38] sm:$0xff]
        %v3077 = vld [vmem:[%s3068 + $0x40] sm:$0xff]
        %v3078 = vld [vmem:[%s3068 + $0x48] sm:$0xff]
        %v3079 = vld [vmem:[%s3068 + $0x50] sm:$0xff]
        %v3080 = vld [vmem:[%s3068 + $0x58] sm:$0xff]
        %v3081 = vld [vmem:[%s3068 + $0x60] sm:$0xff]
        %v3082 = vld [vmem:[%s3068 + $0x68] sm:$0xff]
        %v3083 = vld [vmem:[%s3068 + $0x70] sm:$0xff]
        %v3084 = vld [vmem:[%s3068 + $0x78] sm:$0xff]
        %v3086 = vperm.slane %v174, 0
        %v3088 = vmul.f32 %v3034, %v3086
        %v3089 = vmul.f32 %v3035, %v3086
        %v3090 = vmul.f32 %v3036, %v3086
        %v3091 = vmul.f32 %v3037, %v3086
        %v3092 = vmul.f32 %v3038, %v3086
        %v3093 = vmul.f32 %v3039, %v3086
        %v3094 = vmul.f32 %v3040, %v3086
        %v3095 = vmul.f32 %v3041, %v3086
        %v3096 = vmul.f32 %v3042, %v3086
        %v3097 = vmul.f32 %v3043, %v3086
        %v3098 = vmul.f32 %v3044, %v3086
        %v3099 = vmul.f32 %v3045, %v3086
        %v3100 = vmul.f32 %v3046, %v3086
        %v3101 = vmul.f32 %v3047, %v3086
        %v3102 = vmul.f32 %v3048, %v3086
        %v3103 = vmul.f32 %v3049, %v3086
        %v3104 = vsel %vm3051, %v3088, 0.0
        %3105 = vadd.xlane.f32.xlu0 %v3104
        %v3106 = vpop.xlane.xlu0 %3105
        %v3107 = vsel %vm3051, %v3089, 0.0
        %3108 = vadd.xlane.f32.xlu0 %v3107
        %v3109 = vpop.xlane.xlu0 %3108
        %v3110 = vsel %vm3051, %v3090, 0.0
        %3111 = vadd.xlane.f32.xlu0 %v3110
        %v3112 = vpop.xlane.xlu0 %3111
        %v3113 = vsel %vm3051, %v3091, 0.0
        %3114 = vadd.xlane.f32.xlu0 %v3113
        %v3115 = vpop.xlane.xlu0 %3114
        %v3116 = vsel %vm3051, %v3092, 0.0
        %3117 = vadd.xlane.f32.xlu0 %v3116
        %v3118 = vpop.xlane.xlu0 %3117
        %v3119 = vsel %vm3051, %v3093, 0.0
        %3120 = vadd.xlane.f32.xlu0 %v3119
        %v3121 = vpop.xlane.xlu0 %3120
        %v3122 = vsel %vm3051, %v3094, 0.0
        %3123 = vadd.xlane.f32.xlu0 %v3122
        %v3124 = vpop.xlane.xlu0 %3123
        %v3125 = vsel %vm3051, %v3095, 0.0
        %3126 = vadd.xlane.f32.xlu0 %v3125
        %v3127 = vpop.xlane.xlu0 %3126
        %v3128 = vsel %vm3051, %v3096, 0.0
        %3129 = vadd.xlane.f32.xlu0 %v3128
        %v3130 = vpop.xlane.xlu0 %3129
        %v3131 = vsel %vm3051, %v3097, 0.0
        %3132 = vadd.xlane.f32.xlu0 %v3131
        %v3133 = vpop.xlane.xlu0 %3132
        %v3134 = vsel %vm3051, %v3098, 0.0
        %3135 = vadd.xlane.f32.xlu0 %v3134
        %v3136 = vpop.xlane.xlu0 %3135
        %v3137 = vsel %vm3051, %v3099, 0.0
        %3138 = vadd.xlane.f32.xlu0 %v3137
        %v3139 = vpop.xlane.xlu0 %3138
        %v3140 = vsel %vm3051, %v3100, 0.0
        %3141 = vadd.xlane.f32.xlu0 %v3140
        %v3142 = vpop.xlane.xlu0 %3141
        %v3143 = vsel %vm3051, %v3101, 0.0
        %3144 = vadd.xlane.f32.xlu0 %v3143
        %v3145 = vpop.xlane.xlu0 %3144
        %v3146 = vsel %vm3051, %v3102, 0.0
        %3147 = vadd.xlane.f32.xlu0 %v3146
        %v3148 = vpop.xlane.xlu0 %3147
        %v3149 = vsel %vm3051, %v3103, 0.0
        %3150 = vadd.xlane.f32.xlu0 %v3149
        %v3151 = vpop.xlane.xlu0 %3150
        %v3152 = vsub.f32 0.0, %v3106
        %v3153 = vsub.f32 0.0, %v3109
        %v3154 = vsub.f32 0.0, %v3112
        %v3155 = vsub.f32 0.0, %v3115
        %v3156 = vsub.f32 0.0, %v3118
        %v3157 = vsub.f32 0.0, %v3121
        %v3158 = vsub.f32 0.0, %v3124
        %v3159 = vsub.f32 0.0, %v3127
        %v3160 = vsub.f32 0.0, %v3130
        %v3161 = vsub.f32 0.0, %v3133
        %v3162 = vsub.f32 0.0, %v3136
        %v3163 = vsub.f32 0.0, %v3139
        %v3164 = vsub.f32 0.0, %v3142
        %v3165 = vsub.f32 0.0, %v3145
        %v3166 = vsub.f32 0.0, %v3148
        %v3167 = vsub.f32 0.0, %v3151
        %v3168 = vmul.f32 %v3152, 1.442695
        %v3169 = vpow.pop %v3168
        %v3170 = vmul.f32 %v3153, 1.442695
        %v3171 = vpow.pop %v3170
        %v3172 = vmul.f32 %v3154, 1.442695
        %v3173 = vpow.pop %v3172
        %v3174 = vmul.f32 %v3155, 1.442695
        %v3175 = vpow.pop %v3174
        %v3176 = vmul.f32 %v3156, 1.442695
        %v3177 = vpow.pop %v3176
        %v3178 = vmul.f32 %v3157, 1.442695
        %v3179 = vpow.pop %v3178
        %v3180 = vmul.f32 %v3158, 1.442695
        %v3181 = vpow.pop %v3180
        %v3182 = vmul.f32 %v3159, 1.442695
        %v3183 = vpow.pop %v3182
        %v3184 = vmul.f32 %v3160, 1.442695
        %v3185 = vpow.pop %v3184
        %v3186 = vmul.f32 %v3161, 1.442695
        %v3187 = vpow.pop %v3186
        %v3188 = vmul.f32 %v3162, 1.442695
        %v3189 = vpow.pop %v3188
        %v3190 = vmul.f32 %v3163, 1.442695
        %v3191 = vpow.pop %v3190
        %v3192 = vmul.f32 %v3164, 1.442695
        %v3193 = vpow.pop %v3192
        %v3194 = vmul.f32 %v3165, 1.442695
        %v3195 = vpow.pop %v3194
        %v3196 = vmul.f32 %v3166, 1.442695
        %v3197 = vpow.pop %v3196
        %v3198 = vmul.f32 %v3167, 1.442695
        %v3199 = vpow.pop %v3198
        %v3200 = vadd.f32 %v3169, 1.0
        %v3201 = vadd.f32 %v3171, 1.0
        %v3202 = vadd.f32 %v3173, 1.0
        %v3203 = vadd.f32 %v3175, 1.0
        %v3204 = vadd.f32 %v3177, 1.0
        %v3205 = vadd.f32 %v3179, 1.0
        %v3206 = vadd.f32 %v3181, 1.0
        %v3207 = vadd.f32 %v3183, 1.0
        %v3208 = vadd.f32 %v3185, 1.0
        %v3209 = vadd.f32 %v3187, 1.0
        %v3210 = vadd.f32 %v3189, 1.0
        %v3211 = vadd.f32 %v3191, 1.0
        %v3212 = vadd.f32 %v3193, 1.0
        %v3213 = vadd.f32 %v3195, 1.0
        %v3214 = vadd.f32 %v3197, 1.0
        %v3215 = vadd.f32 %v3199, 1.0
        %v3216 = vrcp.pop %v3200
        %v3217 = vmul.f32 %v3200, %v3216
        %v3218 = vsub.f32 1.0, %v3217
        %v3219 = vmul.f32 %v3216, %v3218
        %v3220 = vadd.f32 %v3216, %v3219
        %vm3221 = vweird.f32 %v3200
        %vm3222 = vweird.f32 %v3216
        %vm3223 = vmor %vm3221, %vm3222
        %v3224 = vsel %vm3223, %v3216, %v3220
        %v3225 = vand.u32 2147483647, %v3200
        %vm3226 = vcmp.eq.f32.partialorder %v3225, 8.507059e+37
        %v3227 = vand.u32 %v3200, 2147483648
        %v3228 = vor.u32 1.1754944e-38, %v3227
        %v3229 = vsel %vm3226, %v3228, %v3224
        %v3230 = vmul.f32 1.0, %v3229
        %v3231 = vrcp.pop %v3201
        %v3232 = vmul.f32 %v3201, %v3231
        %v3233 = vsub.f32 1.0, %v3232
        %v3234 = vmul.f32 %v3231, %v3233
        %v3235 = vadd.f32 %v3231, %v3234
        %vm3236 = vweird.f32 %v3201
        %vm3237 = vweird.f32 %v3231
        %vm3238 = vmor %vm3236, %vm3237
        %v3239 = vsel %vm3238, %v3231, %v3235
        %v3240 = vand.u32 2147483647, %v3201
        %vm3241 = vcmp.eq.f32.partialorder %v3240, 8.507059e+37
        %v3242 = vand.u32 %v3201, 2147483648
        %v3243 = vor.u32 1.1754944e-38, %v3242
        %v3244 = vsel %vm3241, %v3243, %v3239
        %v3245 = vmul.f32 1.0, %v3244
        %v3246 = vrcp.pop %v3202
        %v3247 = vmul.f32 %v3202, %v3246
        %v3248 = vsub.f32 1.0, %v3247
        %v3249 = vmul.f32 %v3246, %v3248
        %v3250 = vadd.f32 %v3246, %v3249
        %vm3251 = vweird.f32 %v3202
        %vm3252 = vweird.f32 %v3246
        %vm3253 = vmor %vm3251, %vm3252
        %v3254 = vsel %vm3253, %v3246, %v3250
        %v3255 = vand.u32 2147483647, %v3202
        %vm3256 = vcmp.eq.f32.partialorder %v3255, 8.507059e+37
        %v3257 = vand.u32 %v3202, 2147483648
        %v3258 = vor.u32 1.1754944e-38, %v3257
        %v3259 = vsel %vm3256, %v3258, %v3254
        %v3260 = vmul.f32 1.0, %v3259
        %v3261 = vrcp.pop %v3203
        %v3262 = vmul.f32 %v3203, %v3261
        %v3263 = vsub.f32 1.0, %v3262
        %v3264 = vmul.f32 %v3261, %v3263
        %v3265 = vadd.f32 %v3261, %v3264
        %vm3266 = vweird.f32 %v3203
        %vm3267 = vweird.f32 %v3261
        %vm3268 = vmor %vm3266, %vm3267
        %v3269 = vsel %vm3268, %v3261, %v3265
        %v3270 = vand.u32 2147483647, %v3203
        %vm3271 = vcmp.eq.f32.partialorder %v3270, 8.507059e+37
        %v3272 = vand.u32 %v3203, 2147483648
        %v3273 = vor.u32 1.1754944e-38, %v3272
        %v3274 = vsel %vm3271, %v3273, %v3269
        %v3275 = vmul.f32 1.0, %v3274
        %v3276 = vrcp.pop %v3204
        %v3277 = vmul.f32 %v3204, %v3276
        %v3278 = vsub.f32 1.0, %v3277
        %v3279 = vmul.f32 %v3276, %v3278
        %v3280 = vadd.f32 %v3276, %v3279
        %vm3281 = vweird.f32 %v3204
        %vm3282 = vweird.f32 %v3276
        %vm3283 = vmor %vm3281, %vm3282
        %v3284 = vsel %vm3283, %v3276, %v3280
        %v3285 = vand.u32 2147483647, %v3204
        %vm3286 = vcmp.eq.f32.partialorder %v3285, 8.507059e+37
        %v3287 = vand.u32 %v3204, 2147483648
        %v3288 = vor.u32 1.1754944e-38, %v3287
        %v3289 = vsel %vm3286, %v3288, %v3284
        %v3290 = vmul.f32 1.0, %v3289
        %v3291 = vrcp.pop %v3205
        %v3292 = vmul.f32 %v3205, %v3291
        %v3293 = vsub.f32 1.0, %v3292
        %v3294 = vmul.f32 %v3291, %v3293
        %v3295 = vadd.f32 %v3291, %v3294
        %vm3296 = vweird.f32 %v3205
        %vm3297 = vweird.f32 %v3291
        %vm3298 = vmor %vm3296, %vm3297
        %v3299 = vsel %vm3298, %v3291, %v3295
        %v3300 = vand.u32 2147483647, %v3205
        %vm3301 = vcmp.eq.f32.partialorder %v3300, 8.507059e+37
        %v3302 = vand.u32 %v3205, 2147483648
        %v3303 = vor.u32 1.1754944e-38, %v3302
        %v3304 = vsel %vm3301, %v3303, %v3299
        %v3305 = vmul.f32 1.0, %v3304
        %v3306 = vrcp.pop %v3206
        %v3307 = vmul.f32 %v3206, %v3306
        %v3308 = vsub.f32 1.0, %v3307
        %v3309 = vmul.f32 %v3306, %v3308
        %v3310 = vadd.f32 %v3306, %v3309
        %vm3311 = vweird.f32 %v3206
        %vm3312 = vweird.f32 %v3306
        %vm3313 = vmor %vm3311, %vm3312
        %v3314 = vsel %vm3313, %v3306, %v3310
        %v3315 = vand.u32 2147483647, %v3206
        %vm3316 = vcmp.eq.f32.partialorder %v3315, 8.507059e+37
        %v3317 = vand.u32 %v3206, 2147483648
        %v3318 = vor.u32 1.1754944e-38, %v3317
        %v3319 = vsel %vm3316, %v3318, %v3314
        %v3320 = vmul.f32 1.0, %v3319
        %v3321 = vrcp.pop %v3207
        %v3322 = vmul.f32 %v3207, %v3321
        %v3323 = vsub.f32 1.0, %v3322
        %v3324 = vmul.f32 %v3321, %v3323
        %v3325 = vadd.f32 %v3321, %v3324
        %vm3326 = vweird.f32 %v3207
        %vm3327 = vweird.f32 %v3321
        %vm3328 = vmor %vm3326, %vm3327
        %v3329 = vsel %vm3328, %v3321, %v3325
        %v3330 = vand.u32 2147483647, %v3207
        %vm3331 = vcmp.eq.f32.partialorder %v3330, 8.507059e+37
        %v3332 = vand.u32 %v3207, 2147483648
        %v3333 = vor.u32 1.1754944e-38, %v3332
        %v3334 = vsel %vm3331, %v3333, %v3329
        %v3335 = vmul.f32 1.0, %v3334
        %v3336 = vrcp.pop %v3208
        %v3337 = vmul.f32 %v3208, %v3336
        %v3338 = vsub.f32 1.0, %v3337
        %v3339 = vmul.f32 %v3336, %v3338
        %v3340 = vadd.f32 %v3336, %v3339
        %vm3341 = vweird.f32 %v3208
        %vm3342 = vweird.f32 %v3336
        %vm3343 = vmor %vm3341, %vm3342
        %v3344 = vsel %vm3343, %v3336, %v3340
        %v3345 = vand.u32 2147483647, %v3208
        %vm3346 = vcmp.eq.f32.partialorder %v3345, 8.507059e+37
        %v3347 = vand.u32 %v3208, 2147483648
        %v3348 = vor.u32 1.1754944e-38, %v3347
        %v3349 = vsel %vm3346, %v3348, %v3344
        %v3350 = vmul.f32 1.0, %v3349
        %v3351 = vrcp.pop %v3209
        %v3352 = vmul.f32 %v3209, %v3351
        %v3353 = vsub.f32 1.0, %v3352
        %v3354 = vmul.f32 %v3351, %v3353
        %v3355 = vadd.f32 %v3351, %v3354
        %vm3356 = vweird.f32 %v3209
        %vm3357 = vweird.f32 %v3351
        %vm3358 = vmor %vm3356, %vm3357
        %v3359 = vsel %vm3358, %v3351, %v3355
        %v3360 = vand.u32 2147483647, %v3209
        %vm3361 = vcmp.eq.f32.partialorder %v3360, 8.507059e+37
        %v3362 = vand.u32 %v3209, 2147483648
        %v3363 = vor.u32 1.1754944e-38, %v3362
        %v3364 = vsel %vm3361, %v3363, %v3359
        %v3365 = vmul.f32 1.0, %v3364
        %v3366 = vrcp.pop %v3210
        %v3367 = vmul.f32 %v3210, %v3366
        %v3368 = vsub.f32 1.0, %v3367
        %v3369 = vmul.f32 %v3366, %v3368
        %v3370 = vadd.f32 %v3366, %v3369
        %vm3371 = vweird.f32 %v3210
        %vm3372 = vweird.f32 %v3366
        %vm3373 = vmor %vm3371, %vm3372
        %v3374 = vsel %vm3373, %v3366, %v3370
        %v3375 = vand.u32 2147483647, %v3210
        %vm3376 = vcmp.eq.f32.partialorder %v3375, 8.507059e+37
        %v3377 = vand.u32 %v3210, 2147483648
        %v3378 = vor.u32 1.1754944e-38, %v3377
        %v3379 = vsel %vm3376, %v3378, %v3374
        %v3380 = vmul.f32 1.0, %v3379
        %v3381 = vrcp.pop %v3211
        %v3382 = vmul.f32 %v3211, %v3381
        %v3383 = vsub.f32 1.0, %v3382
        %v3384 = vmul.f32 %v3381, %v3383
        %v3385 = vadd.f32 %v3381, %v3384
        %vm3386 = vweird.f32 %v3211
        %vm3387 = vweird.f32 %v3381
        %vm3388 = vmor %vm3386, %vm3387
        %v3389 = vsel %vm3388, %v3381, %v3385
        %v3390 = vand.u32 2147483647, %v3211
        %vm3391 = vcmp.eq.f32.partialorder %v3390, 8.507059e+37
        %v3392 = vand.u32 %v3211, 2147483648
        %v3393 = vor.u32 1.1754944e-38, %v3392
        %v3394 = vsel %vm3391, %v3393, %v3389
        %v3395 = vmul.f32 1.0, %v3394
        %v3396 = vrcp.pop %v3212
        %v3397 = vmul.f32 %v3212, %v3396
        %v3398 = vsub.f32 1.0, %v3397
        %v3399 = vmul.f32 %v3396, %v3398
        %v3400 = vadd.f32 %v3396, %v3399
        %vm3401 = vweird.f32 %v3212
        %vm3402 = vweird.f32 %v3396
        %vm3403 = vmor %vm3401, %vm3402
        %v3404 = vsel %vm3403, %v3396, %v3400
        %v3405 = vand.u32 2147483647, %v3212
        %vm3406 = vcmp.eq.f32.partialorder %v3405, 8.507059e+37
        %v3407 = vand.u32 %v3212, 2147483648
        %v3408 = vor.u32 1.1754944e-38, %v3407
        %v3409 = vsel %vm3406, %v3408, %v3404
        %v3410 = vmul.f32 1.0, %v3409
        %v3411 = vrcp.pop %v3213
        %v3412 = vmul.f32 %v3213, %v3411
        %v3413 = vsub.f32 1.0, %v3412
        %v3414 = vmul.f32 %v3411, %v3413
        %v3415 = vadd.f32 %v3411, %v3414
        %vm3416 = vweird.f32 %v3213
        %vm3417 = vweird.f32 %v3411
        %vm3418 = vmor %vm3416, %vm3417
        %v3419 = vsel %vm3418, %v3411, %v3415
        %v3420 = vand.u32 2147483647, %v3213
        %vm3421 = vcmp.eq.f32.partialorder %v3420, 8.507059e+37
        %v3422 = vand.u32 %v3213, 2147483648
        %v3423 = vor.u32 1.1754944e-38, %v3422
        %v3424 = vsel %vm3421, %v3423, %v3419
        %v3425 = vmul.f32 1.0, %v3424
        %v3426 = vrcp.pop %v3214
        %v3427 = vmul.f32 %v3214, %v3426
        %v3428 = vsub.f32 1.0, %v3427
        %v3429 = vmul.f32 %v3426, %v3428
        %v3430 = vadd.f32 %v3426, %v3429
        %vm3431 = vweird.f32 %v3214
        %vm3432 = vweird.f32 %v3426
        %vm3433 = vmor %vm3431, %vm3432
        %v3434 = vsel %vm3433, %v3426, %v3430
        %v3435 = vand.u32 2147483647, %v3214
        %vm3436 = vcmp.eq.f32.partialorder %v3435, 8.507059e+37
        %v3437 = vand.u32 %v3214, 2147483648
        %v3438 = vor.u32 1.1754944e-38, %v3437
        %v3439 = vsel %vm3436, %v3438, %v3434
        %v3440 = vmul.f32 1.0, %v3439
        %v3441 = vrcp.pop %v3215
        %v3442 = vmul.f32 %v3215, %v3441
        %v3443 = vsub.f32 1.0, %v3442
        %v3444 = vmul.f32 %v3441, %v3443
        %v3445 = vadd.f32 %v3441, %v3444
        %vm3446 = vweird.f32 %v3215
        %vm3447 = vweird.f32 %v3441
        %vm3448 = vmor %vm3446, %vm3447
        %v3449 = vsel %vm3448, %v3441, %v3445
        %v3450 = vand.u32 2147483647, %v3215
        %vm3451 = vcmp.eq.f32.partialorder %v3450, 8.507059e+37
        %v3452 = vand.u32 %v3215, 2147483648
        %v3453 = vor.u32 1.1754944e-38, %v3452
        %v3454 = vsel %vm3451, %v3453, %v3449
        %v3455 = vmul.f32 1.0, %v3454
        %v3456 = vmul.f32 %v3230, %v3034
        %v3457 = vmul.f32 %v3245, %v3035
        %v3458 = vmul.f32 %v3260, %v3036
        %v3459 = vmul.f32 %v3275, %v3037
        %v3460 = vmul.f32 %v3290, %v3038
        %v3461 = vmul.f32 %v3305, %v3039
        %v3462 = vmul.f32 %v3320, %v3040
        %v3463 = vmul.f32 %v3335, %v3041
        %v3464 = vmul.f32 %v3350, %v3042
        %v3465 = vmul.f32 %v3365, %v3043
        %v3466 = vmul.f32 %v3380, %v3044
        %v3467 = vmul.f32 %v3395, %v3045
        %v3468 = vmul.f32 %v3410, %v3046
        %v3469 = vmul.f32 %v3425, %v3047
        %v3470 = vmul.f32 %v3440, %v3048
        %v3471 = vmul.f32 %v3455, %v3049
        %v3472 = vadd.f32 %v3069, %v3456
        %v3473 = vadd.f32 %v3070, %v3457
        %v3474 = vadd.f32 %v3071, %v3458
        %v3475 = vadd.f32 %v3072, %v3459
        %v3476 = vadd.f32 %v3073, %v3460
        %v3477 = vadd.f32 %v3074, %v3461
        %v3478 = vadd.f32 %v3075, %v3462
        %v3479 = vadd.f32 %v3076, %v3463
        %v3480 = vadd.f32 %v3077, %v3464
        %v3481 = vadd.f32 %v3078, %v3465
        %v3482 = vadd.f32 %v3079, %v3466
        %v3483 = vadd.f32 %v3080, %v3467
        %v3484 = vadd.f32 %v3081, %v3468
        %v3485 = vadd.f32 %v3082, %v3469
        %v3486 = vadd.f32 %v3083, %v3470
        %v3487 = vadd.f32 %v3084, %v3471
        %3488 = vst.msk [vmem:[%s3068] sm:$0xff] %vm3051, %v3472
        %3489 = vst.msk [vmem:[%s3068 + $0x8] sm:$0xff] %vm3051, %v3473
        %3490 = vst.msk [vmem:[%s3068 + $0x10] sm:$0xff] %vm3051, %v3474
        %3491 = vst.msk [vmem:[%s3068 + $0x18] sm:$0xff] %vm3051, %v3475
        %3492 = vst.msk [vmem:[%s3068 + $0x20] sm:$0xff] %vm3051, %v3476
        %3493 = vst.msk [vmem:[%s3068 + $0x28] sm:$0xff] %vm3051, %v3477
        %3494 = vst.msk [vmem:[%s3068 + $0x30] sm:$0xff] %vm3051, %v3478
        %3495 = vst.msk [vmem:[%s3068 + $0x38] sm:$0xff] %vm3051, %v3479
        %3496 = vst.msk [vmem:[%s3068 + $0x40] sm:$0xff] %vm3051, %v3480
        %3497 = vst.msk [vmem:[%s3068 + $0x48] sm:$0xff] %vm3051, %v3481
        %3498 = vst.msk [vmem:[%s3068 + $0x50] sm:$0xff] %vm3051, %v3482
        %3499 = vst.msk [vmem:[%s3068 + $0x58] sm:$0xff] %vm3051, %v3483
        %3500 = vst.msk [vmem:[%s3068 + $0x60] sm:$0xff] %vm3051, %v3484
        %3501 = vst.msk [vmem:[%s3068 + $0x68] sm:$0xff] %vm3051, %v3485
        %3502 = vst.msk [vmem:[%s3068 + $0x70] sm:$0xff] %vm3051, %v3486
        %3503 = vst.msk [vmem:[%s3068 + $0x78] sm:$0xff] %vm3051, %v3487
      $region52: #{tpu_custom_call.1} parent=31 // pred_fallthru
        _
      // Predicated region
      $region57: #{tpu_custom_call.1} parent=31 // pred_check
        %p3504 = pneg %p107
      $region58: #{tpu_custom_call.1} parent=31 // pred_check_branch
        %3506 = sbr.rel (%p3504) target = $region60
      $region59: #{tpu_custom_call.1} parent=31 // pred_region
        _
      $region60: #{tpu_custom_call.1} parent=31 // pred_fallthru
        _
      // Predicated region
      $region61: #{tpu_custom_call.1} parent=31 // pred_check
        %p3507 = pneg %p107
      $region62: #{tpu_custom_call.1} parent=31 // pred_check_branch
        %3509 = sbr.rel (%p3507) target = $region64
      $region63: #{tpu_custom_call.1} parent=31 // pred_region
        _
      $region64: #{tpu_custom_call.1} parent=31 // pred_fallthru
        _
    $region32: #{tpu_custom_call.1} parent=5 // pred_fallthru
      _
    %p3510 = scmp.le.s32.totalorder 2, %s9
    // Predicated region
    $region65: #{tpu_custom_call.1} parent=5 // pred_check
      %p3511 = pneg %p3510
    $region66: #{tpu_custom_call.1} parent=5 // pred_check_branch
      %3513 = sbr.rel (%p3511) target = $region68
    $region67: #{tpu_custom_call.1} parent=5 // pred_region
      %s3514 = ssub.s32 %s9, 2
    $region68: #{tpu_custom_call.1} parent=5 // pred_fallthru
      _
  $region6: #{tpu_custom_call.1} parent=0 // loop_footer
    %s13 = sadd.s32 1, %s9
  $region7: #{tpu_custom_call.1} parent=0 // loop_footer_branch
    %8 = sbr.rel target = $region3
  $region8: #{tpu_custom_call.1} parent=0 // loop_exit
    _

</llo_original>
